<compile_context>
chip_gen: v6e
topology: v6e:2x2x1
jax: 0.10.0
libtpu: 0.0.40
codegen_flags: <defaults>
</compile_context>

<pallas_src>
import jax
import jax.numpy as jnp
from jax import lax
from jax.experimental import pallas as pl
from jax.experimental.pallas import tpu as pltpu


def _recurrent_conv_kernel(xp_ref, hp_ref, c_ref, w1_ref, wg_ref, bg_ref,
                           hid_ref, cell_ref, cat_ref):
    """Fused conv3x3+relu -> gates conv3x3(+bias) -> ConvLSTM update for one (batch, row-tile).

    xp_ref  : (H+4, W+2, Cin)   bf16, x zero-padded by 2 rows / 1 col each side (full image)
    hp_ref  : (H+2, W, Ch)      bf16, h_prev zero-padded by 1 row each side (full image)
    c_ref   : (TH, W, Ch)       f32, previous cell, this row tile
    w1_ref  : (9*Cin, Cout)     bf16, feed-forward conv taps, tap-major / channel-minor
    wg_ref  : (9*(Cout+Ch), 4*Ch) bf16, gates conv taps
    bg_ref  : (1, 4*Ch)         f32, gates bias
    hid_ref, cell_ref : (TH, W, Ch) f32 outputs for this row tile
    cat_ref : (TH+2, W+2, Cout+Ch) bf16 scratch, padded concat([y, h]) with halo rows
    """
    TH, W, Ch = hid_ref.shape
    Cin = xp_ref.shape[2]
    Cout = w1_ref.shape[1]
    C2 = Cout + Ch
    THp2 = TH + 2
    n_row = pl.num_programs(1)

    r = pl.program_id(1)
    row0 = pl.multiple_of(r * TH, TH)

    # ---- feed-forward conv (3x3, pad 1, no bias) + ReLU over TH+2 halo rows, one matmul ----
    xw = xp_ref[pl.ds(row0, TH + 4), :, :]                      # (TH+4, W+2, Cin)
    cols = [xw[dy:dy + THp2, dx:dx + W, :].reshape(THp2 * W, Cin)
            for dy in range(3) for dx in range(3)]
    lhs = jnp.concatenate(cols, axis=-1)                         # (M_ext, 9*Cin)
    y = jnp.dot(lhs, w1_ref[...], preferred_element_type=jnp.float32)
    y = jnp.maximum(y, 0.0).reshape(THp2, W, Cout).astype(cat_ref.dtype)

    # ---- padded concat([y, h_halo]) scratch: one lane-dense interior store ----
    hw = hp_ref[pl.ds(row0, THp2), :, :]                         # (TH+2, W, Ch)
    cat_ref[:, 1:W + 1, :] = jnp.concatenate([y, hw], axis=-1)

    # zero only the 1-col W halo (interior is fully overwritten above)
    zcol = jnp.zeros((THp2, 1, C2), cat_ref.dtype)
    cat_ref[:, 0:1, :] = zcol
    cat_ref[:, W + 1:W + 2, :] = zcol

    # y rows outside the image must be zero (they are the gates-conv zero padding);
    # the h halo rows are already zero from the wrapper pad.
    zrow = jnp.zeros((1, W + 2, C2), cat_ref.dtype)

    @pl.when(r == 0)
    def _():
        cat_ref[0:1, :, :] = zrow

    @pl.when(r == n_row - 1)
    def _():
        cat_ref[THp2 - 1:THp2, :, :] = zrow

    # ---- gates conv (3x3, pad 1): single K = 9*(Cout+Ch) im2col matmul, bias added once ----
    gcols = [cat_ref[dy:dy + TH, dx:dx + W, :].reshape(TH * W, C2)
             for dy in range(3) for dx in range(3)]
    glhs = jnp.concatenate(gcols, axis=-1)                       # (M, 9*C2)
    g = jnp.dot(glhs, wg_ref[...], preferred_element_type=jnp.float32) + bg_ref[...]

    # ---- ConvLSTM cell update (PyTorch chunk order: in, remember, out, cell) ----
    sg = jax.nn.sigmoid(g)                    # one full-width (4*Ch lanes) EUP pass
    in_g, rem_g, out_g = sg[:, 0:Ch], sg[:, Ch:2 * Ch], sg[:, 2 * Ch:3 * Ch]
    c_til = jnp.tanh(g[:, 3 * Ch:4 * Ch])

    c_prev = c_ref[...].reshape(TH * W, Ch)
    cell = rem_g * c_prev + in_g * c_til
    hid = out_g * jnp.tanh(cell)

    hid_ref[...] = hid.reshape(TH, W, Ch).astype(hid_ref.dtype)
    cell_ref[...] = cell.reshape(TH, W, Ch).astype(cell_ref.dtype)


def _pick_row_tile(h):
    for t in (32, 16, 8):
        if h % t == 0 and t < h:
            return t
    return h


def recurrent_conv_step_nhwc(x, h_prev, c_prev, w_ff, w_gates, b_gates, *, row_tile=None):
    """One RecurrentConvLayer step, NHWC in / NHWC out. For sequences, keep h/c in NHWC and
    call this directly so layout transposes only happen at sequence boundaries."""
    N, H, W, Cin = x.shape
    Cout = w_ff.shape[0]
    Ch = Cout
    C2 = Cout + Ch
    TH = _pick_row_tile(H) if row_tile is None else row_tile
    assert H % TH == 0, "row tile must divide H"
    n_row = H // TH

    # TODO(synk): fold these zero-pads into the kernel via manual DMA and alias h/c with the
    # outputs (input_output_aliases) to avoid the per-timestep state round trip in long loops.
    x_pad = jnp.pad(x.astype(jnp.bfloat16), ((0, 0), (2, 2), (1, 1), (0, 0)))
    h_pad = jnp.pad(h_prev.astype(jnp.bfloat16), ((0, 0), (1, 1), (0, 0), (0, 0)))
    c32 = c_prev.astype(jnp.float32)

    # (O, I, kh, kw) -> (9*I, O) packed im2col weights (tap-major, input-channel-minor).
    w1 = jnp.transpose(w_ff, (2, 3, 1, 0)).reshape(9 * Cin, Cout).astype(jnp.bfloat16)
    wg = jnp.transpose(w_gates, (2, 3, 1, 0)).reshape(9 * C2, 4 * Ch).astype(jnp.bfloat16)
    bg = b_gates.reshape(1, 4 * Ch).astype(jnp.float32)

    hid, cell = pl.pallas_call(
        _recurrent_conv_kernel,
        out_shape=(jax.ShapeDtypeStruct((N, H, W, Ch), jnp.float32),
                   jax.ShapeDtypeStruct((N, H, W, Ch), jnp.float32)),
        grid_spec=pltpu.PrefetchScalarGridSpec(
            num_scalar_prefetch=0,
            grid=(N, n_row),
            in_specs=[
                pl.BlockSpec((None, H + 4, W + 2, Cin), lambda b, r: (b, 0, 0, 0)),
                pl.BlockSpec((None, H + 2, W, Ch), lambda b, r: (b, 0, 0, 0)),
                pl.BlockSpec((None, TH, W, Ch), lambda b, r: (b, r, 0, 0)),
                pl.BlockSpec((9 * Cin, Cout), lambda b, r: (0, 0)),
                pl.BlockSpec((9 * C2, 4 * Ch), lambda b, r: (0, 0)),
                pl.BlockSpec((1, 4 * Ch), lambda b, r: (0, 0)),
            ],
            out_specs=(
                pl.BlockSpec((None, TH, W, Ch), lambda b, r: (b, r, 0, 0)),
                pl.BlockSpec((None, TH, W, Ch), lambda b, r: (b, r, 0, 0)),
            ),
            scratch_shapes=[pltpu.VMEM((TH + 2, W + 2, C2), jnp.bfloat16)],
        ),
        compiler_params=pltpu.CompilerParams(
            dimension_semantics=("parallel", "parallel"),
            vmem_limit_bytes=32 * 1024 * 1024,
        ),
    )(x_pad, h_pad, c32, w1, wg, bg)
    return hid, cell


@jax.jit
def recurrent_conv_layer(x_nchw, w_ff, w_gates, b_gates, h_prev_nchw, c_prev_nchw):
    """RecurrentConvLayer.forward(x, prev_state) equivalent (convlstm branch), NCHW interface.

    x_nchw         : (N, Cin, H, W)
    w_ff           : (Cout, Cin, 3, 3)       ConvLayer weight (bias=False)
    w_gates        : (4*Ch, Cout+Ch, 3, 3)   ConvLSTM Gates weight
    b_gates        : (4*Ch,)                 ConvLSTM Gates bias
    h_prev, c_prev : (N, Ch, H, W)           previous state (zeros == prev_state=None)

    Returns (hidden_nchw, (hidden_nchw, cell_nchw)).
    """
    x = jnp.transpose(x_nchw, (0, 2, 3, 1))
    h = jnp.transpose(h_prev_nchw, (0, 2, 3, 1))
    c = jnp.transpose(c_prev_nchw, (0, 2, 3, 1))
    hid, cell = recurrent_conv_step_nhwc(x, h, c, w_ff, w_gates, b_gates)
    hid_nchw = jnp.transpose(hid, (0, 3, 1, 2))
    cell_nchw = jnp.transpose(cell, (0, 3, 1, 2))
    return hid_nchw, (hid_nchw, cell_nchw)


# ---------------------------- pure-JAX reference ----------------------------
def _conv3x3_nhwc(x, w_oihw, bias=None):
    out = lax.conv_general_dilated(
        x, jnp.transpose(w_oihw, (2, 3, 1, 0)), (1, 1), "SAME",
        dimension_numbers=("NHWC", "HWIO", "NHWC"))
    if bias is not None:
        out = out + bias
    return out


def reference(x_nchw, w_ff, w_gates, b_gates, h_prev_nchw, c_prev_nchw):
    x = jnp.transpose(x_nchw, (0, 2, 3, 1))
    h = jnp.transpose(h_prev_nchw, (0, 2, 3, 1))
    c = jnp.transpose(c_prev_nchw, (0, 2, 3, 1))
    y = jnp.maximum(_conv3x3_nhwc(x, w_ff), 0.0)
    g = _conv3x3_nhwc(jnp.concatenate([y, h], axis=-1), w_gates, b_gates)
    Ch = y.shape[-1]
    i, r, o, cg = (g[..., :Ch], g[..., Ch:2 * Ch], g[..., 2 * Ch:3 * Ch], g[..., 3 * Ch:])
    cell = jax.nn.sigmoid(r) * c + jax.nn.sigmoid(i) * jnp.tanh(cg)
    hid = jax.nn.sigmoid(o) * jnp.tanh(cell)
    return jnp.transpose(hid, (0, 3, 1, 2)), jnp.transpose(cell, (0, 3, 1, 2))


if __name__ == "__main__":
    # Small, deterministic setup consistent with the module:
    # in_channels=4, out_channels=hidden=32, kernel_size=3, H=W=16, batch=2.
    N, Cin, H, W = 2, 4, 16, 16
    Cout = Ch = 32

    key = jax.random.PRNGKey(0)
    k_x, k_w1, k_wg, k_bg, k_h, k_c = jax.random.split(key, 6)

    x = jax.random.normal(k_x, (N, Cin, H, W), jnp.float32)

    # Deterministic parameter init (uniform, fan-in scaled; synthetic weights).
    b1 = 1.0 / jnp.sqrt(Cin * 9.0)
    w_ff = jax.random.uniform(k_w1, (Cout, Cin, 3, 3), jnp.float32, -b1, b1)
    b2 = 1.0 / jnp.sqrt((Cout + Ch) * 9.0)
    w_gates = jax.random.uniform(k_wg, (4 * Ch, Cout + Ch, 3, 3), jnp.float32, -b2, b2)
    b_gates = jax.random.uniform(k_bg, (4 * Ch,), jnp.float32, -b2, b2)

    # case 1: prev_state=None in the PyTorch module -> zero hidden / cell state.
    h0 = jnp.zeros((N, Ch, H, W), jnp.float32)
    c0 = jnp.zeros((N, Ch, H, W), jnp.float32)
    # case 2: nonzero previous state (exercises the h-halo rows and the cell-update path).
    h1 = 0.5 * jax.random.normal(k_h, (N, Ch, H, W), jnp.float32)
    c1 = jax.random.normal(k_c, (N, Ch, H, W), jnp.float32)

    for hp, cp in ((h0, c0), (h1, c1)):
        hid, (hid2, cell) = recurrent_conv_layer(x, w_ff, w_gates, b_gates, hp, cp)
        jax.block_until_ready((hid, hid2, cell))

        ref_hid, ref_cell = reference(x, w_ff, w_gates, b_gates, hp, cp)
        # bf16 MXU operands with f32 accumulation -> loosened tolerance vs the f32 reference.
        assert jnp.allclose(hid, ref_hid, rtol=2e-2, atol=2e-2), "hidden mismatch"
        assert jnp.allclose(cell, ref_cell, rtol=2e-2, atol=2e-2), "cell mismatch"
        assert jnp.array_equal(hid, hid2), "state[0] must alias hidden output"

    print("KERNEL_OK")
</pallas_src>

<mosaic_0001>
module attributes {stable_mosaic.version = 11 : i64} {
  func.func @_recurrent_conv_kernel(%arg0: i32, %arg1: i32, %arg2: memref<1x20x18x4xbf16, #tpu.memory_space<vmem>>, %arg3: memref<1x18x16x32xbf16, #tpu.memory_space<vmem>>, %arg4: memref<1x8x16x32xf32, #tpu.memory_space<vmem>>, %arg5: memref<36x32xbf16, #tpu.memory_space<vmem>>, %arg6: memref<576x128xbf16, #tpu.memory_space<vmem>>, %arg7: memref<1x128xf32, #tpu.memory_space<vmem>>, %arg8: memref<1x8x16x32xf32, #tpu.memory_space<vmem>>, %arg9: memref<1x8x16x32xf32, #tpu.memory_space<vmem>>, %arg10: memref<10x18x64xbf16, #tpu.memory_space<vmem>>) attributes {dimension_semantics = [#tpu.dimension_semantics<parallel>, #tpu.dimension_semantics<parallel>], iteration_bounds = array<i64: 2, 2>, scalar_prefetch = 0 : i64, scratch_operands = 1 : i64, tpu.core_type = #tpu.core_type<tc>, window_params = [{transform_indices = @transform_0, window_bounds = array<i64: 1, 20, 18, 4>}, {transform_indices = @transform_1, window_bounds = array<i64: 1, 18, 16, 32>}, {transform_indices = @transform_2, window_bounds = array<i64: 1, 8, 16, 32>}, {pipeline_mode = #tpu.pipeline_mode<synchronous>, transform_indices = @transform_3, window_bounds = array<i64: 36, 32>}, {pipeline_mode = #tpu.pipeline_mode<synchronous>, transform_indices = @transform_4, window_bounds = array<i64: 576, 128>}, {pipeline_mode = #tpu.pipeline_mode<synchronous>, transform_indices = @transform_5, window_bounds = array<i64: 1, 128>}, {transform_indices = @transform_6, window_bounds = array<i64: 1, 8, 16, 32>}, {transform_indices = @transform_7, window_bounds = array<i64: 1, 8, 16, 32>}]} {
    %c8_i32 = arith.constant 8 : i32
    %0 = arith.muli %arg1, %c8_i32 : i32
    %1 = tpu.assume_multiple %0, 8 : i32
    %c0 = arith.constant 0 : index
    %2 = arith.index_cast %1 : i32 to index
    %c0_0 = arith.constant 0 : index
    %c0_1 = arith.constant 0 : index
    %3 = vector.load %arg2[%c0, %2, %c0_0, %c0_1] : memref<1x20x18x4xbf16, #tpu.memory_space<vmem>>, vector<1x12x18x4xbf16>
    %4 = vector.shape_cast %3 : vector<1x12x18x4xbf16> to vector<12x18x4xbf16>
    %5 = vector.extract_strided_slice %4 {offsets = [0, 0, 0], sizes = [10, 16, 4], strides = [1, 1, 1]} : vector<12x18x4xbf16> to vector<10x16x4xbf16>
    %6 = vector.shape_cast %5 : vector<10x16x4xbf16> to vector<160x4xbf16>
    %7 = vector.extract_strided_slice %4 {offsets = [0, 1, 0], sizes = [10, 16, 4], strides = [1, 1, 1]} : vector<12x18x4xbf16> to vector<10x16x4xbf16>
    %8 = vector.shape_cast %7 : vector<10x16x4xbf16> to vector<160x4xbf16>
    %9 = vector.extract_strided_slice %4 {offsets = [0, 2, 0], sizes = [10, 16, 4], strides = [1, 1, 1]} : vector<12x18x4xbf16> to vector<10x16x4xbf16>
    %10 = vector.shape_cast %9 : vector<10x16x4xbf16> to vector<160x4xbf16>
    %11 = vector.extract_strided_slice %4 {offsets = [1, 0, 0], sizes = [10, 16, 4], strides = [1, 1, 1]} : vector<12x18x4xbf16> to vector<10x16x4xbf16>
    %12 = vector.shape_cast %11 : vector<10x16x4xbf16> to vector<160x4xbf16>
    %13 = vector.extract_strided_slice %4 {offsets = [1, 1, 0], sizes = [10, 16, 4], strides = [1, 1, 1]} : vector<12x18x4xbf16> to vector<10x16x4xbf16>
    %14 = vector.shape_cast %13 : vector<10x16x4xbf16> to vector<160x4xbf16>
    %15 = vector.extract_strided_slice %4 {offsets = [1, 2, 0], sizes = [10, 16, 4], strides = [1, 1, 1]} : vector<12x18x4xbf16> to vector<10x16x4xbf16>
    %16 = vector.shape_cast %15 : vector<10x16x4xbf16> to vector<160x4xbf16>
    %17 = vector.extract_strided_slice %4 {offsets = [2, 0, 0], sizes = [10, 16, 4], strides = [1, 1, 1]} : vector<12x18x4xbf16> to vector<10x16x4xbf16>
    %18 = vector.shape_cast %17 : vector<10x16x4xbf16> to vector<160x4xbf16>
    %19 = vector.extract_strided_slice %4 {offsets = [2, 1, 0], sizes = [10, 16, 4], strides = [1, 1, 1]} : vector<12x18x4xbf16> to vector<10x16x4xbf16>
    %20 = vector.shape_cast %19 : vector<10x16x4xbf16> to vector<160x4xbf16>
    %21 = vector.extract_strided_slice %4 {offsets = [2, 2, 0], sizes = [10, 16, 4], strides = [1, 1, 1]} : vector<12x18x4xbf16> to vector<10x16x4xbf16>
    %22 = vector.shape_cast %21 : vector<10x16x4xbf16> to vector<160x4xbf16>
    %23 = tpu.concatenate %6, %8, %10, %12, %14, %16, %18, %20, %22 in 1 : vector<160x4xbf16>, vector<160x4xbf16>, vector<160x4xbf16>, vector<160x4xbf16>, vector<160x4xbf16>, vector<160x4xbf16>, vector<160x4xbf16>, vector<160x4xbf16>, vector<160x4xbf16> -> vector<160x36xbf16>
    %c0_2 = arith.constant 0 : index
    %c0_3 = arith.constant 0 : index
    %24 = vector.load %arg5[%c0_2, %c0_3] : memref<36x32xbf16, #tpu.memory_space<vmem>>, vector<36x32xbf16>
    %cst = arith.constant dense<0.000000e+00> : vector<160x32xf32>
    %25 = tpu.matmul %23, %24, %cst {dimension_numbers = #tpu.dot_dimension_numbers<[1], [0], [0], [1], [0, 0, 1, 1], [], []>} : vector<160x36xbf16>, vector<36x32xbf16>, vector<160x32xf32> -> vector<160x32xf32>
    %cst_4 = arith.constant 0.000000e+00 : f32
    %26 = vector.broadcast %cst_4 : f32 to vector<160x32xf32>
    %27 = arith.maximumf %25, %26 : vector<160x32xf32>
    %28 = vector.shape_cast %27 : vector<160x32xf32> to vector<10x16x32xf32>
    %29 = arith.truncf %28 : vector<10x16x32xf32> to vector<10x16x32xbf16>
    %c0_5 = arith.constant 0 : index
    %30 = arith.index_cast %1 : i32 to index
    %c0_6 = arith.constant 0 : index
    %c0_7 = arith.constant 0 : index
    %31 = vector.load %arg3[%c0_5, %30, %c0_6, %c0_7] : memref<1x18x16x32xbf16, #tpu.memory_space<vmem>>, vector<1x10x16x32xbf16>
    %32 = vector.shape_cast %31 : vector<1x10x16x32xbf16> to vector<10x16x32xbf16>
    %33 = tpu.concatenate %29, %32 in 2 : vector<10x16x32xbf16>, vector<10x16x32xbf16> -> vector<10x16x64xbf16>
    %c0_8 = arith.constant 0 : index
    %c1 = arith.constant 1 : index
    %c0_9 = arith.constant 0 : index
    %34 = vector.load %arg10[%c0_8, %c1, %c0_9] : memref<10x18x64xbf16, #tpu.memory_space<vmem>>, vector<10x16x64xbf16>
    tpu.vector_store %arg10[%c0_8, %c1, %c0_9], %33 {strides = array<i32>} : memref<10x18x64xbf16, #tpu.memory_space<vmem>>, vector<10x16x64xbf16>,
    %cst_10 = arith.constant 0.000000e+00 : bf16
    %35 = vector.broadcast %cst_10 : bf16 to vector<10x1x64xbf16>
    %c0_11 = arith.constant 0 : index
    %c0_12 = arith.constant 0 : index
    %c0_13 = arith.constant 0 : index
    %36 = vector.load %arg10[%c0_11, %c0_12, %c0_13] : memref<10x18x64xbf16, #tpu.memory_space<vmem>>, vector<10x1x64xbf16>
    tpu.vector_store %arg10[%c0_11, %c0_12, %c0_13], %35 {strides = array<i32>} : memref<10x18x64xbf16, #tpu.memory_space<vmem>>, vector<10x1x64xbf16>,
    %c0_14 = arith.constant 0 : index
    %c17 = arith.constant 17 : index
    %c0_15 = arith.constant 0 : index
    %37 = vector.load %arg10[%c0_14, %c17, %c0_15] : memref<10x18x64xbf16, #tpu.memory_space<vmem>>, vector<10x1x64xbf16>
    tpu.vector_store %arg10[%c0_14, %c17, %c0_15], %35 {strides = array<i32>} : memref<10x18x64xbf16, #tpu.memory_space<vmem>>, vector<10x1x64xbf16>,
    %cst_16 = arith.constant 0.000000e+00 : bf16
    %38 = vector.broadcast %cst_16 : bf16 to vector<1x18x64xbf16>
    %c0_i32 = arith.constant 0 : i32
    %39 = arith.cmpi eq, %arg1, %c0_i32 : i32
    %40 = arith.extui %39 : i1 to i32
    %c0_i32_17 = arith.constant 0 : i32
    %41 = arith.cmpi ne, %40, %c0_i32_17 : i32
    scf.if %41 {
      %c0_63 = arith.constant 0 : index
      %c0_64 = arith.constant 0 : index
      %c0_65 = arith.constant 0 : index
      %95 = vector.load %arg10[%c0_63, %c0_64, %c0_65] : memref<10x18x64xbf16, #tpu.memory_space<vmem>>, vector<1x18x64xbf16>
      tpu.vector_store %arg10[%c0_63, %c0_64, %c0_65], %38 {strides = array<i32>} : memref<10x18x64xbf16, #tpu.memory_space<vmem>>, vector<1x18x64xbf16>,
    } else {
    }
    %c1_i32 = arith.constant 1 : i32
    %42 = arith.cmpi eq, %arg1, %c1_i32 : i32
    %43 = arith.extui %42 : i1 to i32
    %c0_i32_18 = arith.constant 0 : i32
    %44 = arith.cmpi ne, %43, %c0_i32_18 : i32
    scf.if %44 {
      %c9 = arith.constant 9 : index
      %c0_63 = arith.constant 0 : index
      %c0_64 = arith.constant 0 : index
      %95 = vector.load %arg10[%c9, %c0_63, %c0_64] : memref<10x18x64xbf16, #tpu.memory_space<vmem>>, vector<1x18x64xbf16>
      tpu.vector_store %arg10[%c9, %c0_63, %c0_64], %38 {strides = array<i32>} : memref<10x18x64xbf16, #tpu.memory_space<vmem>>, vector<1x18x64xbf16>,
    } else {
    }
    %c0_19 = arith.constant 0 : index
    %c0_20 = arith.constant 0 : index
    %c0_21 = arith.constant 0 : index
    %45 = vector.load %arg10[%c0_19, %c0_20, %c0_21] : memref<10x18x64xbf16, #tpu.memory_space<vmem>>, vector<8x16x64xbf16>
    %46 = vector.shape_cast %45 : vector<8x16x64xbf16> to vector<128x64xbf16>
    %c0_22 = arith.constant 0 : index
    %c1_23 = arith.constant 1 : index
    %c0_24 = arith.constant 0 : index
    %47 = vector.load %arg10[%c0_22, %c1_23, %c0_24] : memref<10x18x64xbf16, #tpu.memory_space<vmem>>, vector<8x16x64xbf16>
    %48 = vector.shape_cast %47 : vector<8x16x64xbf16> to vector<128x64xbf16>
    %c0_25 = arith.constant 0 : index
    %c2 = arith.constant 2 : index
    %c0_26 = arith.constant 0 : index
    %49 = vector.load %arg10[%c0_25, %c2, %c0_26] : memref<10x18x64xbf16, #tpu.memory_space<vmem>>, vector<8x16x64xbf16>
    %50 = vector.shape_cast %49 : vector<8x16x64xbf16> to vector<128x64xbf16>
    %c1_27 = arith.constant 1 : index
    %c0_28 = arith.constant 0 : index
    %c0_29 = arith.constant 0 : index
    %51 = vector.load %arg10[%c1_27, %c0_28, %c0_29] : memref<10x18x64xbf16, #tpu.memory_space<vmem>>, vector<8x16x64xbf16>
    %52 = vector.shape_cast %51 : vector<8x16x64xbf16> to vector<128x64xbf16>
    %c1_30 = arith.constant 1 : index
    %c1_31 = arith.constant 1 : index
    %c0_32 = arith.constant 0 : index
    %53 = vector.load %arg10[%c1_30, %c1_31, %c0_32] : memref<10x18x64xbf16, #tpu.memory_space<vmem>>, vector<8x16x64xbf16>
    %54 = vector.shape_cast %53 : vector<8x16x64xbf16> to vector<128x64xbf16>
    %c1_33 = arith.constant 1 : index
    %c2_34 = arith.constant 2 : index
    %c0_35 = arith.constant 0 : index
    %55 = vector.load %arg10[%c1_33, %c2_34, %c0_35] : memref<10x18x64xbf16, #tpu.memory_space<vmem>>, vector<8x16x64xbf16>
    %56 = vector.shape_cast %55 : vector<8x16x64xbf16> to vector<128x64xbf16>
    %c2_36 = arith.constant 2 : index
    %c0_37 = arith.constant 0 : index
    %c0_38 = arith.constant 0 : index
    %57 = vector.load %arg10[%c2_36, %c0_37, %c0_38] : memref<10x18x64xbf16, #tpu.memory_space<vmem>>, vector<8x16x64xbf16>
    %58 = vector.shape_cast %57 : vector<8x16x64xbf16> to vector<128x64xbf16>
    %c2_39 = arith.constant 2 : index
    %c1_40 = arith.constant 1 : index
    %c0_41 = arith.constant 0 : index
    %59 = vector.load %arg10[%c2_39, %c1_40, %c0_41] : memref<10x18x64xbf16, #tpu.memory_space<vmem>>, vector<8x16x64xbf16>
    %60 = vector.shape_cast %59 : vector<8x16x64xbf16> to vector<128x64xbf16>
    %c2_42 = arith.constant 2 : index
    %c2_43 = arith.constant 2 : index
    %c0_44 = arith.constant 0 : index
    %61 = vector.load %arg10[%c2_42, %c2_43, %c0_44] : memref<10x18x64xbf16, #tpu.memory_space<vmem>>, vector<8x16x64xbf16>
    %62 = vector.shape_cast %61 : vector<8x16x64xbf16> to vector<128x64xbf16>
    %63 = tpu.concatenate %46, %48, %50, %52, %54, %56, %58, %60, %62 in 1 : vector<128x64xbf16>, vector<128x64xbf16>, vector<128x64xbf16>, vector<128x64xbf16>, vector<128x64xbf16>, vector<128x64xbf16>, vector<128x64xbf16>, vector<128x64xbf16>, vector<128x64xbf16> -> vector<128x576xbf16>
    %c0_45 = arith.constant 0 : index
    %c0_46 = arith.constant 0 : index
    %64 = vector.load %arg6[%c0_45, %c0_46] : memref<576x128xbf16, #tpu.memory_space<vmem>>, vector<576x128xbf16>
    %cst_47 = arith.constant dense<0.000000e+00> : vector<128x128xf32>
    %65 = tpu.matmul %63, %64, %cst_47 {dimension_numbers = #tpu.dot_dimension_numbers<[1], [0], [0], [1], [0, 0, 1, 1], [], []>} : vector<128x576xbf16>, vector<576x128xbf16>, vector<128x128xf32> -> vector<128x128xf32>
    %c0_48 = arith.constant 0 : index
    %c0_49 = arith.constant 0 : index
    %66 = vector.load %arg7[%c0_48, %c0_49] : memref<1x128xf32, #tpu.memory_space<vmem>>, vector<1x128xf32>
    %67 = vector.broadcast %66 : vector<1x128xf32> to vector<128x128xf32>
    %68 = arith.addf %65, %67 : vector<128x128xf32>
    %69 = arith.negf %68 : vector<128x128xf32>
    %70 = math.exp %69 : vector<128x128xf32>
    %cst_50 = arith.constant 1.000000e+00 : f32
    %71 = vector.broadcast %cst_50 : f32 to vector<128x128xf32>
    %72 = arith.addf %71, %70 : vector<128x128xf32>
    %73 = arith.divf %71, %72 : vector<128x128xf32>
    %74 = vector.extract_strided_slice %73 {offsets = [0, 0], sizes = [128, 32], strides = [1, 1]} : vector<128x128xf32> to vector<128x32xf32>
    %75 = vector.extract_strided_slice %73 {offsets = [0, 32], sizes = [128, 32], strides = [1, 1]} : vector<128x128xf32> to vector<128x32xf32>
    %76 = vector.extract_strided_slice %73 {offsets = [0, 64], sizes = [128, 32], strides = [1, 1]} : vector<128x128xf32> to vector<128x32xf32>
    %77 = vector.extract_strided_slice %68 {offsets = [0, 96], sizes = [128, 32], strides = [1, 1]} : vector<128x128xf32> to vector<128x32xf32>
    %78 = math.tanh %77 : vector<128x32xf32>
    %c0_51 = arith.constant 0 : index
    %c0_52 = arith.constant 0 : index
    %c0_53 = arith.constant 0 : index
    %c0_54 = arith.constant 0 : index
    %79 = vector.load %arg4[%c0_51, %c0_52, %c0_53, %c0_54] : memref<1x8x16x32xf32, #tpu.memory_space<vmem>>, vector<1x8x16x32xf32>
    %80 = vector.shape_cast %79 : vector<1x8x16x32xf32> to vector<8x16x32xf32>
    %81 = vector.shape_cast %80 : vector<8x16x32xf32> to vector<128x32xf32>
    %82 = arith.mulf %75, %81 : vector<128x32xf32>
    %83 = arith.mulf %74, %78 : vector<128x32xf32>
    %84 = arith.addf %82, %83 : vector<128x32xf32>
    %85 = math.tanh %84 : vector<128x32xf32>
    %86 = arith.mulf %76, %85 : vector<128x32xf32>
    %87 = vector.shape_cast %86 : vector<128x32xf32> to vector<8x16x32xf32>
    %c0_55 = arith.constant 0 : index
    %c0_56 = arith.constant 0 : index
    %c0_57 = arith.constant 0 : index
    %c0_58 = arith.constant 0 : index
    %88 = vector.load %arg8[%c0_55, %c0_56, %c0_57, %c0_58] : memref<1x8x16x32xf32, #tpu.memory_space<vmem>>, vector<1x8x16x32xf32>
    %89 = vector.shape_cast %88 : vector<1x8x16x32xf32> to vector<8x16x32xf32>
    %90 = vector.shape_cast %87 : vector<8x16x32xf32> to vector<1x8x16x32xf32>
    tpu.vector_store %arg8[%c0_55, %c0_56, %c0_57, %c0_58], %90 {strides = array<i32>} : memref<1x8x16x32xf32, #tpu.memory_space<vmem>>, vector<1x8x16x32xf32>,
    %91 = vector.shape_cast %84 : vector<128x32xf32> to vector<8x16x32xf32>
    %c0_59 = arith.constant 0 : index
    %c0_60 = arith.constant 0 : index
    %c0_61 = arith.constant 0 : index
    %c0_62 = arith.constant 0 : index
    %92 = vector.load %arg9[%c0_59, %c0_60, %c0_61, %c0_62] : memref<1x8x16x32xf32, #tpu.memory_space<vmem>>, vector<1x8x16x32xf32>
    %93 = vector.shape_cast %92 : vector<1x8x16x32xf32> to vector<8x16x32xf32>
    %94 = vector.shape_cast %91 : vector<8x16x32xf32> to vector<1x8x16x32xf32>
    tpu.vector_store %arg9[%c0_59, %c0_60, %c0_61, %c0_62], %94 {strides = array<i32>} : memref<1x8x16x32xf32, #tpu.memory_space<vmem>>, vector<1x8x16x32xf32>,
    return
  }
  func.func @transform_0(%arg0: i32, %arg1: i32) -> (i32, i32, i32, i32) {
    %c0_i32 = arith.constant 0 : i32
    %c0_i32_0 = arith.constant 0 : i32
    %c0_i32_1 = arith.constant 0 : i32
    %c0_i32_2 = arith.constant 0 : i32
    return %arg0, %c0_i32, %c0_i32_0, %c0_i32_1 : i32, i32, i32, i32
  }
  func.func @transform_1(%arg0: i32, %arg1: i32) -> (i32, i32, i32, i32) {
    %c0_i32 = arith.constant 0 : i32
    %c0_i32_0 = arith.constant 0 : i32
    %c0_i32_1 = arith.constant 0 : i32
    %c0_i32_2 = arith.constant 0 : i32
    return %arg0, %c0_i32, %c0_i32_0, %c0_i32_1 : i32, i32, i32, i32
  }
  func.func @transform_2(%arg0: i32, %arg1: i32) -> (i32, i32, i32, i32) {
    %c0_i32 = arith.constant 0 : i32
    %c0_i32_0 = arith.constant 0 : i32
    %c0_i32_1 = arith.constant 0 : i32
    return %arg0, %arg1, %c0_i32, %c0_i32_0 : i32, i32, i32, i32
  }
  func.func @transform_3(%arg0: i32, %arg1: i32) -> (i32, i32) {
    %c0_i32 = arith.constant 0 : i32
    %c0_i32_0 = arith.constant 0 : i32
    %c0_i32_1 = arith.constant 0 : i32
    return %c0_i32, %c0_i32_0 : i32, i32
  }
  func.func @transform_4(%arg0: i32, %arg1: i32) -> (i32, i32) {
    %c0_i32 = arith.constant 0 : i32
    %c0_i32_0 = arith.constant 0 : i32
    %c0_i32_1 = arith.constant 0 : i32
    return %c0_i32, %c0_i32_0 : i32, i32
  }
  func.func @transform_5(%arg0: i32, %arg1: i32) -> (i32, i32) {
    %c0_i32 = arith.constant 0 : i32
    %c0_i32_0 = arith.constant 0 : i32
    %c0_i32_1 = arith.constant 0 : i32
    return %c0_i32, %c0_i32_0 : i32, i32
  }
  func.func @transform_6(%arg0: i32, %arg1: i32) -> (i32, i32, i32, i32) {
    %c0_i32 = arith.constant 0 : i32
    %c0_i32_0 = arith.constant 0 : i32
    %c0_i32_1 = arith.constant 0 : i32
    return %arg0, %arg1, %c0_i32, %c0_i32_0 : i32, i32, i32, i32
  }
  func.func @transform_7(%arg0: i32, %arg1: i32) -> (i32, i32, i32, i32) {
    %c0_i32 = arith.constant 0 : i32
    %c0_i32_0 = arith.constant 0 : i32
    %c0_i32_1 = arith.constant 0 : i32
    return %arg0, %arg1, %c0_i32, %c0_i32_0 : i32, i32, i32, i32
  }
}

</mosaic_0001>

<llo_original>
// kernel: recurrent_conv_layer.1
$region0: #{recurrent_conv_layer.1}
  #allocation0 [shape = 'u32[]', space=smem, size = 0x4, offset = 0x4, fixed_abs, tag = 'smem constant byte address 0x4 - core index']
  #allocation1 [shape = 'u32[144,128]{1,0:T(1,128)}', space=vmem, size = 0x12000, scoped, tag = 'internal scratch']
  #allocation2 [shape = 'bf16[10,18,64]{2,1,0:T(8,128)(2,1)}', space=vmem, size = 0xf000, scoped, tag = 'scratch operand']
  %s0 = inlined_call_operand.vmem [shape: bf16[2,20,18,4], index: 0, kind: input, shape index: {}]
  %s1 = inlined_call_operand.vmem [shape: bf16[2,18,16,32], index: 1, kind: input, shape index: {}]
  %s2 = inlined_call_operand.vmem [shape: f32[2,16,16,32], index: 2, kind: input, shape index: {}]
  %s3 = inlined_call_operand.vmem [shape: bf16[36,32], index: 3, kind: input, shape index: {}]
  %s4 = inlined_call_operand.vmem [shape: bf16[576,128], index: 4, kind: input, shape index: {}]
  %s5 = inlined_call_operand.vmem [shape: f32[1,128], index: 5, kind: input, shape index: {}]
  %s6 = inlined_call_operand.vmem [shape: f32[2,16,16,32], index: 6, kind: output, shape index: {0}]
  %s7 = inlined_call_operand.hbm [shape: f32[2,16,16,32], index: 7, kind: output, shape index: {1}]
  %8 = xla_tuple %s6, %s7
  %s9 = sld [smem:[#allocation0]]
  $region73: #{recurrent_conv_layer.1} parent=0
    _
  %s11 = ssub.s32 1, %s9
  %s12 = scalar_select 0, %s11, %s9
  $region1: #{recurrent_conv_layer.1} parent=0
    #allocation3 [shape = 'u8[131072]{0}', space=vmem, size = 0x20000, scoped, tag = 'output window, operand 1']
    #allocation4 [shape = 's32[2]{0}', space=sflag, size = 0x8, scoped, tag = 'scoped memory for recurrent_conv_layer.1']
    %13 = vsyncpa [#allocation4], 0
    %s14 = scalar_lea.sflag [#allocation4], 1
    %15 = vsyncpa %s14, 0
    loop: start=0, step=1, limit=6
    $region2: #{recurrent_conv_layer.1} parent=1 // loop_pre_header
      _
    $region3: #{recurrent_conv_layer.1} parent=1 // loop_header
      %s17 = sphi 0, %s21
      %p18 = scmp.ge.s32.totalorder %s17, 6
      %s24 = sphi 0, %s36
      %s25 = sphi 0, %s32
      %s26 = sphi 0, %s24
      %s27 = sphi 0, %s25
      %s28 = sphi 0, %s26
      %s29 = sphi 0, %s27
      %s39 = sphi 0, %s41
      %s42 = sphi 0, %s39
      %s43 = sphi 0, %s42
      %s59 = sphi 0, %s43
      %s65 = sphi 0, %s67
      %s68 = sphi 0, %s65
      %s69 = sphi 0, %s68
      %s85 = sphi 0, %s69
      %s93 = sphi 0, %s95
      %s96 = sphi 0, %s93
      %s97 = sphi 0, %s96
      %s113 = sphi 0, %s97
      %s117 = sphi 0, %s117
      %s119 = sphi 0, %s117
      %s120 = sphi 0, %s119
      %s134 = sphi 0, %s120
      %s138 = sphi 0, %s138
      %s140 = sphi 0, %s138
      %s141 = sphi 0, %s140
      %s155 = sphi 0, %s141
      %s159 = sphi 0, %s159
      %s161 = sphi 0, %s159
      %s162 = sphi 0, %s161
      %s176 = sphi 0, %s162
      %s184 = sphi 0, %s186
      %s187 = sphi 0, %s184
      %s188 = sphi 0, %s187
      %s204 = sphi 0, %s188
      %s212 = sphi 0, %s214
      %s215 = sphi 0, %s212
      %s216 = sphi 0, %s215
      %s232 = sphi 0, %s216
    $region4: #{recurrent_conv_layer.1} parent=1 // loop_header_branch
      %20 = sbr.rel (%p18) target = $region8
    $region5: #{recurrent_conv_layer.1} parent=1 // loop_body
      %s22 = ssub.s32 %s17, 1
      %s23 = ssub.s32 %s17, 2
      %s30 = sadd.s32 1, %s25
      %p31 = scmp.ge.s32.totalorder %s30, 2
      %s32 = scalar_select %p31, 0, %s30
      %s33 = sadd.s32 1, %s24
      %s34 = scalar_select %p31, %s33, %s24
      %p35 = scmp.ge.s32.totalorder %s34, 2
      %s36 = scalar_select %p35, 0, %s34
      %s37 = ssub.s32 %s24, %s36
      %p38 = scmp.eq.s32.totalorder %s37, 0
      %s40 = sadd.s32 %s39, 1
      %s41 = scalar_select %p38, %s39, %s40
      %p44 = pneg %p38
      %p45 = scmp.eq.s32.totalorder %s17, 3
      %p46 = por %p44, %p45
      %p47 = scmp.ne.s32.totalorder %s39, %s42
      %p48 = scmp.eq.s32.totalorder %s17, 0
      %p49 = por %p47, %p48
      %p50 = scmp.ne.s32.totalorder %s39, %s42
      %p51 = scmp.eq.s32.totalorder %s22, 3
      %p52 = por %p50, %p51
      %p53 = scmp.ne.s32.totalorder %s42, %s43
      %p54 = scmp.eq.s32.totalorder %s22, 0
      %p55 = por %p53, %p54
      %p56 = scmp.ne.s32.totalorder %s42, %s43
      %p57 = scmp.eq.s32.totalorder %s23, 3
      %p58 = por %p56, %p57
      %p60 = scmp.ne.s32.totalorder %s43, %s59
      %p61 = scmp.eq.s32.totalorder %s23, 0
      %p62 = por %p60, %p61
      %s63 = ssub.s32 %s24, %s36
      %p64 = scmp.eq.s32.totalorder %s63, 0
      %s66 = sadd.s32 %s65, 1
      %s67 = scalar_select %p64, %s65, %s66
      %p70 = pneg %p64
      %p71 = scmp.eq.s32.totalorder %s17, 3
      %p72 = por %p70, %p71
      %p73 = scmp.ne.s32.totalorder %s65, %s68
      %p74 = scmp.eq.s32.totalorder %s17, 0
      %p75 = por %p73, %p74
      %p76 = scmp.ne.s32.totalorder %s65, %s68
      %p77 = scmp.eq.s32.totalorder %s22, 3
      %p78 = por %p76, %p77
      %p79 = scmp.ne.s32.totalorder %s68, %s69
      %p80 = scmp.eq.s32.totalorder %s22, 0
      %p81 = por %p79, %p80
      %p82 = scmp.ne.s32.totalorder %s68, %s69
      %p83 = scmp.eq.s32.totalorder %s23, 3
      %p84 = por %p82, %p83
      %p86 = scmp.ne.s32.totalorder %s69, %s85
      %p87 = scmp.eq.s32.totalorder %s23, 0
      %p88 = por %p86, %p87
      %s89 = ssub.s32 %s24, %s36
      %s90 = ssub.s32 %s25, %s32
      %s91 = sor.u32 %s89, %s90
      %p92 = scmp.eq.s32.totalorder %s91, 0
      %s94 = sadd.s32 %s93, 1
      %s95 = scalar_select %p92, %s93, %s94
      %p98 = pneg %p92
      %p99 = scmp.eq.s32.totalorder %s17, 3
      %p100 = por %p98, %p99
      %p101 = scmp.ne.s32.totalorder %s93, %s96
      %p102 = scmp.eq.s32.totalorder %s17, 0
      %p103 = por %p101, %p102
      %p104 = scmp.ne.s32.totalorder %s93, %s96
      %p105 = scmp.eq.s32.totalorder %s22, 3
      %p106 = por %p104, %p105
      %p107 = scmp.ne.s32.totalorder %s96, %s97
      %p108 = scmp.eq.s32.totalorder %s22, 0
      %p109 = por %p107, %p108
      %p110 = scmp.ne.s32.totalorder %s96, %s97
      %p111 = scmp.eq.s32.totalorder %s23, 3
      %p112 = por %p110, %p111
      %p114 = scmp.ne.s32.totalorder %s97, %s113
      %p115 = scmp.eq.s32.totalorder %s23, 0
      %p116 = por %p114, %p115
      %s118 = sadd.s32 %s117, 1
      %p121 = scmp.eq.s32.totalorder %s17, 3
      %p122 = scmp.ne.s32.totalorder %s117, %s119
      %p123 = scmp.eq.s32.totalorder %s17, 0
      %p124 = por %p122, %p123
      %p125 = scmp.ne.s32.totalorder %s117, %s119
      %p126 = scmp.eq.s32.totalorder %s22, 3
      %p127 = por %p125, %p126
      %p128 = scmp.ne.s32.totalorder %s119, %s120
      %p129 = scmp.eq.s32.totalorder %s22, 0
      %p130 = por %p128, %p129
      %p131 = scmp.ne.s32.totalorder %s119, %s120
      %p132 = scmp.eq.s32.totalorder %s23, 3
      %p133 = por %p131, %p132
      %p135 = scmp.ne.s32.totalorder %s120, %s134
      %p136 = scmp.eq.s32.totalorder %s23, 0
      %p137 = por %p135, %p136
      %s139 = sadd.s32 %s138, 1
      %p142 = scmp.eq.s32.totalorder %s17, 3
      %p143 = scmp.ne.s32.totalorder %s138, %s140
      %p144 = scmp.eq.s32.totalorder %s17, 0
      %p145 = por %p143, %p144
      %p146 = scmp.ne.s32.totalorder %s138, %s140
      %p147 = scmp.eq.s32.totalorder %s22, 3
      %p148 = por %p146, %p147
      %p149 = scmp.ne.s32.totalorder %s140, %s141
      %p150 = scmp.eq.s32.totalorder %s22, 0
      %p151 = por %p149, %p150
      %p152 = scmp.ne.s32.totalorder %s140, %s141
      %p153 = scmp.eq.s32.totalorder %s23, 3
      %p154 = por %p152, %p153
      %p156 = scmp.ne.s32.totalorder %s141, %s155
      %p157 = scmp.eq.s32.totalorder %s23, 0
      %p158 = por %p156, %p157
      %s160 = sadd.s32 %s159, 1
      %p163 = scmp.eq.s32.totalorder %s17, 3
      %p164 = scmp.ne.s32.totalorder %s159, %s161
      %p165 = scmp.eq.s32.totalorder %s17, 0
      %p166 = por %p164, %p165
      %p167 = scmp.ne.s32.totalorder %s159, %s161
      %p168 = scmp.eq.s32.totalorder %s22, 3
      %p169 = por %p167, %p168
      %p170 = scmp.ne.s32.totalorder %s161, %s162
      %p171 = scmp.eq.s32.totalorder %s22, 0
      %p172 = por %p170, %p171
      %p173 = scmp.ne.s32.totalorder %s161, %s162
      %p174 = scmp.eq.s32.totalorder %s23, 3
      %p175 = por %p173, %p174
      %p177 = scmp.ne.s32.totalorder %s162, %s176
      %p178 = scmp.eq.s32.totalorder %s23, 0
      %p179 = por %p177, %p178
      %s180 = ssub.s32 %s24, %s36
      %s181 = ssub.s32 %s25, %s32
      %s182 = sor.u32 %s180, %s181
      %p183 = scmp.eq.s32.totalorder %s182, 0
      %s185 = sadd.s32 %s184, 1
      %s186 = scalar_select %p183, %s184, %s185
      %p189 = pneg %p183
      %p190 = scmp.eq.s32.totalorder %s17, 3
      %p191 = por %p189, %p190
      %p192 = scmp.ne.s32.totalorder %s184, %s187
      %p193 = scmp.eq.s32.totalorder %s17, 0
      %p194 = por %p192, %p193
      %p195 = scmp.ne.s32.totalorder %s184, %s187
      %p196 = scmp.eq.s32.totalorder %s22, 3
      %p197 = por %p195, %p196
      %p198 = scmp.ne.s32.totalorder %s187, %s188
      %p199 = scmp.eq.s32.totalorder %s22, 0
      %p200 = por %p198, %p199
      %p201 = scmp.ne.s32.totalorder %s187, %s188
      %p202 = scmp.eq.s32.totalorder %s23, 3
      %p203 = por %p201, %p202
      %p205 = scmp.ne.s32.totalorder %s188, %s204
      %p206 = scmp.eq.s32.totalorder %s23, 0
      %p207 = por %p205, %p206
      %s208 = ssub.s32 %s24, %s36
      %s209 = ssub.s32 %s25, %s32
      %s210 = sor.u32 %s208, %s209
      %p211 = scmp.eq.s32.totalorder %s210, 0
      %s213 = sadd.s32 %s212, 1
      %s214 = scalar_select %p211, %s212, %s213
      %p217 = pneg %p211
      %p218 = scmp.eq.s32.totalorder %s17, 3
      %p219 = por %p217, %p218
      %p220 = scmp.ne.s32.totalorder %s212, %s215
      %p221 = scmp.eq.s32.totalorder %s17, 0
      %p222 = por %p220, %p221
      %p223 = scmp.ne.s32.totalorder %s212, %s215
      %p224 = scmp.eq.s32.totalorder %s22, 3
      %p225 = por %p223, %p224
      %p226 = scmp.ne.s32.totalorder %s215, %s216
      %p227 = scmp.eq.s32.totalorder %s22, 0
      %p228 = por %p226, %p227
      %p229 = scmp.ne.s32.totalorder %s215, %s216
      %p230 = scmp.eq.s32.totalorder %s23, 3
      %p231 = por %p229, %p230
      %p233 = scmp.ne.s32.totalorder %s216, %s232
      %p234 = scmp.eq.s32.totalorder %s23, 0
      %p235 = por %p233, %p234
      %p236 = scmp.le.s32.totalorder 1, %s17
      %p237 = scmp.lt.s32.totalorder %s17, 5
      %p238 = pnand %p236, %p237
      %p239 = pneg %p238
      // Predicated region
      $region9: #{recurrent_conv_layer.1} parent=5 // pred_check
        _
      $region10: #{recurrent_conv_layer.1} parent=5 // pred_check_branch
        %241 = sbr.rel (%p238) target = $region12
      $region11: #{recurrent_conv_layer.1} parent=5 // pred_region
        %s242 = ssub.s32 %s17, 1
        // Predicated region
        $region13: #{recurrent_conv_layer.1} parent=11 // pred_check
          %p243 = pneg %p130
        $region14: #{recurrent_conv_layer.1} parent=11 // pred_check_branch
          %245 = sbr.rel (%p243) target = $region16
        $region15: #{recurrent_conv_layer.1} parent=11 // pred_region
          _
        $region16: #{recurrent_conv_layer.1} parent=11 // pred_fallthru
          _
        // Predicated region
        $region17: #{recurrent_conv_layer.1} parent=11 // pred_check
          %p246 = pneg %p151
        $region18: #{recurrent_conv_layer.1} parent=11 // pred_check_branch
          %248 = sbr.rel (%p246) target = $region20
        $region19: #{recurrent_conv_layer.1} parent=11 // pred_region
          _
        $region20: #{recurrent_conv_layer.1} parent=11 // pred_fallthru
          _
        // Predicated region
        $region21: #{recurrent_conv_layer.1} parent=11 // pred_check
          %p249 = pneg %p172
        $region22: #{recurrent_conv_layer.1} parent=11 // pred_check_branch
          %251 = sbr.rel (%p249) target = $region24
        $region23: #{recurrent_conv_layer.1} parent=11 // pred_region
          _
        $region24: #{recurrent_conv_layer.1} parent=11 // pred_fallthru
          _
      $region12: #{recurrent_conv_layer.1} parent=5 // pred_fallthru
        _
      %p252 = scmp.lt.s32.totalorder %s17, 4
      // Predicated region
      $region25: #{recurrent_conv_layer.1} parent=5 // pred_check
        %p253 = pneg %p252
      $region26: #{recurrent_conv_layer.1} parent=5 // pred_check_branch
        %255 = sbr.rel (%p253) target = $region28
      $region27: #{recurrent_conv_layer.1} parent=5 // pred_region
        // Predicated region
        $region29: #{recurrent_conv_layer.1} parent=27 // pred_check
          %p256 = pneg %p49
        $region30: #{recurrent_conv_layer.1} parent=27 // pred_check_branch
          %258 = sbr.rel (%p256) target = $region32
        $region31: #{recurrent_conv_layer.1} parent=27 // pred_region
          %p259 = scmp.lt.s32.totalorder %s24, 1
          %s260 = scalar_select %p259, %s24, 1
          %s261 = smul.addr %s260, 60
          %s262 = smul.addr %s261, 4
          %s263 = scalar_lea.vmem %s0, %s262
        $region32: #{recurrent_conv_layer.1} parent=27 // pred_fallthru
          _
        // Predicated region
        $region33: #{recurrent_conv_layer.1} parent=27 // pred_check
          %p264 = pneg %p75
        $region34: #{recurrent_conv_layer.1} parent=27 // pred_check_branch
          %266 = sbr.rel (%p264) target = $region36
        $region35: #{recurrent_conv_layer.1} parent=27 // pred_region
          %p267 = scmp.lt.s32.totalorder %s24, 1
          %s268 = scalar_select %p267, %s24, 1
          %s269 = smul.addr %s268, 36
          %s270 = smul.addr %s269, 4
          %s271 = scalar_lea.vmem %s1, %s270
        $region36: #{recurrent_conv_layer.1} parent=27 // pred_fallthru
          _
        // Predicated region
        $region37: #{recurrent_conv_layer.1} parent=27 // pred_check
          %p272 = pneg %p103
        $region38: #{recurrent_conv_layer.1} parent=27 // pred_check_branch
          %274 = sbr.rel (%p272) target = $region40
        $region39: #{recurrent_conv_layer.1} parent=27 // pred_region
          %s275 = smul.u32 8, %s25
          %p276 = scmp.lt.s32.totalorder %s24, 1
          %s277 = scalar_select %p276, %s24, 1
          %p278 = scmp.lt.s32.totalorder %s275, 15
          %s279 = scalar_select %p278, %s275, 15
          %s280 = smul.addr %s279, 2
          %s281 = smul.addr %s277, 32
          %s282 = sadd.s32 %s280, %s281
          %s283 = smul.addr %s282, 8
          %s284 = scalar_lea.vmem %s2, %s283
          %s285 = smul.u32 8, %s25
        $region40: #{recurrent_conv_layer.1} parent=27 // pred_fallthru
          _
      $region28: #{recurrent_conv_layer.1} parent=5 // pred_fallthru
        _
      %p286 = scmp.le.s32.totalorder 1, %s17
      %p287 = scmp.lt.s32.totalorder %s17, 5
      %p288 = pnand %p286, %p287
      %p289 = pneg %p288
      // Predicated region
      $region41: #{recurrent_conv_layer.1} parent=5 // pred_check
        _
      $region42: #{recurrent_conv_layer.1} parent=5 // pred_check_branch
        %291 = sbr.rel (%p288) target = $region44
      $region43: #{recurrent_conv_layer.1} parent=5 // pred_region
        %s292 = ssub.s32 %s17, 1
        %p293 = scmp.lt.s32.totalorder %s26, 1
        %s294 = scalar_select %p293, %s26, 1
        %s295 = smul.addr %s294, 60
        %s296 = smul.addr %s295, 4
        %s297 = scalar_lea.vmem %s0, %s296
        %p298 = pneg %p55
        %p299 = pneg %p52
        %p300 = scmp.lt.s32.totalorder %s26, 1
        %s301 = scalar_select %p300, %s26, 1
        %s302 = smul.addr %s301, 36
        %s303 = smul.addr %s302, 4
        %s304 = scalar_lea.vmem %s1, %s303
        %p305 = pneg %p81
        %p306 = pneg %p78
        %s307 = smul.u32 8, %s27
        %p308 = scmp.lt.s32.totalorder %s26, 1
        %s309 = scalar_select %p308, %s26, 1
        %p310 = scmp.lt.s32.totalorder %s307, 15
        %s311 = scalar_select %p310, %s307, 15
        %s312 = smul.addr %s311, 2
        %s313 = smul.addr %s309, 32
        %s314 = sadd.s32 %s312, %s313
        %s315 = smul.addr %s314, 8
        %s316 = scalar_lea.vmem %s2, %s315
        %p317 = pneg %p109
        %p318 = pneg %p106
        %p319 = pneg %p130
        %p320 = pneg %p127
        %p321 = pneg %p151
        %p322 = pneg %p148
        %p323 = pneg %p172
        %p324 = pneg %p169
        %p325 = pneg %p200
        %p326 = pneg %p197
        %s327 = smul.u32 8, %s27
        %p328 = scmp.lt.s32.totalorder %s26, 1
        %s329 = scalar_select %p328, %s26, 1
        %p330 = scmp.lt.s32.totalorder %s327, 15
        %s331 = scalar_select %p330, %s327, 15
        %s332 = smul.addr %s331, 2
        %s333 = smul.addr %s329, 32
        %s334 = sadd.s32 %s332, %s333
        %s335 = smul.addr %s334, 8
        %s336 = scalar_lea.vmem %s6, %s335
        %p337 = pneg %p228
        %p338 = pneg %p225
        %s339 = sand.u32 %s215, 1
        %s340 = scalar_lea.sflag [#allocation4], %s339
        %s341 = sand.u32 %s215, 1
        %s342 = smul.addr %s341, 128
        %s343 = scalar_lea.vmem [#allocation3], %s342
        %p344 = scmp.lt.s32.totalorder %s26, 1
        %s345 = scalar_select %p344, %s26, 1
        %s346 = smul.addr %s345, 60
        %s347 = smul.addr %s346, 4
        %s348 = scalar_lea.vmem %s0, %s347
        %p349 = scmp.lt.s32.totalorder %s26, 1
        %s350 = scalar_select %p349, %s26, 1
        %s351 = smul.addr %s350, 36
        %s352 = smul.addr %s351, 4
        %s353 = scalar_lea.vmem %s1, %s352
        %s354 = smul.u32 8, %s27
        %p355 = scmp.lt.s32.totalorder %s26, 1
        %s356 = scalar_select %p355, %s26, 1
        %p357 = scmp.lt.s32.totalorder %s354, 15
        %s358 = scalar_select %p357, %s354, 15
        %s359 = smul.addr %s358, 2
        %s360 = smul.addr %s356, 32
        %s361 = sadd.s32 %s359, %s360
        %s362 = smul.addr %s361, 8
        %s363 = scalar_lea.vmem %s2, %s362
        %s364 = smul.u32 8, %s27
        %s365 = smul.u32 8, %s27
        %p366 = scmp.lt.s32.totalorder %s26, 1
        %s367 = scalar_select %p366, %s26, 1
        %p368 = scmp.lt.s32.totalorder %s365, 15
        %s369 = scalar_select %p368, %s365, 15
        %s370 = smul.addr %s369, 2
        %s371 = smul.addr %s367, 32
        %s372 = sadd.s32 %s370, %s371
        %s373 = smul.addr %s372, 8
        %s374 = scalar_lea.vmem %s6, %s373
        %s375 = smul.u32 8, %s27
        %s376 = smul.u32 8, %s27
        %s378 = smul.u32 %s27, 8
        %s379 = smul.u32 %s378, 3
        %s380 = smul.addr %s379, 4
        %s381 = scalar_lea.vmem %s348, %s380
        %v382 = vld [vmem:[%s381] sm:$0xf]
        %v383 = vld [vmem:[%s381 + $0x4] sm:$0xf]
        %v384 = vld [vmem:[%s381 + $0x8] sm:$0x1]
        %v385 = vld [vmem:[%s381 + $0xc] sm:$0xf]
        %v386 = vld [vmem:[%s381 + $0x10] sm:$0xf]
        %v387 = vld [vmem:[%s381 + $0x14] sm:$0x1]
        %v388 = vld [vmem:[%s381 + $0x18] sm:$0xf]
        %v389 = vld [vmem:[%s381 + $0x1c] sm:$0xf]
        %v390 = vld [vmem:[%s381 + $0x20] sm:$0x1]
        %v391 = vld [vmem:[%s381 + $0x24] sm:$0xf]
        %v392 = vld [vmem:[%s381 + $0x28] sm:$0xf]
        %v393 = vld [vmem:[%s381 + $0x2c] sm:$0x1]
        %v394 = vld [vmem:[%s381 + $0x30] sm:$0xf]
        %v395 = vld [vmem:[%s381 + $0x34] sm:$0xf]
        %v396 = vld [vmem:[%s381 + $0x38] sm:$0x1]
        %v397 = vld [vmem:[%s381 + $0x3c] sm:$0xf]
        %v398 = vld [vmem:[%s381 + $0x40] sm:$0xf]
        %v399 = vld [vmem:[%s381 + $0x44] sm:$0x1]
        %v400 = vld [vmem:[%s381 + $0x48] sm:$0xf]
        %v401 = vld [vmem:[%s381 + $0x4c] sm:$0xf]
        %v402 = vld [vmem:[%s381 + $0x50] sm:$0x1]
        %v403 = vld [vmem:[%s381 + $0x54] sm:$0xf]
        %v404 = vld [vmem:[%s381 + $0x58] sm:$0xf]
        %v405 = vld [vmem:[%s381 + $0x5c] sm:$0x1]
        %v406 = vld [vmem:[%s381 + $0x60] sm:$0xf]
        %v407 = vld [vmem:[%s381 + $0x64] sm:$0xf]
        %v408 = vld [vmem:[%s381 + $0x68] sm:$0x1]
        %v409 = vld [vmem:[%s381 + $0x6c] sm:$0xf]
        %v410 = vld [vmem:[%s381 + $0x70] sm:$0xf]
        %v411 = vld [vmem:[%s381 + $0x74] sm:$0x1]
        %v412 = vld [vmem:[%s381 + $0x78] sm:$0xf]
        %v413 = vld [vmem:[%s381 + $0x7c] sm:$0xf]
        %v414 = vld [vmem:[%s381 + $0x80] sm:$0x1]
        %v415 = vld [vmem:[%s381 + $0x84] sm:$0xf]
        %v416 = vld [vmem:[%s381 + $0x88] sm:$0xf]
        %v417 = vld [vmem:[%s381 + $0x8c] sm:$0x1]
        %vm418 = vsmask.f32 3328
        %vm419 = vsmask.f32 7440
        %vm420 = vmor %vm418, %vm419
        %v422 = vshrl.u32 %v382, 16
        %v424 = vrot.slane %v422, 4
        %v425 = vshll.u32 %v382, 16
        %v427 = vrot.slane %v425, 5
        %v428 = vor.u32 %v424, %v427
        %v429 = vrot.slane %v428, 4
        %v431 = vshll.u32 %v383, 16
        %v433 = vrot.slane %v431, 5
        %v434 = vsel %vm420, %v429, %v433
        %v435 = vshrl.u32 %v383, 16
        %v437 = vrot.slane %v435, 4
        %v438 = vor.u32 %v437, %v433
        %v439 = vrot.slane %v438, 4
        %v441 = vshll.u32 %v384, 16
        %v443 = vrot.slane %v441, 5
        %v444 = vsel %vm420, %v439, %v443
        %v446 = vshrl.u32 %v385, 16
        %v448 = vrot.slane %v446, 4
        %v449 = vshll.u32 %v385, 16
        %v451 = vrot.slane %v449, 5
        %v452 = vor.u32 %v448, %v451
        %v453 = vrot.slane %v452, 4
        %v455 = vshll.u32 %v386, 16
        %v457 = vrot.slane %v455, 5
        %v458 = vsel %vm420, %v453, %v457
        %v459 = vshrl.u32 %v386, 16
        %v461 = vrot.slane %v459, 4
        %v462 = vor.u32 %v461, %v457
        %v463 = vrot.slane %v462, 4
        %v465 = vshll.u32 %v387, 16
        %v467 = vrot.slane %v465, 5
        %v468 = vsel %vm420, %v463, %v467
        %v470 = vshrl.u32 %v388, 16
        %v472 = vrot.slane %v470, 4
        %v473 = vshll.u32 %v388, 16
        %v475 = vrot.slane %v473, 5
        %v476 = vor.u32 %v472, %v475
        %v477 = vrot.slane %v476, 4
        %v479 = vshll.u32 %v389, 16
        %v481 = vrot.slane %v479, 5
        %v482 = vsel %vm420, %v477, %v481
        %v483 = vshrl.u32 %v389, 16
        %v485 = vrot.slane %v483, 4
        %v486 = vor.u32 %v485, %v481
        %v487 = vrot.slane %v486, 4
        %v489 = vshll.u32 %v390, 16
        %v491 = vrot.slane %v489, 5
        %v492 = vsel %vm420, %v487, %v491
        %v494 = vshrl.u32 %v391, 16
        %v496 = vrot.slane %v494, 4
        %v497 = vshll.u32 %v391, 16
        %v499 = vrot.slane %v497, 5
        %v500 = vor.u32 %v496, %v499
        %v501 = vrot.slane %v500, 4
        %v503 = vshll.u32 %v392, 16
        %v505 = vrot.slane %v503, 5
        %v506 = vsel %vm420, %v501, %v505
        %v507 = vshrl.u32 %v392, 16
        %v509 = vrot.slane %v507, 4
        %v510 = vor.u32 %v509, %v505
        %v511 = vrot.slane %v510, 4
        %v513 = vshll.u32 %v393, 16
        %v515 = vrot.slane %v513, 5
        %v516 = vsel %vm420, %v511, %v515
        %v518 = vshrl.u32 %v394, 16
        %v520 = vrot.slane %v518, 4
        %v521 = vshll.u32 %v394, 16
        %v523 = vrot.slane %v521, 5
        %v524 = vor.u32 %v520, %v523
        %v525 = vrot.slane %v524, 4
        %v527 = vshll.u32 %v395, 16
        %v529 = vrot.slane %v527, 5
        %v530 = vsel %vm420, %v525, %v529
        %v531 = vshrl.u32 %v395, 16
        %v533 = vrot.slane %v531, 4
        %v534 = vor.u32 %v533, %v529
        %v535 = vrot.slane %v534, 4
        %v537 = vshll.u32 %v396, 16
        %v539 = vrot.slane %v537, 5
        %v540 = vsel %vm420, %v535, %v539
        %v542 = vshrl.u32 %v397, 16
        %v544 = vrot.slane %v542, 4
        %v545 = vshll.u32 %v397, 16
        %v547 = vrot.slane %v545, 5
        %v548 = vor.u32 %v544, %v547
        %v549 = vrot.slane %v548, 4
        %v551 = vshll.u32 %v398, 16
        %v553 = vrot.slane %v551, 5
        %v554 = vsel %vm420, %v549, %v553
        %v555 = vshrl.u32 %v398, 16
        %v557 = vrot.slane %v555, 4
        %v558 = vor.u32 %v557, %v553
        %v559 = vrot.slane %v558, 4
        %v561 = vshll.u32 %v399, 16
        %v563 = vrot.slane %v561, 5
        %v564 = vsel %vm420, %v559, %v563
        %v566 = vshrl.u32 %v400, 16
        %v568 = vrot.slane %v566, 4
        %v569 = vshll.u32 %v400, 16
        %v571 = vrot.slane %v569, 5
        %v572 = vor.u32 %v568, %v571
        %v573 = vrot.slane %v572, 4
        %v575 = vshll.u32 %v401, 16
        %v577 = vrot.slane %v575, 5
        %v578 = vsel %vm420, %v573, %v577
        %v579 = vshrl.u32 %v401, 16
        %v581 = vrot.slane %v579, 4
        %v582 = vor.u32 %v581, %v577
        %v583 = vrot.slane %v582, 4
        %v585 = vshll.u32 %v402, 16
        %v587 = vrot.slane %v585, 5
        %v588 = vsel %vm420, %v583, %v587
        %v590 = vshrl.u32 %v403, 16
        %v592 = vrot.slane %v590, 4
        %v593 = vshll.u32 %v403, 16
        %v595 = vrot.slane %v593, 5
        %v596 = vor.u32 %v592, %v595
        %v597 = vrot.slane %v596, 4
        %v599 = vshll.u32 %v404, 16
        %v601 = vrot.slane %v599, 5
        %v602 = vsel %vm420, %v597, %v601
        %v603 = vshrl.u32 %v404, 16
        %v605 = vrot.slane %v603, 4
        %v606 = vor.u32 %v605, %v601
        %v607 = vrot.slane %v606, 4
        %v609 = vshll.u32 %v405, 16
        %v611 = vrot.slane %v609, 5
        %v612 = vsel %vm420, %v607, %v611
        %v614 = vshrl.u32 %v406, 16
        %v616 = vrot.slane %v614, 4
        %v617 = vshll.u32 %v406, 16
        %v619 = vrot.slane %v617, 5
        %v620 = vor.u32 %v616, %v619
        %v621 = vrot.slane %v620, 4
        %v623 = vshll.u32 %v407, 16
        %v625 = vrot.slane %v623, 5
        %v626 = vsel %vm420, %v621, %v625
        %v627 = vshrl.u32 %v407, 16
        %v629 = vrot.slane %v627, 4
        %v630 = vor.u32 %v629, %v625
        %v631 = vrot.slane %v630, 4
        %v633 = vshll.u32 %v408, 16
        %v635 = vrot.slane %v633, 5
        %v636 = vsel %vm420, %v631, %v635
        %v638 = vshrl.u32 %v409, 16
        %v640 = vrot.slane %v638, 4
        %v641 = vshll.u32 %v409, 16
        %v643 = vrot.slane %v641, 5
        %v644 = vor.u32 %v640, %v643
        %v645 = vrot.slane %v644, 4
        %v647 = vshll.u32 %v410, 16
        %v649 = vrot.slane %v647, 5
        %v650 = vsel %vm420, %v645, %v649
        %v651 = vshrl.u32 %v410, 16
        %v653 = vrot.slane %v651, 4
        %v654 = vor.u32 %v653, %v649
        %v655 = vrot.slane %v654, 4
        %v657 = vshll.u32 %v411, 16
        %v659 = vrot.slane %v657, 5
        %v660 = vsel %vm420, %v655, %v659
        %vm691 = vcmask 1042432
        %vm692 = vcmask 1046532
        %vm693 = vmor %vm691, %vm692
        %v694 = vrot.slane %v382, 5
        %v695 = vrot.slane %v694, 4
        %v696 = vrot.slane %v383, 5
        %v697 = vsel %vm693, %v695, %v696
        %v698 = vrot.slane %v696, 4
        %v699 = vrot.slane %v384, 5
        %v700 = vsel %vm693, %v698, %v699
        %v701 = vrot.slane %v385, 5
        %v702 = vrot.slane %v701, 4
        %v703 = vrot.slane %v386, 5
        %v704 = vsel %vm693, %v702, %v703
        %v705 = vrot.slane %v703, 4
        %v706 = vrot.slane %v387, 5
        %v707 = vsel %vm693, %v705, %v706
        %v708 = vrot.slane %v388, 5
        %v709 = vrot.slane %v708, 4
        %v710 = vrot.slane %v389, 5
        %v711 = vsel %vm693, %v709, %v710
        %v712 = vrot.slane %v710, 4
        %v713 = vrot.slane %v390, 5
        %v714 = vsel %vm693, %v712, %v713
        %v715 = vrot.slane %v391, 5
        %v716 = vrot.slane %v715, 4
        %v717 = vrot.slane %v392, 5
        %v718 = vsel %vm693, %v716, %v717
        %v719 = vrot.slane %v717, 4
        %v720 = vrot.slane %v393, 5
        %v721 = vsel %vm693, %v719, %v720
        %v722 = vrot.slane %v394, 5
        %v723 = vrot.slane %v722, 4
        %v724 = vrot.slane %v395, 5
        %v725 = vsel %vm693, %v723, %v724
        %v726 = vrot.slane %v724, 4
        %v727 = vrot.slane %v396, 5
        %v728 = vsel %vm693, %v726, %v727
        %v729 = vrot.slane %v397, 5
        %v730 = vrot.slane %v729, 4
        %v731 = vrot.slane %v398, 5
        %v732 = vsel %vm693, %v730, %v731
        %v733 = vrot.slane %v731, 4
        %v734 = vrot.slane %v399, 5
        %v735 = vsel %vm693, %v733, %v734
        %v736 = vrot.slane %v400, 5
        %v737 = vrot.slane %v736, 4
        %v738 = vrot.slane %v401, 5
        %v739 = vsel %vm693, %v737, %v738
        %v740 = vrot.slane %v738, 4
        %v741 = vrot.slane %v402, 5
        %v742 = vsel %vm693, %v740, %v741
        %v743 = vrot.slane %v403, 5
        %v744 = vrot.slane %v743, 4
        %v745 = vrot.slane %v404, 5
        %v746 = vsel %vm693, %v744, %v745
        %v747 = vrot.slane %v745, 4
        %v748 = vrot.slane %v405, 5
        %v749 = vsel %vm693, %v747, %v748
        %v750 = vrot.slane %v406, 5
        %v751 = vrot.slane %v750, 4
        %v752 = vrot.slane %v407, 5
        %v753 = vsel %vm693, %v751, %v752
        %v754 = vrot.slane %v752, 4
        %v755 = vrot.slane %v408, 5
        %v756 = vsel %vm693, %v754, %v755
        %v757 = vrot.slane %v409, 5
        %v758 = vrot.slane %v757, 4
        %v759 = vrot.slane %v410, 5
        %v760 = vsel %vm693, %v758, %v759
        %v761 = vrot.slane %v759, 4
        %v762 = vrot.slane %v411, 5
        %v763 = vsel %vm693, %v761, %v762
        %v765 = vshrl.u32 %v412, 16
        %v767 = vrot.slane %v765, 4
        %v768 = vshll.u32 %v412, 16
        %v770 = vrot.slane %v768, 5
        %v771 = vor.u32 %v767, %v770
        %v772 = vrot.slane %v771, 4
        %v774 = vshll.u32 %v413, 16
        %v776 = vrot.slane %v774, 5
        %v777 = vsel %vm420, %v772, %v776
        %v778 = vshrl.u32 %v413, 16
        %v780 = vrot.slane %v778, 4
        %v781 = vor.u32 %v780, %v776
        %v782 = vrot.slane %v781, 4
        %v784 = vshll.u32 %v414, 16
        %v786 = vrot.slane %v784, 5
        %v787 = vsel %vm420, %v782, %v786
        %v791 = vrot.slane %v412, 5
        %v792 = vrot.slane %v791, 4
        %v793 = vrot.slane %v413, 5
        %v794 = vsel %vm693, %v792, %v793
        %v795 = vrot.slane %v793, 4
        %v796 = vrot.slane %v414, 5
        %v797 = vsel %vm693, %v795, %v796
        %v799 = vshrl.u32 %v415, 16
        %v801 = vrot.slane %v799, 4
        %v802 = vshll.u32 %v415, 16
        %v804 = vrot.slane %v802, 5
        %v805 = vor.u32 %v801, %v804
        %v806 = vrot.slane %v805, 4
        %v808 = vshll.u32 %v416, 16
        %v810 = vrot.slane %v808, 5
        %v811 = vsel %vm420, %v806, %v810
        %v812 = vshrl.u32 %v416, 16
        %v814 = vrot.slane %v812, 4
        %v815 = vor.u32 %v814, %v810
        %v816 = vrot.slane %v815, 4
        %v818 = vshll.u32 %v417, 16
        %v820 = vrot.slane %v818, 5
        %v821 = vsel %vm420, %v816, %v820
        %v825 = vrot.slane %v415, 5
        %v826 = vrot.slane %v825, 4
        %v827 = vrot.slane %v416, 5
        %v828 = vsel %vm693, %v826, %v827
        %v829 = vrot.slane %v827, 4
        %v830 = vrot.slane %v417, 5
        %v831 = vsel %vm693, %v829, %v830
        %v832 = vunpack.c.l.b16 %v382
        %v833 = vunpack.c.l.b16 %v383
        %v834 = vunpack.c.l.b16 %v385
        %v835 = vunpack.c.l.b16 %v386
        %v836 = vunpack.c.l.b16 %v388
        %v837 = vunpack.c.l.b16 %v389
        %v838 = vunpack.c.l.b16 %v391
        %v839 = vunpack.c.l.b16 %v392
        %v840 = vunpack.c.l.b16 %v394
        %v841 = vunpack.c.l.b16 %v395
        %v842 = vunpack.c.l.b16 %v397
        %v843 = vunpack.c.l.b16 %v398
        %v844 = vunpack.c.l.b16 %v400
        %v845 = vunpack.c.l.b16 %v401
        %v846 = vunpack.c.l.b16 %v403
        %v847 = vunpack.c.l.b16 %v404
        %v848 = vunpack.c.l.b16 %v406
        %v849 = vunpack.c.l.b16 %v407
        %v850 = vunpack.c.l.b16 %v409
        %v851 = vunpack.c.l.b16 %v410
        %v852 = vpack.c.b16 %v833, %v832
        %v853 = vpack.c.b16 %v835, %v834
        %v854 = vpack.c.b16 %v837, %v836
        %v855 = vpack.c.b16 %v839, %v838
        %v856 = vpack.c.b16 %v841, %v840
        %v857 = vpack.c.b16 %v843, %v842
        %v858 = vpack.c.b16 %v845, %v844
        %v859 = vpack.c.b16 %v847, %v846
        %v860 = vpack.c.b16 %v849, %v848
        %v861 = vpack.c.b16 %v851, %v850
        %v862 = vunpack.c.l.b16 %v434
        %v863 = vunpack.c.l.b16 %v444
        %v864 = vunpack.c.l.b16 %v458
        %v865 = vunpack.c.l.b16 %v468
        %v866 = vunpack.c.l.b16 %v482
        %v867 = vunpack.c.l.b16 %v492
        %v868 = vunpack.c.l.b16 %v506
        %v869 = vunpack.c.l.b16 %v516
        %v870 = vunpack.c.l.b16 %v530
        %v871 = vunpack.c.l.b16 %v540
        %v872 = vunpack.c.l.b16 %v554
        %v873 = vunpack.c.l.b16 %v564
        %v874 = vunpack.c.l.b16 %v578
        %v875 = vunpack.c.l.b16 %v588
        %v876 = vunpack.c.l.b16 %v602
        %v877 = vunpack.c.l.b16 %v612
        %v878 = vunpack.c.l.b16 %v626
        %v879 = vunpack.c.l.b16 %v636
        %v880 = vunpack.c.l.b16 %v650
        %v881 = vunpack.c.l.b16 %v660
        %v882 = vpack.c.b16 %v863, %v862
        %v883 = vpack.c.b16 %v865, %v864
        %v884 = vpack.c.b16 %v867, %v866
        %v885 = vpack.c.b16 %v869, %v868
        %v886 = vpack.c.b16 %v871, %v870
        %v887 = vpack.c.b16 %v873, %v872
        %v888 = vpack.c.b16 %v875, %v874
        %v889 = vpack.c.b16 %v877, %v876
        %v890 = vpack.c.b16 %v879, %v878
        %v891 = vpack.c.b16 %v881, %v880
        %892 = vrot.lane.b32.xlu0 %v882, 4
        %v893 = vpop.permute.xlu0 %892
        %894 = vrot.lane.b32.xlu0 %v883, 4
        %v895 = vpop.permute.xlu0 %894
        %896 = vrot.lane.b32.xlu0 %v884, 4
        %v897 = vpop.permute.xlu0 %896
        %898 = vrot.lane.b32.xlu0 %v885, 4
        %v899 = vpop.permute.xlu0 %898
        %900 = vrot.lane.b32.xlu0 %v886, 4
        %v901 = vpop.permute.xlu0 %900
        %902 = vrot.lane.b32.xlu0 %v887, 4
        %v903 = vpop.permute.xlu0 %902
        %904 = vrot.lane.b32.xlu0 %v888, 4
        %v905 = vpop.permute.xlu0 %904
        %906 = vrot.lane.b32.xlu0 %v889, 4
        %v907 = vpop.permute.xlu0 %906
        %908 = vrot.lane.b32.xlu0 %v890, 4
        %v909 = vpop.permute.xlu0 %908
        %910 = vrot.lane.b32.xlu0 %v891, 4
        %v911 = vpop.permute.xlu0 %910
        %v912 = vunpack.c.l.b16 %v697
        %v913 = vunpack.c.l.b16 %v700
        %v914 = vunpack.c.l.b16 %v704
        %v915 = vunpack.c.l.b16 %v707
        %v916 = vunpack.c.l.b16 %v711
        %v917 = vunpack.c.l.b16 %v714
        %v918 = vunpack.c.l.b16 %v718
        %v919 = vunpack.c.l.b16 %v721
        %v920 = vunpack.c.l.b16 %v725
        %v921 = vunpack.c.l.b16 %v728
        %v922 = vunpack.c.l.b16 %v732
        %v923 = vunpack.c.l.b16 %v735
        %v924 = vunpack.c.l.b16 %v739
        %v925 = vunpack.c.l.b16 %v742
        %v926 = vunpack.c.l.b16 %v746
        %v927 = vunpack.c.l.b16 %v749
        %v928 = vunpack.c.l.b16 %v753
        %v929 = vunpack.c.l.b16 %v756
        %v930 = vunpack.c.l.b16 %v760
        %v931 = vunpack.c.l.b16 %v763
        %v932 = vpack.c.b16 %v913, %v912
        %v933 = vpack.c.b16 %v915, %v914
        %v934 = vpack.c.b16 %v917, %v916
        %v935 = vpack.c.b16 %v919, %v918
        %v936 = vpack.c.b16 %v921, %v920
        %v937 = vpack.c.b16 %v923, %v922
        %v938 = vpack.c.b16 %v925, %v924
        %v939 = vpack.c.b16 %v927, %v926
        %v940 = vpack.c.b16 %v929, %v928
        %v941 = vpack.c.b16 %v931, %v930
        %942 = vrot.lane.b32.xlu0 %v932, 8
        %v943 = vpop.permute.xlu0 %942
        %944 = vrot.lane.b32.xlu0 %v933, 8
        %v945 = vpop.permute.xlu0 %944
        %946 = vrot.lane.b32.xlu0 %v934, 8
        %v947 = vpop.permute.xlu0 %946
        %948 = vrot.lane.b32.xlu0 %v935, 8
        %v949 = vpop.permute.xlu0 %948
        %950 = vrot.lane.b32.xlu0 %v936, 8
        %v951 = vpop.permute.xlu0 %950
        %952 = vrot.lane.b32.xlu0 %v937, 8
        %v953 = vpop.permute.xlu0 %952
        %954 = vrot.lane.b32.xlu0 %v938, 8
        %v955 = vpop.permute.xlu0 %954
        %956 = vrot.lane.b32.xlu0 %v939, 8
        %v957 = vpop.permute.xlu0 %956
        %958 = vrot.lane.b32.xlu0 %v940, 8
        %v959 = vpop.permute.xlu0 %958
        %960 = vrot.lane.b32.xlu0 %v941, 8
        %v961 = vpop.permute.xlu0 %960
        %v962 = vunpack.c.l.b16 %v412
        %v963 = vunpack.c.l.b16 %v413
        %v964 = vpack.c.b16 %v963, %v962
        %965 = vrot.lane.b32.xlu0 %v853, 12
        %v966 = vpop.permute.xlu0 %965
        %967 = vrot.lane.b32.xlu0 %v854, 12
        %v968 = vpop.permute.xlu0 %967
        %969 = vrot.lane.b32.xlu0 %v855, 12
        %v970 = vpop.permute.xlu0 %969
        %971 = vrot.lane.b32.xlu0 %v856, 12
        %v972 = vpop.permute.xlu0 %971
        %973 = vrot.lane.b32.xlu0 %v857, 12
        %v974 = vpop.permute.xlu0 %973
        %975 = vrot.lane.b32.xlu0 %v858, 12
        %v976 = vpop.permute.xlu0 %975
        %977 = vrot.lane.b32.xlu0 %v859, 12
        %v978 = vpop.permute.xlu0 %977
        %979 = vrot.lane.b32.xlu0 %v860, 12
        %v980 = vpop.permute.xlu0 %979
        %981 = vrot.lane.b32.xlu0 %v861, 12
        %v982 = vpop.permute.xlu0 %981
        %983 = vrot.lane.b32.xlu0 %v964, 12
        %v984 = vpop.permute.xlu0 %983
        %v985 = vunpack.c.l.b16 %v777
        %v986 = vunpack.c.l.b16 %v787
        %v987 = vpack.c.b16 %v986, %v985
        %988 = vrot.lane.b32.xlu0 %v883, 16
        %v989 = vpop.permute.xlu0 %988
        %990 = vrot.lane.b32.xlu0 %v884, 16
        %v991 = vpop.permute.xlu0 %990
        %992 = vrot.lane.b32.xlu0 %v885, 16
        %v993 = vpop.permute.xlu0 %992
        %994 = vrot.lane.b32.xlu0 %v886, 16
        %v995 = vpop.permute.xlu0 %994
        %996 = vrot.lane.b32.xlu0 %v887, 16
        %v997 = vpop.permute.xlu0 %996
        %998 = vrot.lane.b32.xlu0 %v888, 16
        %v999 = vpop.permute.xlu0 %998
        %1000 = vrot.lane.b32.xlu0 %v889, 16
        %v1001 = vpop.permute.xlu0 %1000
        %1002 = vrot.lane.b32.xlu0 %v890, 16
        %v1003 = vpop.permute.xlu0 %1002
        %1004 = vrot.lane.b32.xlu0 %v891, 16
        %v1005 = vpop.permute.xlu0 %1004
        %1006 = vrot.lane.b32.xlu0 %v987, 16
        %v1007 = vpop.permute.xlu0 %1006
        %v1008 = vunpack.c.l.b16 %v794
        %v1009 = vunpack.c.l.b16 %v797
        %v1010 = vpack.c.b16 %v1009, %v1008
        %1011 = vrot.lane.b32.xlu0 %v933, 20
        %v1012 = vpop.permute.xlu0 %1011
        %1013 = vrot.lane.b32.xlu0 %v934, 20
        %v1014 = vpop.permute.xlu0 %1013
        %1015 = vrot.lane.b32.xlu0 %v935, 20
        %v1016 = vpop.permute.xlu0 %1015
        %1017 = vrot.lane.b32.xlu0 %v936, 20
        %v1018 = vpop.permute.xlu0 %1017
        %1019 = vrot.lane.b32.xlu0 %v937, 20
        %v1020 = vpop.permute.xlu0 %1019
        %1021 = vrot.lane.b32.xlu0 %v938, 20
        %v1022 = vpop.permute.xlu0 %1021
        %1023 = vrot.lane.b32.xlu0 %v939, 20
        %v1024 = vpop.permute.xlu0 %1023
        %1025 = vrot.lane.b32.xlu0 %v940, 20
        %v1026 = vpop.permute.xlu0 %1025
        %1027 = vrot.lane.b32.xlu0 %v941, 20
        %v1028 = vpop.permute.xlu0 %1027
        %1029 = vrot.lane.b32.xlu0 %v1010, 20
        %v1030 = vpop.permute.xlu0 %1029
        %v1031 = vunpack.c.l.b16 %v415
        %v1032 = vunpack.c.l.b16 %v416
        %v1033 = vpack.c.b16 %v1032, %v1031
        %1034 = vrot.lane.b32.xlu0 %v854, 24
        %v1035 = vpop.permute.xlu0 %1034
        %1036 = vrot.lane.b32.xlu0 %v855, 24
        %v1037 = vpop.permute.xlu0 %1036
        %1038 = vrot.lane.b32.xlu0 %v856, 24
        %v1039 = vpop.permute.xlu0 %1038
        %1040 = vrot.lane.b32.xlu0 %v857, 24
        %v1041 = vpop.permute.xlu0 %1040
        %1042 = vrot.lane.b32.xlu0 %v858, 24
        %v1043 = vpop.permute.xlu0 %1042
        %1044 = vrot.lane.b32.xlu0 %v859, 24
        %v1045 = vpop.permute.xlu0 %1044
        %1046 = vrot.lane.b32.xlu0 %v860, 24
        %v1047 = vpop.permute.xlu0 %1046
        %1048 = vrot.lane.b32.xlu0 %v861, 24
        %v1049 = vpop.permute.xlu0 %1048
        %1050 = vrot.lane.b32.xlu0 %v964, 24
        %v1051 = vpop.permute.xlu0 %1050
        %1052 = vrot.lane.b32.xlu0 %v1033, 24
        %v1053 = vpop.permute.xlu0 %1052
        %v1054 = vunpack.c.l.b16 %v811
        %v1055 = vunpack.c.l.b16 %v821
        %v1056 = vpack.c.b16 %v1055, %v1054
        %1057 = vrot.lane.b32.xlu0 %v884, 28
        %v1058 = vpop.permute.xlu0 %1057
        %1059 = vrot.lane.b32.xlu0 %v885, 28
        %v1060 = vpop.permute.xlu0 %1059
        %1061 = vrot.lane.b32.xlu0 %v886, 28
        %v1062 = vpop.permute.xlu0 %1061
        %1063 = vrot.lane.b32.xlu0 %v887, 28
        %v1064 = vpop.permute.xlu0 %1063
        %1065 = vrot.lane.b32.xlu0 %v888, 28
        %v1066 = vpop.permute.xlu0 %1065
        %1067 = vrot.lane.b32.xlu0 %v889, 28
        %v1068 = vpop.permute.xlu0 %1067
        %1069 = vrot.lane.b32.xlu0 %v890, 28
        %v1070 = vpop.permute.xlu0 %1069
        %1071 = vrot.lane.b32.xlu0 %v891, 28
        %v1072 = vpop.permute.xlu0 %1071
        %1073 = vrot.lane.b32.xlu0 %v987, 28
        %v1074 = vpop.permute.xlu0 %1073
        %1075 = vrot.lane.b32.xlu0 %v1056, 28
        %v1076 = vpop.permute.xlu0 %1075
        %v1077 = vunpack.c.l.b16 %v828
        %v1078 = vunpack.c.l.b16 %v831
        %v1079 = vpack.c.b16 %v1078, %v1077
        %1080 = vrot.lane.b32.xlu0 %v934, 32
        %v1081 = vpop.permute.xlu0 %1080
        %1082 = vrot.lane.b32.xlu0 %v935, 32
        %v1083 = vpop.permute.xlu0 %1082
        %1084 = vrot.lane.b32.xlu0 %v936, 32
        %v1085 = vpop.permute.xlu0 %1084
        %1086 = vrot.lane.b32.xlu0 %v937, 32
        %v1087 = vpop.permute.xlu0 %1086
        %1088 = vrot.lane.b32.xlu0 %v938, 32
        %v1089 = vpop.permute.xlu0 %1088
        %1090 = vrot.lane.b32.xlu0 %v939, 32
        %v1091 = vpop.permute.xlu0 %1090
        %1092 = vrot.lane.b32.xlu0 %v940, 32
        %v1093 = vpop.permute.xlu0 %1092
        %1094 = vrot.lane.b32.xlu0 %v941, 32
        %v1095 = vpop.permute.xlu0 %1094
        %1096 = vrot.lane.b32.xlu0 %v1010, 32
        %v1097 = vpop.permute.xlu0 %1096
        %1098 = vrot.lane.b32.xlu0 %v1079, 32
        %v1099 = vpop.permute.xlu0 %1098
        %vm1100 = vcmask 31744
        %v1103 = vsel %vm1100, %v852, %v893
        %v1106 = vsel %vm1100, %v853, %v895
        %v1109 = vsel %vm1100, %v854, %v897
        %v1112 = vsel %vm1100, %v855, %v899
        %v1115 = vsel %vm1100, %v856, %v901
        %v1118 = vsel %vm1100, %v857, %v903
        %v1121 = vsel %vm1100, %v858, %v905
        %v1124 = vsel %vm1100, %v859, %v907
        %v1127 = vsel %vm1100, %v860, %v909
        %v1130 = vsel %vm1100, %v861, %v911
        %vm1131 = vcmask 64512
        %v1133 = vsel %vm1131, %v1103, %v943
        %v1135 = vsel %vm1131, %v1106, %v945
        %v1137 = vsel %vm1131, %v1109, %v947
        %v1139 = vsel %vm1131, %v1112, %v949
        %v1141 = vsel %vm1131, %v1115, %v951
        %v1143 = vsel %vm1131, %v1118, %v953
        %v1145 = vsel %vm1131, %v1121, %v955
        %v1147 = vsel %vm1131, %v1124, %v957
        %v1149 = vsel %vm1131, %v1127, %v959
        %v1151 = vsel %vm1131, %v1130, %v961
        %vm1152 = vcmask 97280
        %v1154 = vsel %vm1152, %v1133, %v966
        %v1156 = vsel %vm1152, %v1135, %v968
        %v1158 = vsel %vm1152, %v1137, %v970
        %v1160 = vsel %vm1152, %v1139, %v972
        %v1162 = vsel %vm1152, %v1141, %v974
        %v1164 = vsel %vm1152, %v1143, %v976
        %v1166 = vsel %vm1152, %v1145, %v978
        %v1168 = vsel %vm1152, %v1147, %v980
        %v1170 = vsel %vm1152, %v1149, %v982
        %v1172 = vsel %vm1152, %v1151, %v984
        %vm1173 = vcmask 130048
        %v1175 = vsel %vm1173, %v1154, %v989
        %v1177 = vsel %vm1173, %v1156, %v991
        %v1179 = vsel %vm1173, %v1158, %v993
        %v1181 = vsel %vm1173, %v1160, %v995
        %v1183 = vsel %vm1173, %v1162, %v997
        %v1185 = vsel %vm1173, %v1164, %v999
        %v1187 = vsel %vm1173, %v1166, %v1001
        %v1189 = vsel %vm1173, %v1168, %v1003
        %v1191 = vsel %vm1173, %v1170, %v1005
        %v1193 = vsel %vm1173, %v1172, %v1007
        %vm1194 = vcmask 162816
        %v1196 = vsel %vm1194, %v1175, %v1012
        %v1198 = vsel %vm1194, %v1177, %v1014
        %v1200 = vsel %vm1194, %v1179, %v1016
        %v1202 = vsel %vm1194, %v1181, %v1018
        %v1204 = vsel %vm1194, %v1183, %v1020
        %v1206 = vsel %vm1194, %v1185, %v1022
        %v1208 = vsel %vm1194, %v1187, %v1024
        %v1210 = vsel %vm1194, %v1189, %v1026
        %v1212 = vsel %vm1194, %v1191, %v1028
        %v1214 = vsel %vm1194, %v1193, %v1030
        %vm1215 = vcmask 195584
        %v1217 = vsel %vm1215, %v1196, %v1035
        %v1219 = vsel %vm1215, %v1198, %v1037
        %v1221 = vsel %vm1215, %v1200, %v1039
        %v1223 = vsel %vm1215, %v1202, %v1041
        %v1225 = vsel %vm1215, %v1204, %v1043
        %v1227 = vsel %vm1215, %v1206, %v1045
        %v1229 = vsel %vm1215, %v1208, %v1047
        %v1231 = vsel %vm1215, %v1210, %v1049
        %v1233 = vsel %vm1215, %v1212, %v1051
        %v1235 = vsel %vm1215, %v1214, %v1053
        %vm1236 = vcmask 228352
        %v1238 = vsel %vm1236, %v1217, %v1058
        %v1240 = vsel %vm1236, %v1219, %v1060
        %v1242 = vsel %vm1236, %v1221, %v1062
        %v1244 = vsel %vm1236, %v1223, %v1064
        %v1246 = vsel %vm1236, %v1225, %v1066
        %v1248 = vsel %vm1236, %v1227, %v1068
        %v1250 = vsel %vm1236, %v1229, %v1070
        %v1252 = vsel %vm1236, %v1231, %v1072
        %v1254 = vsel %vm1236, %v1233, %v1074
        %v1256 = vsel %vm1236, %v1235, %v1076
        %vm1257 = vcmask 261120
        %v1259 = vsel %vm1257, %v1238, %v1081
        %v1261 = vsel %vm1257, %v1240, %v1083
        %v1263 = vsel %vm1257, %v1242, %v1085
        %v1265 = vsel %vm1257, %v1244, %v1087
        %v1267 = vsel %vm1257, %v1246, %v1089
        %v1269 = vsel %vm1257, %v1248, %v1091
        %v1271 = vsel %vm1257, %v1250, %v1093
        %v1273 = vsel %vm1257, %v1252, %v1095
        %v1275 = vsel %vm1257, %v1254, %v1097
        %v1277 = vsel %vm1257, %v1256, %v1099
        %v1278 = vld [vmem:[%s3] sm:$0xf]
        %v1279 = vld [vmem:[%s3 + $0x4] sm:$0xf]
        %v1280 = vld [vmem:[%s3 + $0x8] sm:$0xf]
        %v1281 = vld [vmem:[%s3 + $0xc] sm:$0xf]
        %v1282 = vld [vmem:[%s3 + $0x10] sm:$0x3]
        %v1288 = vunpack.c.l.b16 %v1278
        %v1289 = vunpack.c.l.b16 %v1279
        %v1290 = vunpack.c.l.b16 %v1280
        %v1291 = vunpack.c.l.b16 %v1281
        %v1292 = vunpack.c.l.b16 %v1282
        %v1293 = vpack.c.b16 %v1289, %v1288
        %v1294 = vpack.c.b16 %v1291, %v1290
        %v1295 = vpack.c.b16 %v1292, %v1292
        %vm1298 = vcmask 293888
        %v1299 = vsel %vm1298, %v1259, 0
        %v1301 = vsel %vm1298, %v1261, 0
        %v1303 = vsel %vm1298, %v1263, 0
        %v1305 = vsel %vm1298, %v1265, 0
        %v1307 = vsel %vm1298, %v1267, 0
        %v1309 = vsel %vm1298, %v1269, 0
        %v1311 = vsel %vm1298, %v1271, 0
        %v1313 = vsel %vm1298, %v1273, 0
        %v1315 = vsel %vm1298, %v1275, 0
        %v1317 = vsel %vm1298, %v1277, 0
        %vm1319 = vcmask 1041408
        %v1321 = vsel %vm1319, %v1295, 0
        %1323 = vmatprep.subr.bf16.mxu0 0
        %1324 = vmatpush1.bf16.msra.mxu0 0
        %1325 = vmatprep.subr.bf16.mxu0 0
        %1326 = vmatpush1.bf16.msra.mxu0 0
        %1327 = vmatprep.subr.bf16.mxu0 0
        %1328 = vmatpush1.bf16.msra.mxu0 0
        %1329 = vmatprep.subr.bf16.mxu0 0
        %1330 = vmatpush1.bf16.msra.mxu0 0
        %1331 = vmatprep.subr.bf16.mxu0 0
        %1332 = vmatpush1.bf16.msra.mxu0 0
        %1333 = vmatprep.subr.bf16.mxu0 0
        %1334 = vmatpush1.bf16.msra.mxu0 %v1321
        %1335 = vmatprep.subr.bf16.mxu0 0
        %1336 = vmatpush1.bf16.msra.mxu0 %v1294
        %1337 = vmatprep.subr.bf16.mxu0 0
        %1338 = vmatpush1.bf16.msra.mxu0 %v1293
        %1339 = vmatprep.subr.bf16.mxu0 0
        %1340 = vmatpush2.bf16.msra.mxu0 0
        %1341 = vmatprep.subr.bf16.mxu0 0
        %1342 = vmatpush2.bf16.msra.mxu0 0
        %1343 = vmatprep.subr.bf16.mxu0 0
        %1344 = vmatpush2.bf16.msra.mxu0 0
        %1345 = vmatprep.subr.bf16.mxu0 0
        %1346 = vmatpush2.bf16.msra.mxu0 0
        %1347 = vmatprep.subr.bf16.mxu0 0
        %1348 = vmatpush2.bf16.msra.mxu0 0
        %1349 = vmatprep.subr.bf16.mxu0 0
        %1350 = vmatpush2.bf16.msra.mxu0 0
        %1351 = vmatprep.subr.bf16.mxu0 0
        %1352 = vmatpush2.bf16.msra.mxu0 0
        %1353 = vmatprep.subr.bf16.mxu0 0
        %1354 = vmatpush2.bf16.msra.mxu0 0
        %1355 = vmatprep.mubr.bf16.mxu0 0
        %1356 = vmatmul.mubr.bf16.gmra.mxu0 %v1299
        %v1357 = vpop.f32.mrf.mxu0
        %v1358 = vadd.f32 0.0, %v1357
        %v1359 = vpop.f32.mrf.mxu0
        %v1360 = vpop.f32.mrf.mxu0
        %v1361 = vadd.f32 0.0, %v1360
        %v1362 = vpop.f32.mrf.mxu0
        %1363 = vmatprep.mubr.bf16.mxu0 0
        %1364 = vmatmul.mubr.bf16.gmra.mxu0 %v1301
        %v1365 = vpop.f32.mrf.mxu0
        %v1366 = vadd.f32 0.0, %v1365
        %v1367 = vpop.f32.mrf.mxu0
        %v1368 = vpop.f32.mrf.mxu0
        %v1369 = vadd.f32 0.0, %v1368
        %v1370 = vpop.f32.mrf.mxu0
        %1371 = vmatprep.mubr.bf16.mxu0 0
        %1372 = vmatmul.mubr.bf16.gmra.mxu0 %v1303
        %v1373 = vpop.f32.mrf.mxu0
        %v1374 = vadd.f32 0.0, %v1373
        %v1375 = vpop.f32.mrf.mxu0
        %v1376 = vpop.f32.mrf.mxu0
        %v1377 = vadd.f32 0.0, %v1376
        %v1378 = vpop.f32.mrf.mxu0
        %1379 = vmatprep.mubr.bf16.mxu0 0
        %1380 = vmatmul.mubr.bf16.gmra.mxu0 %v1305
        %v1381 = vpop.f32.mrf.mxu0
        %v1382 = vadd.f32 0.0, %v1381
        %v1383 = vpop.f32.mrf.mxu0
        %v1384 = vpop.f32.mrf.mxu0
        %v1385 = vadd.f32 0.0, %v1384
        %v1386 = vpop.f32.mrf.mxu0
        %1387 = vmatprep.mubr.bf16.mxu0 0
        %1388 = vmatmul.mubr.bf16.gmra.mxu0 %v1307
        %v1389 = vpop.f32.mrf.mxu0
        %v1390 = vadd.f32 0.0, %v1389
        %v1391 = vpop.f32.mrf.mxu0
        %v1392 = vpop.f32.mrf.mxu0
        %v1393 = vadd.f32 0.0, %v1392
        %v1394 = vpop.f32.mrf.mxu0
        %1395 = vmatprep.mubr.bf16.mxu0 0
        %1396 = vmatmul.mubr.bf16.gmra.mxu0 %v1309
        %v1397 = vpop.f32.mrf.mxu0
        %v1398 = vadd.f32 0.0, %v1397
        %v1399 = vpop.f32.mrf.mxu0
        %v1400 = vpop.f32.mrf.mxu0
        %v1401 = vadd.f32 0.0, %v1400
        %v1402 = vpop.f32.mrf.mxu0
        %1403 = vmatprep.mubr.bf16.mxu0 0
        %1404 = vmatmul.mubr.bf16.gmra.mxu0 %v1311
        %v1405 = vpop.f32.mrf.mxu0
        %v1406 = vadd.f32 0.0, %v1405
        %v1407 = vpop.f32.mrf.mxu0
        %v1408 = vpop.f32.mrf.mxu0
        %v1409 = vadd.f32 0.0, %v1408
        %v1410 = vpop.f32.mrf.mxu0
        %1411 = vmatprep.mubr.bf16.mxu0 0
        %1412 = vmatmul.mubr.bf16.gmra.mxu0 %v1313
        %v1413 = vpop.f32.mrf.mxu0
        %v1414 = vadd.f32 0.0, %v1413
        %v1415 = vpop.f32.mrf.mxu0
        %v1416 = vpop.f32.mrf.mxu0
        %v1417 = vadd.f32 0.0, %v1416
        %v1418 = vpop.f32.mrf.mxu0
        %1419 = vmatprep.mubr.bf16.mxu0 0
        %1420 = vmatmul.mubr.bf16.gmra.mxu0 %v1315
        %v1421 = vpop.f32.mrf.mxu0
        %v1422 = vadd.f32 0.0, %v1421
        %v1423 = vpop.f32.mrf.mxu0
        %v1424 = vpop.f32.mrf.mxu0
        %v1425 = vadd.f32 0.0, %v1424
        %v1426 = vpop.f32.mrf.mxu0
        %1427 = vmatprep.mubr.bf16.mxu0 0
        %1428 = vmatmul.mubr.bf16.gmra.mxu0 %v1317
        %v1429 = vpop.f32.mrf.mxu0
        %v1430 = vadd.f32 0.0, %v1429
        %v1431 = vpop.f32.mrf.mxu0
        %v1432 = vpop.f32.mrf.mxu0
        %v1433 = vadd.f32 0.0, %v1432
        %v1434 = vpop.f32.mrf.mxu0
        %1435 = vdwg.mxu0
        %v1436 = vmax.f32 %v1358, 0.0
        %v1437 = vmax.f32 %v1361, 0.0
        %v1438 = vmax.f32 %v1366, 0.0
        %v1439 = vmax.f32 %v1369, 0.0
        %v1440 = vmax.f32 %v1374, 0.0
        %v1441 = vmax.f32 %v1377, 0.0
        %v1442 = vmax.f32 %v1382, 0.0
        %v1443 = vmax.f32 %v1385, 0.0
        %v1444 = vmax.f32 %v1390, 0.0
        %v1445 = vmax.f32 %v1393, 0.0
        %v1446 = vmax.f32 %v1398, 0.0
        %v1447 = vmax.f32 %v1401, 0.0
        %v1448 = vmax.f32 %v1406, 0.0
        %v1449 = vmax.f32 %v1409, 0.0
        %v1450 = vmax.f32 %v1414, 0.0
        %v1451 = vmax.f32 %v1417, 0.0
        %v1452 = vmax.f32 %v1422, 0.0
        %v1453 = vmax.f32 %v1425, 0.0
        %v1454 = vmax.f32 %v1430, 0.0
        %v1455 = vmax.f32 %v1433, 0.0
        %v1456 = vpack.c.bf16 %v1437, %v1436
        %v1457 = vpack.c.bf16 %v1439, %v1438
        %v1458 = vpack.c.bf16 %v1441, %v1440
        %v1459 = vpack.c.bf16 %v1443, %v1442
        %v1460 = vpack.c.bf16 %v1445, %v1444
        %v1461 = vpack.c.bf16 %v1447, %v1446
        %v1462 = vpack.c.bf16 %v1449, %v1448
        %v1463 = vpack.c.bf16 %v1451, %v1450
        %v1464 = vpack.c.bf16 %v1453, %v1452
        %v1465 = vpack.c.bf16 %v1455, %v1454
        %s1466 = smul.u32 %s378, 2
        %s1467 = smul.addr %s1466, 4
        %s1468 = scalar_lea.vmem %s353, %s1467
        %v1469 = vld [vmem:[%s1468] sm:$0xf]
        %v1470 = vld [vmem:[%s1468 + $0x4] sm:$0xf]
        %v1471 = vld [vmem:[%s1468 + $0x8] sm:$0xf]
        %v1472 = vld [vmem:[%s1468 + $0xc] sm:$0xf]
        %v1473 = vld [vmem:[%s1468 + $0x10] sm:$0xf]
        %v1474 = vld [vmem:[%s1468 + $0x14] sm:$0xf]
        %v1475 = vld [vmem:[%s1468 + $0x18] sm:$0xf]
        %v1476 = vld [vmem:[%s1468 + $0x1c] sm:$0xf]
        %v1477 = vld [vmem:[%s1468 + $0x20] sm:$0xf]
        %v1478 = vld [vmem:[%s1468 + $0x24] sm:$0xf]
        %v1479 = vld [vmem:[%s1468 + $0x28] sm:$0xf]
        %v1480 = vld [vmem:[%s1468 + $0x2c] sm:$0xf]
        %v1481 = vld [vmem:[%s1468 + $0x30] sm:$0xf]
        %v1482 = vld [vmem:[%s1468 + $0x34] sm:$0xf]
        %v1483 = vld [vmem:[%s1468 + $0x38] sm:$0xf]
        %v1484 = vld [vmem:[%s1468 + $0x3c] sm:$0xf]
        %v1485 = vld [vmem:[%s1468 + $0x40] sm:$0xf]
        %v1486 = vld [vmem:[%s1468 + $0x44] sm:$0xf]
        %v1487 = vld [vmem:[%s1468 + $0x48] sm:$0xf]
        %v1488 = vld [vmem:[%s1468 + $0x4c] sm:$0xf]
        %v1509 = vunpack.c.l.b16 %v1469
        %v1510 = vunpack.c.l.b16 %v1470
        %v1511 = vunpack.c.l.b16 %v1471
        %v1512 = vunpack.c.l.b16 %v1472
        %v1513 = vunpack.c.l.b16 %v1473
        %v1514 = vunpack.c.l.b16 %v1474
        %v1515 = vunpack.c.l.b16 %v1475
        %v1516 = vunpack.c.l.b16 %v1476
        %v1517 = vunpack.c.l.b16 %v1477
        %v1518 = vunpack.c.l.b16 %v1478
        %v1519 = vunpack.c.l.b16 %v1479
        %v1520 = vunpack.c.l.b16 %v1480
        %v1521 = vunpack.c.l.b16 %v1481
        %v1522 = vunpack.c.l.b16 %v1482
        %v1523 = vunpack.c.l.b16 %v1483
        %v1524 = vunpack.c.l.b16 %v1484
        %v1525 = vunpack.c.l.b16 %v1485
        %v1526 = vunpack.c.l.b16 %v1486
        %v1527 = vunpack.c.l.b16 %v1487
        %v1528 = vunpack.c.l.b16 %v1488
        %v1529 = vpack.c.b16 %v1510, %v1509
        %v1530 = vpack.c.b16 %v1512, %v1511
        %v1531 = vpack.c.b16 %v1514, %v1513
        %v1532 = vpack.c.b16 %v1516, %v1515
        %v1533 = vpack.c.b16 %v1518, %v1517
        %v1534 = vpack.c.b16 %v1520, %v1519
        %v1535 = vpack.c.b16 %v1522, %v1521
        %v1536 = vpack.c.b16 %v1524, %v1523
        %v1537 = vpack.c.b16 %v1526, %v1525
        %v1538 = vpack.c.b16 %v1528, %v1527
        %1539 = vrot.lane.b32.xlu0 %v1529, 32
        %v1540 = vpop.permute.xlu0 %1539
        %1541 = vrot.lane.b32.xlu0 %v1530, 32
        %v1542 = vpop.permute.xlu0 %1541
        %1543 = vrot.lane.b32.xlu0 %v1531, 32
        %v1544 = vpop.permute.xlu0 %1543
        %1545 = vrot.lane.b32.xlu0 %v1532, 32
        %v1546 = vpop.permute.xlu0 %1545
        %1547 = vrot.lane.b32.xlu0 %v1533, 32
        %v1548 = vpop.permute.xlu0 %1547
        %1549 = vrot.lane.b32.xlu0 %v1534, 32
        %v1550 = vpop.permute.xlu0 %1549
        %1551 = vrot.lane.b32.xlu0 %v1535, 32
        %v1552 = vpop.permute.xlu0 %1551
        %1553 = vrot.lane.b32.xlu0 %v1536, 32
        %v1554 = vpop.permute.xlu0 %1553
        %1555 = vrot.lane.b32.xlu0 %v1537, 32
        %v1556 = vpop.permute.xlu0 %1555
        %1557 = vrot.lane.b32.xlu0 %v1538, 32
        %v1558 = vpop.permute.xlu0 %1557
        %v1561 = vsel %vm1257, %v1456, %v1540
        %v1564 = vsel %vm1257, %v1457, %v1542
        %v1567 = vsel %vm1257, %v1458, %v1544
        %v1570 = vsel %vm1257, %v1459, %v1546
        %v1573 = vsel %vm1257, %v1460, %v1548
        %v1576 = vsel %vm1257, %v1461, %v1550
        %v1579 = vsel %vm1257, %v1462, %v1552
        %v1582 = vsel %vm1257, %v1463, %v1554
        %v1585 = vsel %vm1257, %v1464, %v1556
        %v1588 = vsel %vm1257, %v1465, %v1558
        %v1599 = vunpack.c.l.b16 %v1561
        %v1600 = vunpack.c.h.b16 %v1561
        %v1601 = vunpack.c.l.b16 %v1564
        %v1602 = vunpack.c.h.b16 %v1564
        %v1603 = vunpack.c.l.b16 %v1567
        %v1604 = vunpack.c.h.b16 %v1567
        %v1605 = vunpack.c.l.b16 %v1570
        %v1606 = vunpack.c.h.b16 %v1570
        %v1607 = vunpack.c.l.b16 %v1573
        %v1608 = vunpack.c.h.b16 %v1573
        %v1609 = vunpack.c.l.b16 %v1576
        %v1610 = vunpack.c.h.b16 %v1576
        %v1611 = vunpack.c.l.b16 %v1579
        %v1612 = vunpack.c.h.b16 %v1579
        %v1613 = vunpack.c.l.b16 %v1582
        %v1614 = vunpack.c.h.b16 %v1582
        %v1615 = vunpack.c.l.b16 %v1585
        %v1616 = vunpack.c.h.b16 %v1585
        %v1617 = vunpack.c.l.b16 %v1588
        %v1618 = vunpack.c.h.b16 %v1588
        %v1619 = vpack.c.b16 %v1599, %v1599
        %v1620 = vpack.c.b16 %v1600, %v1600
        %v1621 = vpack.c.b16 %v1601, %v1601
        %v1622 = vpack.c.b16 %v1602, %v1602
        %v1623 = vpack.c.b16 %v1603, %v1603
        %v1624 = vpack.c.b16 %v1604, %v1604
        %v1625 = vpack.c.b16 %v1605, %v1605
        %v1626 = vpack.c.b16 %v1606, %v1606
        %v1627 = vpack.c.b16 %v1607, %v1607
        %v1628 = vpack.c.b16 %v1608, %v1608
        %v1629 = vpack.c.b16 %v1609, %v1609
        %v1630 = vpack.c.b16 %v1610, %v1610
        %v1631 = vpack.c.b16 %v1611, %v1611
        %v1632 = vpack.c.b16 %v1612, %v1612
        %v1633 = vpack.c.b16 %v1613, %v1613
        %v1634 = vpack.c.b16 %v1614, %v1614
        %v1635 = vpack.c.b16 %v1615, %v1615
        %v1636 = vpack.c.b16 %v1616, %v1616
        %v1637 = vpack.c.b16 %v1617, %v1617
        %v1638 = vpack.c.b16 %v1618, %v1618
        %vm1639 = vsmask.f32 256
        %vm1640 = vsmask.f32 4368
        %vm1641 = vmor %vm1639, %vm1640
        %v1643 = vshrl.u32 %v1619, 16
        %v1645 = vrot.slane %v1643, 7
        %v1646 = vshll.u32 %v1619, 16
        %v1648 = vor.u32 %v1645, %v1646
        %v1649 = vrot.slane %v1645, 4
        %v1651 = vshrl.u32 %v1620, 16
        %v1653 = vrot.slane %v1651, 7
        %v1654 = vshll.u32 %v1620, 16
        %v1656 = vor.u32 %v1653, %v1654
        %v1657 = vsel %vm1641, %v1649, %v1656
        %v1658 = vrot.slane %v1653, 4
        %v1660 = vshrl.u32 %v1621, 16
        %v1662 = vrot.slane %v1660, 7
        %v1663 = vshll.u32 %v1621, 16
        %v1665 = vor.u32 %v1662, %v1663
        %v1666 = vrot.slane %v1662, 4
        %v1668 = vshrl.u32 %v1622, 16
        %v1670 = vrot.slane %v1668, 7
        %v1671 = vshll.u32 %v1622, 16
        %v1673 = vor.u32 %v1670, %v1671
        %v1674 = vsel %vm1641, %v1666, %v1673
        %v1675 = vrot.slane %v1670, 4
        %v1677 = vshrl.u32 %v1623, 16
        %v1679 = vrot.slane %v1677, 7
        %v1680 = vshll.u32 %v1623, 16
        %v1682 = vor.u32 %v1679, %v1680
        %v1683 = vrot.slane %v1679, 4
        %v1685 = vshrl.u32 %v1624, 16
        %v1687 = vrot.slane %v1685, 7
        %v1688 = vshll.u32 %v1624, 16
        %v1690 = vor.u32 %v1687, %v1688
        %v1691 = vsel %vm1641, %v1683, %v1690
        %v1692 = vrot.slane %v1687, 4
        %v1694 = vshrl.u32 %v1625, 16
        %v1696 = vrot.slane %v1694, 7
        %v1697 = vshll.u32 %v1625, 16
        %v1699 = vor.u32 %v1696, %v1697
        %v1700 = vrot.slane %v1696, 4
        %v1702 = vshrl.u32 %v1626, 16
        %v1704 = vrot.slane %v1702, 7
        %v1705 = vshll.u32 %v1626, 16
        %v1707 = vor.u32 %v1704, %v1705
        %v1708 = vsel %vm1641, %v1700, %v1707
        %v1709 = vrot.slane %v1704, 4
        %v1711 = vshrl.u32 %v1627, 16
        %v1713 = vrot.slane %v1711, 7
        %v1714 = vshll.u32 %v1627, 16
        %v1716 = vor.u32 %v1713, %v1714
        %v1717 = vrot.slane %v1713, 4
        %v1719 = vshrl.u32 %v1628, 16
        %v1721 = vrot.slane %v1719, 7
        %v1722 = vshll.u32 %v1628, 16
        %v1724 = vor.u32 %v1721, %v1722
        %v1725 = vsel %vm1641, %v1717, %v1724
        %v1726 = vrot.slane %v1721, 4
        %v1728 = vshrl.u32 %v1629, 16
        %v1730 = vrot.slane %v1728, 7
        %v1731 = vshll.u32 %v1629, 16
        %v1733 = vor.u32 %v1730, %v1731
        %v1734 = vrot.slane %v1730, 4
        %v1736 = vshrl.u32 %v1630, 16
        %v1738 = vrot.slane %v1736, 7
        %v1739 = vshll.u32 %v1630, 16
        %v1741 = vor.u32 %v1738, %v1739
        %v1742 = vsel %vm1641, %v1734, %v1741
        %v1743 = vrot.slane %v1738, 4
        %v1745 = vshrl.u32 %v1631, 16
        %v1747 = vrot.slane %v1745, 7
        %v1748 = vshll.u32 %v1631, 16
        %v1750 = vor.u32 %v1747, %v1748
        %v1751 = vrot.slane %v1747, 4
        %v1753 = vshrl.u32 %v1632, 16
        %v1755 = vrot.slane %v1753, 7
        %v1756 = vshll.u32 %v1632, 16
        %v1758 = vor.u32 %v1755, %v1756
        %v1759 = vsel %vm1641, %v1751, %v1758
        %v1760 = vrot.slane %v1755, 4
        %v1762 = vshrl.u32 %v1633, 16
        %v1764 = vrot.slane %v1762, 7
        %v1765 = vshll.u32 %v1633, 16
        %v1767 = vor.u32 %v1764, %v1765
        %v1768 = vrot.slane %v1764, 4
        %v1770 = vshrl.u32 %v1634, 16
        %v1772 = vrot.slane %v1770, 7
        %v1773 = vshll.u32 %v1634, 16
        %v1775 = vor.u32 %v1772, %v1773
        %v1776 = vsel %vm1641, %v1768, %v1775
        %v1777 = vrot.slane %v1772, 4
        %v1779 = vshrl.u32 %v1635, 16
        %v1781 = vrot.slane %v1779, 7
        %v1782 = vshll.u32 %v1635, 16
        %v1784 = vor.u32 %v1781, %v1782
        %v1785 = vrot.slane %v1781, 4
        %v1787 = vshrl.u32 %v1636, 16
        %v1789 = vrot.slane %v1787, 7
        %v1790 = vshll.u32 %v1636, 16
        %v1792 = vor.u32 %v1789, %v1790
        %v1793 = vsel %vm1641, %v1785, %v1792
        %v1794 = vrot.slane %v1789, 4
        %v1796 = vshrl.u32 %v1637, 16
        %v1798 = vrot.slane %v1796, 7
        %v1799 = vshll.u32 %v1637, 16
        %v1801 = vor.u32 %v1798, %v1799
        %v1802 = vrot.slane %v1798, 4
        %v1804 = vshrl.u32 %v1638, 16
        %v1806 = vrot.slane %v1804, 7
        %v1807 = vshll.u32 %v1638, 16
        %v1809 = vor.u32 %v1806, %v1807
        %v1810 = vsel %vm1641, %v1802, %v1809
        %v1811 = vrot.slane %v1806, 4
        %vm1842 = vcmask 519168
        %vm1843 = vsmask.f32 7938
        %vm1844 = vmand %vm1842, %vm1843
        %v1845 = vld [vmem:[#allocation2] sm:$0xf]
        %v1846 = vsel %vm1844, %v1648, %v1845
        %1847 = vst [vmem:[#allocation2] sm:$0xf] %v1846
        %vm1848 = vcmask 519168
        %1849 = vst.msk [vmem:[#allocation2 + $0x4] sm:$0xf] %vm1848, %v1657
        %vm1850 = vcmask 516096
        %vm1851 = vmand %vm1850, %vm1639
        %v1852 = vld [vmem:[#allocation2 + $0x8] sm:$0x1]
        %v1853 = vsel %vm1851, %v1658, %v1852
        %1854 = vst [vmem:[#allocation2 + $0x8] sm:$0x1] %v1853
        %v1855 = vld [vmem:[#allocation2 + $0xc] sm:$0xf]
        %v1856 = vsel %vm1844, %v1665, %v1855
        %1857 = vst [vmem:[#allocation2 + $0xc] sm:$0xf] %v1856
        %1858 = vst.msk [vmem:[#allocation2 + $0x10] sm:$0xf] %vm1848, %v1674
        %v1859 = vld [vmem:[#allocation2 + $0x14] sm:$0x1]
        %v1860 = vsel %vm1851, %v1675, %v1859
        %1861 = vst [vmem:[#allocation2 + $0x14] sm:$0x1] %v1860
        %v1862 = vld [vmem:[#allocation2 + $0x18] sm:$0xf]
        %v1863 = vsel %vm1844, %v1682, %v1862
        %1864 = vst [vmem:[#allocation2 + $0x18] sm:$0xf] %v1863
        %1865 = vst.msk [vmem:[#allocation2 + $0x1c] sm:$0xf] %vm1848, %v1691
        %v1866 = vld [vmem:[#allocation2 + $0x20] sm:$0x1]
        %v1867 = vsel %vm1851, %v1692, %v1866
        %1868 = vst [vmem:[#allocation2 + $0x20] sm:$0x1] %v1867
        %v1869 = vld [vmem:[#allocation2 + $0x24] sm:$0xf]
        %v1870 = vsel %vm1844, %v1699, %v1869
        %1871 = vst [vmem:[#allocation2 + $0x24] sm:$0xf] %v1870
        %1872 = vst.msk [vmem:[#allocation2 + $0x28] sm:$0xf] %vm1848, %v1708
        %v1873 = vld [vmem:[#allocation2 + $0x2c] sm:$0x1]
        %v1874 = vsel %vm1851, %v1709, %v1873
        %1875 = vst [vmem:[#allocation2 + $0x2c] sm:$0x1] %v1874
        %v1876 = vld [vmem:[#allocation2 + $0x30] sm:$0xf]
        %v1877 = vsel %vm1844, %v1716, %v1876
        %1878 = vst [vmem:[#allocation2 + $0x30] sm:$0xf] %v1877
        %1879 = vst.msk [vmem:[#allocation2 + $0x34] sm:$0xf] %vm1848, %v1725
        %v1880 = vld [vmem:[#allocation2 + $0x38] sm:$0x1]
        %v1881 = vsel %vm1851, %v1726, %v1880
        %1882 = vst [vmem:[#allocation2 + $0x38] sm:$0x1] %v1881
        %v1883 = vld [vmem:[#allocation2 + $0x3c] sm:$0xf]
        %v1884 = vsel %vm1844, %v1733, %v1883
        %1885 = vst [vmem:[#allocation2 + $0x3c] sm:$0xf] %v1884
        %1886 = vst.msk [vmem:[#allocation2 + $0x40] sm:$0xf] %vm1848, %v1742
        %v1887 = vld [vmem:[#allocation2 + $0x44] sm:$0x1]
        %v1888 = vsel %vm1851, %v1743, %v1887
        %1889 = vst [vmem:[#allocation2 + $0x44] sm:$0x1] %v1888
        %v1890 = vld [vmem:[#allocation2 + $0x48] sm:$0xf]
        %v1891 = vsel %vm1844, %v1750, %v1890
        %1892 = vst [vmem:[#allocation2 + $0x48] sm:$0xf] %v1891
        %1893 = vst.msk [vmem:[#allocation2 + $0x4c] sm:$0xf] %vm1848, %v1759
        %v1894 = vld [vmem:[#allocation2 + $0x50] sm:$0x1]
        %v1895 = vsel %vm1851, %v1760, %v1894
        %1896 = vst [vmem:[#allocation2 + $0x50] sm:$0x1] %v1895
        %v1897 = vld [vmem:[#allocation2 + $0x54] sm:$0xf]
        %v1898 = vsel %vm1844, %v1767, %v1897
        %1899 = vst [vmem:[#allocation2 + $0x54] sm:$0xf] %v1898
        %1900 = vst.msk [vmem:[#allocation2 + $0x58] sm:$0xf] %vm1848, %v1776
        %v1901 = vld [vmem:[#allocation2 + $0x5c] sm:$0x1]
        %v1902 = vsel %vm1851, %v1777, %v1901
        %1903 = vst [vmem:[#allocation2 + $0x5c] sm:$0x1] %v1902
        %v1904 = vld [vmem:[#allocation2 + $0x60] sm:$0xf]
        %v1905 = vsel %vm1844, %v1784, %v1904
        %1906 = vst [vmem:[#allocation2 + $0x60] sm:$0xf] %v1905
        %1907 = vst.msk [vmem:[#allocation2 + $0x64] sm:$0xf] %vm1848, %v1793
        %v1908 = vld [vmem:[#allocation2 + $0x68] sm:$0x1]
        %v1909 = vsel %vm1851, %v1794, %v1908
        %1910 = vst [vmem:[#allocation2 + $0x68] sm:$0x1] %v1909
        %v1911 = vld [vmem:[#allocation2 + $0x6c] sm:$0xf]
        %v1912 = vsel %vm1844, %v1801, %v1911
        %1913 = vst [vmem:[#allocation2 + $0x6c] sm:$0xf] %v1912
        %1914 = vst.msk [vmem:[#allocation2 + $0x70] sm:$0xf] %vm1848, %v1810
        %v1915 = vld [vmem:[#allocation2 + $0x74] sm:$0x1]
        %v1916 = vsel %vm1851, %v1811, %v1915
        %1917 = vst [vmem:[#allocation2 + $0x74] sm:$0x1] %v1916
        %v1918 = vld [vmem:[#allocation2] sm:$0x1]
        %v1919 = vsel %vm1851, 0, %v1918
        %1920 = vst [vmem:[#allocation2] sm:$0x1] %v1919
        %v1921 = vld [vmem:[#allocation2 + $0xc] sm:$0x1]
        %v1922 = vsel %vm1851, 0, %v1921
        %1923 = vst [vmem:[#allocation2 + $0xc] sm:$0x1] %v1922
        %v1924 = vld [vmem:[#allocation2 + $0x18] sm:$0x1]
        %v1925 = vsel %vm1851, 0, %v1924
        %1926 = vst [vmem:[#allocation2 + $0x18] sm:$0x1] %v1925
        %v1927 = vld [vmem:[#allocation2 + $0x24] sm:$0x1]
        %v1928 = vsel %vm1851, 0, %v1927
        %1929 = vst [vmem:[#allocation2 + $0x24] sm:$0x1] %v1928
        %v1930 = vld [vmem:[#allocation2 + $0x30] sm:$0x1]
        %v1931 = vsel %vm1851, 0, %v1930
        %1932 = vst [vmem:[#allocation2 + $0x30] sm:$0x1] %v1931
        %v1933 = vld [vmem:[#allocation2 + $0x3c] sm:$0x1]
        %v1934 = vsel %vm1851, 0, %v1933
        %1935 = vst [vmem:[#allocation2 + $0x3c] sm:$0x1] %v1934
        %v1936 = vld [vmem:[#allocation2 + $0x48] sm:$0x1]
        %v1937 = vsel %vm1851, 0, %v1936
        %1938 = vst [vmem:[#allocation2 + $0x48] sm:$0x1] %v1937
        %v1939 = vld [vmem:[#allocation2 + $0x54] sm:$0x1]
        %v1940 = vsel %vm1851, 0, %v1939
        %1941 = vst [vmem:[#allocation2 + $0x54] sm:$0x1] %v1940
        %v1942 = vld [vmem:[#allocation2 + $0x60] sm:$0x1]
        %v1943 = vsel %vm1851, 0, %v1942
        %1944 = vst [vmem:[#allocation2 + $0x60] sm:$0x1] %v1943
        %v1945 = vld [vmem:[#allocation2 + $0x6c] sm:$0x1]
        %v1946 = vsel %vm1851, 0, %v1945
        %1947 = vst [vmem:[#allocation2 + $0x6c] sm:$0x1] %v1946
        %vm1948 = vmand %vm1850, %vm1843
        %v1949 = vld [vmem:[#allocation2 + $0x8] sm:$0x1]
        %v1950 = vsel %vm1948, 0, %v1949
        %1951 = vst [vmem:[#allocation2 + $0x8] sm:$0x1] %v1950
        %v1952 = vld [vmem:[#allocation2 + $0x14] sm:$0x1]
        %v1953 = vsel %vm1948, 0, %v1952
        %1954 = vst [vmem:[#allocation2 + $0x14] sm:$0x1] %v1953
        %v1955 = vld [vmem:[#allocation2 + $0x20] sm:$0x1]
        %v1956 = vsel %vm1948, 0, %v1955
        %1957 = vst [vmem:[#allocation2 + $0x20] sm:$0x1] %v1956
        %v1958 = vld [vmem:[#allocation2 + $0x2c] sm:$0x1]
        %v1959 = vsel %vm1948, 0, %v1958
        %1960 = vst [vmem:[#allocation2 + $0x2c] sm:$0x1] %v1959
        %v1961 = vld [vmem:[#allocation2 + $0x38] sm:$0x1]
        %v1962 = vsel %vm1948, 0, %v1961
        %1963 = vst [vmem:[#allocation2 + $0x38] sm:$0x1] %v1962
        %v1964 = vld [vmem:[#allocation2 + $0x44] sm:$0x1]
        %v1965 = vsel %vm1948, 0, %v1964
        %1966 = vst [vmem:[#allocation2 + $0x44] sm:$0x1] %v1965
        %v1967 = vld [vmem:[#allocation2 + $0x50] sm:$0x1]
        %v1968 = vsel %vm1948, 0, %v1967
        %1969 = vst [vmem:[#allocation2 + $0x50] sm:$0x1] %v1968
        %v1970 = vld [vmem:[#allocation2 + $0x5c] sm:$0x1]
        %v1971 = vsel %vm1948, 0, %v1970
        %1972 = vst [vmem:[#allocation2 + $0x5c] sm:$0x1] %v1971
        %v1973 = vld [vmem:[#allocation2 + $0x68] sm:$0x1]
        %v1974 = vsel %vm1948, 0, %v1973
        %1975 = vst [vmem:[#allocation2 + $0x68] sm:$0x1] %v1974
        %v1976 = vld [vmem:[#allocation2 + $0x74] sm:$0x1]
        %v1977 = vsel %vm1948, 0, %v1976
        %1978 = vst [vmem:[#allocation2 + $0x74] sm:$0x1] %v1977
        %p1979 = scmp.eq.s32.totalorder %s27, 0
        // Predicated region
        $region45: #{recurrent_conv_layer.1} parent=43 // pred_check
          %p1980 = pneg %p1979
        $region46: #{recurrent_conv_layer.1} parent=43 // pred_check_branch
          %1982 = sbr.rel (%p1980) target = $region48
        $region47: #{recurrent_conv_layer.1} parent=43 // pred_region
          %1983 = vst.msk [vmem:[#allocation2] sm:$0xf] %vm1848, 0
          %1984 = vst.msk [vmem:[#allocation2 + $0x4] sm:$0xf] %vm1848, 0
          %vm1985 = vcmask 516096
          %1986 = vst.msk [vmem:[#allocation2 + $0x8] sm:$0x1] %vm1985, 0
        $region48: #{recurrent_conv_layer.1} parent=43 // pred_fallthru
          _
        %p1987 = scmp.eq.s32.totalorder %s27, 1
        // Predicated region
        $region49: #{recurrent_conv_layer.1} parent=43 // pred_check
          %p1988 = pneg %p1987
        $region50: #{recurrent_conv_layer.1} parent=43 // pred_check_branch
          %1990 = sbr.rel (%p1988) target = $region52
        $region51: #{recurrent_conv_layer.1} parent=43 // pred_region
          %s1991 = scalar_lea.vmem [#allocation2], 108
          %1992 = vst.msk [vmem:[%s1991] sm:$0xf] %vm1848, 0
          %1993 = vst.msk [vmem:[%s1991 + $0x4] sm:$0xf] %vm1848, 0
          %vm1994 = vcmask 516096
          %1995 = vst.msk [vmem:[%s1991 + $0x8] sm:$0x1] %vm1994, 0
        $region52: #{recurrent_conv_layer.1} parent=43 // pred_fallthru
          _
        %v1996 = vld [vmem:[#allocation2] sm:$0xf]
        %v1997 = vld [vmem:[#allocation2 + $0x4] sm:$0xf]
        %v1998 = vld [vmem:[#allocation2 + $0xc] sm:$0xf]
        %v1999 = vld [vmem:[#allocation2 + $0x10] sm:$0xf]
        %v2000 = vld [vmem:[#allocation2 + $0x18] sm:$0xf]
        %v2001 = vld [vmem:[#allocation2 + $0x1c] sm:$0xf]
        %v2002 = vld [vmem:[#allocation2 + $0x24] sm:$0xf]
        %v2003 = vld [vmem:[#allocation2 + $0x28] sm:$0xf]
        %v2004 = vld [vmem:[#allocation2 + $0x30] sm:$0xf]
        %v2005 = vld [vmem:[#allocation2 + $0x34] sm:$0xf]
        %v2006 = vld [vmem:[#allocation2 + $0x3c] sm:$0xf]
        %v2007 = vld [vmem:[#allocation2 + $0x40] sm:$0xf]
        %v2008 = vld [vmem:[#allocation2 + $0x48] sm:$0xf]
        %v2009 = vld [vmem:[#allocation2 + $0x4c] sm:$0xf]
        %v2010 = vld [vmem:[#allocation2 + $0x54] sm:$0xf]
        %v2011 = vld [vmem:[#allocation2 + $0x58] sm:$0xf]
        %v2012 = vld [vmem:[#allocation2 + $0x8] sm:$0x1]
        %v2013 = vld [vmem:[#allocation2 + $0x14] sm:$0x1]
        %v2014 = vld [vmem:[#allocation2 + $0x20] sm:$0x1]
        %v2015 = vld [vmem:[#allocation2 + $0x2c] sm:$0x1]
        %v2016 = vld [vmem:[#allocation2 + $0x38] sm:$0x1]
        %v2017 = vld [vmem:[#allocation2 + $0x44] sm:$0x1]
        %v2018 = vld [vmem:[#allocation2 + $0x50] sm:$0x1]
        %v2019 = vld [vmem:[#allocation2 + $0x5c] sm:$0x1]
        %v2021 = vshrl.u32 %v1996, 16
        %v2023 = vrot.slane %v2021, 4
        %v2024 = vshll.u32 %v1996, 16
        %v2026 = vrot.slane %v2024, 5
        %v2027 = vor.u32 %v2023, %v2026
        %v2028 = vrot.slane %v2027, 4
        %v2030 = vshll.u32 %v1997, 16
        %v2032 = vrot.slane %v2030, 5
        %v2033 = vsel %vm420, %v2028, %v2032
        %v2034 = vshrl.u32 %v1997, 16
        %v2036 = vrot.slane %v2034, 4
        %v2037 = vor.u32 %v2036, %v2032
        %v2038 = vrot.slane %v2037, 4
        %v2040 = vshll.u32 %v2012, 16
        %v2042 = vrot.slane %v2040, 5
        %v2043 = vsel %vm420, %v2038, %v2042
        %v2045 = vshrl.u32 %v1998, 16
        %v2047 = vrot.slane %v2045, 4
        %v2048 = vshll.u32 %v1998, 16
        %v2050 = vrot.slane %v2048, 5
        %v2051 = vor.u32 %v2047, %v2050
        %v2052 = vrot.slane %v2051, 4
        %v2054 = vshll.u32 %v1999, 16
        %v2056 = vrot.slane %v2054, 5
        %v2057 = vsel %vm420, %v2052, %v2056
        %v2058 = vshrl.u32 %v1999, 16
        %v2060 = vrot.slane %v2058, 4
        %v2061 = vor.u32 %v2060, %v2056
        %v2062 = vrot.slane %v2061, 4
        %v2064 = vshll.u32 %v2013, 16
        %v2066 = vrot.slane %v2064, 5
        %v2067 = vsel %vm420, %v2062, %v2066
        %v2069 = vshrl.u32 %v2000, 16
        %v2071 = vrot.slane %v2069, 4
        %v2072 = vshll.u32 %v2000, 16
        %v2074 = vrot.slane %v2072, 5
        %v2075 = vor.u32 %v2071, %v2074
        %v2076 = vrot.slane %v2075, 4
        %v2078 = vshll.u32 %v2001, 16
        %v2080 = vrot.slane %v2078, 5
        %v2081 = vsel %vm420, %v2076, %v2080
        %v2082 = vshrl.u32 %v2001, 16
        %v2084 = vrot.slane %v2082, 4
        %v2085 = vor.u32 %v2084, %v2080
        %v2086 = vrot.slane %v2085, 4
        %v2088 = vshll.u32 %v2014, 16
        %v2090 = vrot.slane %v2088, 5
        %v2091 = vsel %vm420, %v2086, %v2090
        %v2093 = vshrl.u32 %v2002, 16
        %v2095 = vrot.slane %v2093, 4
        %v2096 = vshll.u32 %v2002, 16
        %v2098 = vrot.slane %v2096, 5
        %v2099 = vor.u32 %v2095, %v2098
        %v2100 = vrot.slane %v2099, 4
        %v2102 = vshll.u32 %v2003, 16
        %v2104 = vrot.slane %v2102, 5
        %v2105 = vsel %vm420, %v2100, %v2104
        %v2106 = vshrl.u32 %v2003, 16
        %v2108 = vrot.slane %v2106, 4
        %v2109 = vor.u32 %v2108, %v2104
        %v2110 = vrot.slane %v2109, 4
        %v2112 = vshll.u32 %v2015, 16
        %v2114 = vrot.slane %v2112, 5
        %v2115 = vsel %vm420, %v2110, %v2114
        %v2117 = vshrl.u32 %v2004, 16
        %v2119 = vrot.slane %v2117, 4
        %v2120 = vshll.u32 %v2004, 16
        %v2122 = vrot.slane %v2120, 5
        %v2123 = vor.u32 %v2119, %v2122
        %v2124 = vrot.slane %v2123, 4
        %v2126 = vshll.u32 %v2005, 16
        %v2128 = vrot.slane %v2126, 5
        %v2129 = vsel %vm420, %v2124, %v2128
        %v2130 = vshrl.u32 %v2005, 16
        %v2132 = vrot.slane %v2130, 4
        %v2133 = vor.u32 %v2132, %v2128
        %v2134 = vrot.slane %v2133, 4
        %v2136 = vshll.u32 %v2016, 16
        %v2138 = vrot.slane %v2136, 5
        %v2139 = vsel %vm420, %v2134, %v2138
        %v2141 = vshrl.u32 %v2006, 16
        %v2143 = vrot.slane %v2141, 4
        %v2144 = vshll.u32 %v2006, 16
        %v2146 = vrot.slane %v2144, 5
        %v2147 = vor.u32 %v2143, %v2146
        %v2148 = vrot.slane %v2147, 4
        %v2150 = vshll.u32 %v2007, 16
        %v2152 = vrot.slane %v2150, 5
        %v2153 = vsel %vm420, %v2148, %v2152
        %v2154 = vshrl.u32 %v2007, 16
        %v2156 = vrot.slane %v2154, 4
        %v2157 = vor.u32 %v2156, %v2152
        %v2158 = vrot.slane %v2157, 4
        %v2160 = vshll.u32 %v2017, 16
        %v2162 = vrot.slane %v2160, 5
        %v2163 = vsel %vm420, %v2158, %v2162
        %v2165 = vshrl.u32 %v2008, 16
        %v2167 = vrot.slane %v2165, 4
        %v2168 = vshll.u32 %v2008, 16
        %v2170 = vrot.slane %v2168, 5
        %v2171 = vor.u32 %v2167, %v2170
        %v2172 = vrot.slane %v2171, 4
        %v2174 = vshll.u32 %v2009, 16
        %v2176 = vrot.slane %v2174, 5
        %v2177 = vsel %vm420, %v2172, %v2176
        %v2178 = vshrl.u32 %v2009, 16
        %v2180 = vrot.slane %v2178, 4
        %v2181 = vor.u32 %v2180, %v2176
        %v2182 = vrot.slane %v2181, 4
        %v2184 = vshll.u32 %v2018, 16
        %v2186 = vrot.slane %v2184, 5
        %v2187 = vsel %vm420, %v2182, %v2186
        %v2189 = vshrl.u32 %v2010, 16
        %v2191 = vrot.slane %v2189, 4
        %v2192 = vshll.u32 %v2010, 16
        %v2194 = vrot.slane %v2192, 5
        %v2195 = vor.u32 %v2191, %v2194
        %v2196 = vrot.slane %v2195, 4
        %v2198 = vshll.u32 %v2011, 16
        %v2200 = vrot.slane %v2198, 5
        %v2201 = vsel %vm420, %v2196, %v2200
        %v2202 = vshrl.u32 %v2011, 16
        %v2204 = vrot.slane %v2202, 4
        %v2205 = vor.u32 %v2204, %v2200
        %v2206 = vrot.slane %v2205, 4
        %v2208 = vshll.u32 %v2019, 16
        %v2210 = vrot.slane %v2208, 5
        %v2211 = vsel %vm420, %v2206, %v2210
        %v2212 = vld [vmem:[#allocation2] sm:$0xe]
        %v2213 = vld [vmem:[#allocation2 + $0xc] sm:$0xe]
        %v2214 = vld [vmem:[#allocation2 + $0x18] sm:$0xe]
        %v2215 = vld [vmem:[#allocation2 + $0x24] sm:$0xe]
        %v2216 = vld [vmem:[#allocation2 + $0x30] sm:$0xe]
        %v2217 = vld [vmem:[#allocation2 + $0x3c] sm:$0xe]
        %v2218 = vld [vmem:[#allocation2 + $0x48] sm:$0xe]
        %v2219 = vld [vmem:[#allocation2 + $0x54] sm:$0xe]
        %v2244 = vrot.slane %v2212, 5
        %v2245 = vrot.slane %v2244, 4
        %v2246 = vrot.slane %v1997, 5
        %v2247 = vsel %vm693, %v2245, %v2246
        %v2248 = vrot.slane %v2246, 4
        %v2249 = vrot.slane %v2012, 5
        %v2250 = vsel %vm693, %v2248, %v2249
        %v2251 = vrot.slane %v2213, 5
        %v2252 = vrot.slane %v2251, 4
        %v2253 = vrot.slane %v1999, 5
        %v2254 = vsel %vm693, %v2252, %v2253
        %v2255 = vrot.slane %v2253, 4
        %v2256 = vrot.slane %v2013, 5
        %v2257 = vsel %vm693, %v2255, %v2256
        %v2258 = vrot.slane %v2214, 5
        %v2259 = vrot.slane %v2258, 4
        %v2260 = vrot.slane %v2001, 5
        %v2261 = vsel %vm693, %v2259, %v2260
        %v2262 = vrot.slane %v2260, 4
        %v2263 = vrot.slane %v2014, 5
        %v2264 = vsel %vm693, %v2262, %v2263
        %v2265 = vrot.slane %v2215, 5
        %v2266 = vrot.slane %v2265, 4
        %v2267 = vrot.slane %v2003, 5
        %v2268 = vsel %vm693, %v2266, %v2267
        %v2269 = vrot.slane %v2267, 4
        %v2270 = vrot.slane %v2015, 5
        %v2271 = vsel %vm693, %v2269, %v2270
        %v2272 = vrot.slane %v2216, 5
        %v2273 = vrot.slane %v2272, 4
        %v2274 = vrot.slane %v2005, 5
        %v2275 = vsel %vm693, %v2273, %v2274
        %v2276 = vrot.slane %v2274, 4
        %v2277 = vrot.slane %v2016, 5
        %v2278 = vsel %vm693, %v2276, %v2277
        %v2279 = vrot.slane %v2217, 5
        %v2280 = vrot.slane %v2279, 4
        %v2281 = vrot.slane %v2007, 5
        %v2282 = vsel %vm693, %v2280, %v2281
        %v2283 = vrot.slane %v2281, 4
        %v2284 = vrot.slane %v2017, 5
        %v2285 = vsel %vm693, %v2283, %v2284
        %v2286 = vrot.slane %v2218, 5
        %v2287 = vrot.slane %v2286, 4
        %v2288 = vrot.slane %v2009, 5
        %v2289 = vsel %vm693, %v2287, %v2288
        %v2290 = vrot.slane %v2288, 4
        %v2291 = vrot.slane %v2018, 5
        %v2292 = vsel %vm693, %v2290, %v2291
        %v2293 = vrot.slane %v2219, 5
        %v2294 = vrot.slane %v2293, 4
        %v2295 = vrot.slane %v2011, 5
        %v2296 = vsel %vm693, %v2294, %v2295
        %v2297 = vrot.slane %v2295, 4
        %v2298 = vrot.slane %v2019, 5
        %v2299 = vsel %vm693, %v2297, %v2298
        %s2300 = scalar_lea.vmem [#allocation2], 12
        %v2301 = vld [vmem:[%s2300] sm:$0xf]
        %v2302 = vld [vmem:[%s2300 + $0x4] sm:$0xf]
        %v2303 = vld [vmem:[%s2300 + $0xc] sm:$0xf]
        %v2304 = vld [vmem:[%s2300 + $0x10] sm:$0xf]
        %v2305 = vld [vmem:[%s2300 + $0x18] sm:$0xf]
        %v2306 = vld [vmem:[%s2300 + $0x1c] sm:$0xf]
        %v2307 = vld [vmem:[%s2300 + $0x24] sm:$0xf]
        %v2308 = vld [vmem:[%s2300 + $0x28] sm:$0xf]
        %v2309 = vld [vmem:[%s2300 + $0x30] sm:$0xf]
        %v2310 = vld [vmem:[%s2300 + $0x34] sm:$0xf]
        %v2311 = vld [vmem:[%s2300 + $0x3c] sm:$0xf]
        %v2312 = vld [vmem:[%s2300 + $0x40] sm:$0xf]
        %v2313 = vld [vmem:[%s2300 + $0x48] sm:$0xf]
        %v2314 = vld [vmem:[%s2300 + $0x4c] sm:$0xf]
        %v2315 = vld [vmem:[%s2300 + $0x54] sm:$0xf]
        %v2316 = vld [vmem:[%s2300 + $0x58] sm:$0xf]
        %v2317 = vld [vmem:[%s2300 + $0x8] sm:$0x1]
        %v2318 = vld [vmem:[%s2300 + $0x14] sm:$0x1]
        %v2319 = vld [vmem:[%s2300 + $0x20] sm:$0x1]
        %v2320 = vld [vmem:[%s2300 + $0x2c] sm:$0x1]
        %v2321 = vld [vmem:[%s2300 + $0x38] sm:$0x1]
        %v2322 = vld [vmem:[%s2300 + $0x44] sm:$0x1]
        %v2323 = vld [vmem:[%s2300 + $0x50] sm:$0x1]
        %v2324 = vld [vmem:[%s2300 + $0x5c] sm:$0x1]
        %v2326 = vshrl.u32 %v2301, 16
        %v2328 = vrot.slane %v2326, 4
        %v2329 = vshll.u32 %v2301, 16
        %v2331 = vrot.slane %v2329, 5
        %v2332 = vor.u32 %v2328, %v2331
        %v2333 = vrot.slane %v2332, 4
        %v2335 = vshll.u32 %v2302, 16
        %v2337 = vrot.slane %v2335, 5
        %v2338 = vsel %vm420, %v2333, %v2337
        %v2339 = vshrl.u32 %v2302, 16
        %v2341 = vrot.slane %v2339, 4
        %v2342 = vor.u32 %v2341, %v2337
        %v2343 = vrot.slane %v2342, 4
        %v2345 = vshll.u32 %v2317, 16
        %v2347 = vrot.slane %v2345, 5
        %v2348 = vsel %vm420, %v2343, %v2347
        %v2350 = vshrl.u32 %v2303, 16
        %v2352 = vrot.slane %v2350, 4
        %v2353 = vshll.u32 %v2303, 16
        %v2355 = vrot.slane %v2353, 5
        %v2356 = vor.u32 %v2352, %v2355
        %v2357 = vrot.slane %v2356, 4
        %v2359 = vshll.u32 %v2304, 16
        %v2361 = vrot.slane %v2359, 5
        %v2362 = vsel %vm420, %v2357, %v2361
        %v2363 = vshrl.u32 %v2304, 16
        %v2365 = vrot.slane %v2363, 4
        %v2366 = vor.u32 %v2365, %v2361
        %v2367 = vrot.slane %v2366, 4
        %v2369 = vshll.u32 %v2318, 16
        %v2371 = vrot.slane %v2369, 5
        %v2372 = vsel %vm420, %v2367, %v2371
        %v2374 = vshrl.u32 %v2305, 16
        %v2376 = vrot.slane %v2374, 4
        %v2377 = vshll.u32 %v2305, 16
        %v2379 = vrot.slane %v2377, 5
        %v2380 = vor.u32 %v2376, %v2379
        %v2381 = vrot.slane %v2380, 4
        %v2383 = vshll.u32 %v2306, 16
        %v2385 = vrot.slane %v2383, 5
        %v2386 = vsel %vm420, %v2381, %v2385
        %v2387 = vshrl.u32 %v2306, 16
        %v2389 = vrot.slane %v2387, 4
        %v2390 = vor.u32 %v2389, %v2385
        %v2391 = vrot.slane %v2390, 4
        %v2393 = vshll.u32 %v2319, 16
        %v2395 = vrot.slane %v2393, 5
        %v2396 = vsel %vm420, %v2391, %v2395
        %v2398 = vshrl.u32 %v2307, 16
        %v2400 = vrot.slane %v2398, 4
        %v2401 = vshll.u32 %v2307, 16
        %v2403 = vrot.slane %v2401, 5
        %v2404 = vor.u32 %v2400, %v2403
        %v2405 = vrot.slane %v2404, 4
        %v2407 = vshll.u32 %v2308, 16
        %v2409 = vrot.slane %v2407, 5
        %v2410 = vsel %vm420, %v2405, %v2409
        %v2411 = vshrl.u32 %v2308, 16
        %v2413 = vrot.slane %v2411, 4
        %v2414 = vor.u32 %v2413, %v2409
        %v2415 = vrot.slane %v2414, 4
        %v2417 = vshll.u32 %v2320, 16
        %v2419 = vrot.slane %v2417, 5
        %v2420 = vsel %vm420, %v2415, %v2419
        %v2422 = vshrl.u32 %v2309, 16
        %v2424 = vrot.slane %v2422, 4
        %v2425 = vshll.u32 %v2309, 16
        %v2427 = vrot.slane %v2425, 5
        %v2428 = vor.u32 %v2424, %v2427
        %v2429 = vrot.slane %v2428, 4
        %v2431 = vshll.u32 %v2310, 16
        %v2433 = vrot.slane %v2431, 5
        %v2434 = vsel %vm420, %v2429, %v2433
        %v2435 = vshrl.u32 %v2310, 16
        %v2437 = vrot.slane %v2435, 4
        %v2438 = vor.u32 %v2437, %v2433
        %v2439 = vrot.slane %v2438, 4
        %v2441 = vshll.u32 %v2321, 16
        %v2443 = vrot.slane %v2441, 5
        %v2444 = vsel %vm420, %v2439, %v2443
        %v2446 = vshrl.u32 %v2311, 16
        %v2448 = vrot.slane %v2446, 4
        %v2449 = vshll.u32 %v2311, 16
        %v2451 = vrot.slane %v2449, 5
        %v2452 = vor.u32 %v2448, %v2451
        %v2453 = vrot.slane %v2452, 4
        %v2455 = vshll.u32 %v2312, 16
        %v2457 = vrot.slane %v2455, 5
        %v2458 = vsel %vm420, %v2453, %v2457
        %v2459 = vshrl.u32 %v2312, 16
        %v2461 = vrot.slane %v2459, 4
        %v2462 = vor.u32 %v2461, %v2457
        %v2463 = vrot.slane %v2462, 4
        %v2465 = vshll.u32 %v2322, 16
        %v2467 = vrot.slane %v2465, 5
        %v2468 = vsel %vm420, %v2463, %v2467
        %v2470 = vshrl.u32 %v2313, 16
        %v2472 = vrot.slane %v2470, 4
        %v2473 = vshll.u32 %v2313, 16
        %v2475 = vrot.slane %v2473, 5
        %v2476 = vor.u32 %v2472, %v2475
        %v2477 = vrot.slane %v2476, 4
        %v2479 = vshll.u32 %v2314, 16
        %v2481 = vrot.slane %v2479, 5
        %v2482 = vsel %vm420, %v2477, %v2481
        %v2483 = vshrl.u32 %v2314, 16
        %v2485 = vrot.slane %v2483, 4
        %v2486 = vor.u32 %v2485, %v2481
        %v2487 = vrot.slane %v2486, 4
        %v2489 = vshll.u32 %v2323, 16
        %v2491 = vrot.slane %v2489, 5
        %v2492 = vsel %vm420, %v2487, %v2491
        %v2494 = vshrl.u32 %v2315, 16
        %v2496 = vrot.slane %v2494, 4
        %v2497 = vshll.u32 %v2315, 16
        %v2499 = vrot.slane %v2497, 5
        %v2500 = vor.u32 %v2496, %v2499
        %v2501 = vrot.slane %v2500, 4
        %v2503 = vshll.u32 %v2316, 16
        %v2505 = vrot.slane %v2503, 5
        %v2506 = vsel %vm420, %v2501, %v2505
        %v2507 = vshrl.u32 %v2316, 16
        %v2509 = vrot.slane %v2507, 4
        %v2510 = vor.u32 %v2509, %v2505
        %v2511 = vrot.slane %v2510, 4
        %v2513 = vshll.u32 %v2324, 16
        %v2515 = vrot.slane %v2513, 5
        %v2516 = vsel %vm420, %v2511, %v2515
        %v2517 = vld [vmem:[%s2300] sm:$0xe]
        %v2518 = vld [vmem:[%s2300 + $0xc] sm:$0xe]
        %v2519 = vld [vmem:[%s2300 + $0x18] sm:$0xe]
        %v2520 = vld [vmem:[%s2300 + $0x24] sm:$0xe]
        %v2521 = vld [vmem:[%s2300 + $0x30] sm:$0xe]
        %v2522 = vld [vmem:[%s2300 + $0x3c] sm:$0xe]
        %v2523 = vld [vmem:[%s2300 + $0x48] sm:$0xe]
        %v2524 = vld [vmem:[%s2300 + $0x54] sm:$0xe]
        %v2549 = vrot.slane %v2517, 5
        %v2550 = vrot.slane %v2549, 4
        %v2551 = vrot.slane %v2302, 5
        %v2552 = vsel %vm693, %v2550, %v2551
        %v2553 = vrot.slane %v2551, 4
        %v2554 = vrot.slane %v2317, 5
        %v2555 = vsel %vm693, %v2553, %v2554
        %v2556 = vrot.slane %v2518, 5
        %v2557 = vrot.slane %v2556, 4
        %v2558 = vrot.slane %v2304, 5
        %v2559 = vsel %vm693, %v2557, %v2558
        %v2560 = vrot.slane %v2558, 4
        %v2561 = vrot.slane %v2318, 5
        %v2562 = vsel %vm693, %v2560, %v2561
        %v2563 = vrot.slane %v2519, 5
        %v2564 = vrot.slane %v2563, 4
        %v2565 = vrot.slane %v2306, 5
        %v2566 = vsel %vm693, %v2564, %v2565
        %v2567 = vrot.slane %v2565, 4
        %v2568 = vrot.slane %v2319, 5
        %v2569 = vsel %vm693, %v2567, %v2568
        %v2570 = vrot.slane %v2520, 5
        %v2571 = vrot.slane %v2570, 4
        %v2572 = vrot.slane %v2308, 5
        %v2573 = vsel %vm693, %v2571, %v2572
        %v2574 = vrot.slane %v2572, 4
        %v2575 = vrot.slane %v2320, 5
        %v2576 = vsel %vm693, %v2574, %v2575
        %v2577 = vrot.slane %v2521, 5
        %v2578 = vrot.slane %v2577, 4
        %v2579 = vrot.slane %v2310, 5
        %v2580 = vsel %vm693, %v2578, %v2579
        %v2581 = vrot.slane %v2579, 4
        %v2582 = vrot.slane %v2321, 5
        %v2583 = vsel %vm693, %v2581, %v2582
        %v2584 = vrot.slane %v2522, 5
        %v2585 = vrot.slane %v2584, 4
        %v2586 = vrot.slane %v2312, 5
        %v2587 = vsel %vm693, %v2585, %v2586
        %v2588 = vrot.slane %v2586, 4
        %v2589 = vrot.slane %v2322, 5
        %v2590 = vsel %vm693, %v2588, %v2589
        %v2591 = vrot.slane %v2523, 5
        %v2592 = vrot.slane %v2591, 4
        %v2593 = vrot.slane %v2314, 5
        %v2594 = vsel %vm693, %v2592, %v2593
        %v2595 = vrot.slane %v2593, 4
        %v2596 = vrot.slane %v2323, 5
        %v2597 = vsel %vm693, %v2595, %v2596
        %v2598 = vrot.slane %v2524, 5
        %v2599 = vrot.slane %v2598, 4
        %v2600 = vrot.slane %v2316, 5
        %v2601 = vsel %vm693, %v2599, %v2600
        %v2602 = vrot.slane %v2600, 4
        %v2603 = vrot.slane %v2324, 5
        %v2604 = vsel %vm693, %v2602, %v2603
        %s2605 = scalar_lea.vmem [#allocation2], 24
        %v2606 = vld [vmem:[%s2605] sm:$0xf]
        %v2607 = vld [vmem:[%s2605 + $0x4] sm:$0xf]
        %v2608 = vld [vmem:[%s2605 + $0xc] sm:$0xf]
        %v2609 = vld [vmem:[%s2605 + $0x10] sm:$0xf]
        %v2610 = vld [vmem:[%s2605 + $0x18] sm:$0xf]
        %v2611 = vld [vmem:[%s2605 + $0x1c] sm:$0xf]
        %v2612 = vld [vmem:[%s2605 + $0x24] sm:$0xf]
        %v2613 = vld [vmem:[%s2605 + $0x28] sm:$0xf]
        %v2614 = vld [vmem:[%s2605 + $0x30] sm:$0xf]
        %v2615 = vld [vmem:[%s2605 + $0x34] sm:$0xf]
        %v2616 = vld [vmem:[%s2605 + $0x3c] sm:$0xf]
        %v2617 = vld [vmem:[%s2605 + $0x40] sm:$0xf]
        %v2618 = vld [vmem:[%s2605 + $0x48] sm:$0xf]
        %v2619 = vld [vmem:[%s2605 + $0x4c] sm:$0xf]
        %v2620 = vld [vmem:[%s2605 + $0x54] sm:$0xf]
        %v2621 = vld [vmem:[%s2605 + $0x58] sm:$0xf]
        %v2622 = vld [vmem:[%s2605 + $0x8] sm:$0x1]
        %v2623 = vld [vmem:[%s2605 + $0x14] sm:$0x1]
        %v2624 = vld [vmem:[%s2605 + $0x20] sm:$0x1]
        %v2625 = vld [vmem:[%s2605 + $0x2c] sm:$0x1]
        %v2626 = vld [vmem:[%s2605 + $0x38] sm:$0x1]
        %v2627 = vld [vmem:[%s2605 + $0x44] sm:$0x1]
        %v2628 = vld [vmem:[%s2605 + $0x50] sm:$0x1]
        %v2629 = vld [vmem:[%s2605 + $0x5c] sm:$0x1]
        %v2631 = vshrl.u32 %v2606, 16
        %v2633 = vrot.slane %v2631, 4
        %v2634 = vshll.u32 %v2606, 16
        %v2636 = vrot.slane %v2634, 5
        %v2637 = vor.u32 %v2633, %v2636
        %v2638 = vrot.slane %v2637, 4
        %v2640 = vshll.u32 %v2607, 16
        %v2642 = vrot.slane %v2640, 5
        %v2643 = vsel %vm420, %v2638, %v2642
        %v2644 = vshrl.u32 %v2607, 16
        %v2646 = vrot.slane %v2644, 4
        %v2647 = vor.u32 %v2646, %v2642
        %v2648 = vrot.slane %v2647, 4
        %v2650 = vshll.u32 %v2622, 16
        %v2652 = vrot.slane %v2650, 5
        %v2653 = vsel %vm420, %v2648, %v2652
        %v2655 = vshrl.u32 %v2608, 16
        %v2657 = vrot.slane %v2655, 4
        %v2658 = vshll.u32 %v2608, 16
        %v2660 = vrot.slane %v2658, 5
        %v2661 = vor.u32 %v2657, %v2660
        %v2662 = vrot.slane %v2661, 4
        %v2664 = vshll.u32 %v2609, 16
        %v2666 = vrot.slane %v2664, 5
        %v2667 = vsel %vm420, %v2662, %v2666
        %v2668 = vshrl.u32 %v2609, 16
        %v2670 = vrot.slane %v2668, 4
        %v2671 = vor.u32 %v2670, %v2666
        %v2672 = vrot.slane %v2671, 4
        %v2674 = vshll.u32 %v2623, 16
        %v2676 = vrot.slane %v2674, 5
        %v2677 = vsel %vm420, %v2672, %v2676
        %v2679 = vshrl.u32 %v2610, 16
        %v2681 = vrot.slane %v2679, 4
        %v2682 = vshll.u32 %v2610, 16
        %v2684 = vrot.slane %v2682, 5
        %v2685 = vor.u32 %v2681, %v2684
        %v2686 = vrot.slane %v2685, 4
        %v2688 = vshll.u32 %v2611, 16
        %v2690 = vrot.slane %v2688, 5
        %v2691 = vsel %vm420, %v2686, %v2690
        %v2692 = vshrl.u32 %v2611, 16
        %v2694 = vrot.slane %v2692, 4
        %v2695 = vor.u32 %v2694, %v2690
        %v2696 = vrot.slane %v2695, 4
        %v2698 = vshll.u32 %v2624, 16
        %v2700 = vrot.slane %v2698, 5
        %v2701 = vsel %vm420, %v2696, %v2700
        %v2703 = vshrl.u32 %v2612, 16
        %v2705 = vrot.slane %v2703, 4
        %v2706 = vshll.u32 %v2612, 16
        %v2708 = vrot.slane %v2706, 5
        %v2709 = vor.u32 %v2705, %v2708
        %v2710 = vrot.slane %v2709, 4
        %v2712 = vshll.u32 %v2613, 16
        %v2714 = vrot.slane %v2712, 5
        %v2715 = vsel %vm420, %v2710, %v2714
        %v2716 = vshrl.u32 %v2613, 16
        %v2718 = vrot.slane %v2716, 4
        %v2719 = vor.u32 %v2718, %v2714
        %v2720 = vrot.slane %v2719, 4
        %v2722 = vshll.u32 %v2625, 16
        %v2724 = vrot.slane %v2722, 5
        %v2725 = vsel %vm420, %v2720, %v2724
        %v2727 = vshrl.u32 %v2614, 16
        %v2729 = vrot.slane %v2727, 4
        %v2730 = vshll.u32 %v2614, 16
        %v2732 = vrot.slane %v2730, 5
        %v2733 = vor.u32 %v2729, %v2732
        %v2734 = vrot.slane %v2733, 4
        %v2736 = vshll.u32 %v2615, 16
        %v2738 = vrot.slane %v2736, 5
        %v2739 = vsel %vm420, %v2734, %v2738
        %v2740 = vshrl.u32 %v2615, 16
        %v2742 = vrot.slane %v2740, 4
        %v2743 = vor.u32 %v2742, %v2738
        %v2744 = vrot.slane %v2743, 4
        %v2746 = vshll.u32 %v2626, 16
        %v2748 = vrot.slane %v2746, 5
        %v2749 = vsel %vm420, %v2744, %v2748
        %v2751 = vshrl.u32 %v2616, 16
        %v2753 = vrot.slane %v2751, 4
        %v2754 = vshll.u32 %v2616, 16
        %v2756 = vrot.slane %v2754, 5
        %v2757 = vor.u32 %v2753, %v2756
        %v2758 = vrot.slane %v2757, 4
        %v2760 = vshll.u32 %v2617, 16
        %v2762 = vrot.slane %v2760, 5
        %v2763 = vsel %vm420, %v2758, %v2762
        %v2764 = vshrl.u32 %v2617, 16
        %v2766 = vrot.slane %v2764, 4
        %v2767 = vor.u32 %v2766, %v2762
        %v2768 = vrot.slane %v2767, 4
        %v2770 = vshll.u32 %v2627, 16
        %v2772 = vrot.slane %v2770, 5
        %v2773 = vsel %vm420, %v2768, %v2772
        %v2775 = vshrl.u32 %v2618, 16
        %v2777 = vrot.slane %v2775, 4
        %v2778 = vshll.u32 %v2618, 16
        %v2780 = vrot.slane %v2778, 5
        %v2781 = vor.u32 %v2777, %v2780
        %v2782 = vrot.slane %v2781, 4
        %v2784 = vshll.u32 %v2619, 16
        %v2786 = vrot.slane %v2784, 5
        %v2787 = vsel %vm420, %v2782, %v2786
        %v2788 = vshrl.u32 %v2619, 16
        %v2790 = vrot.slane %v2788, 4
        %v2791 = vor.u32 %v2790, %v2786
        %v2792 = vrot.slane %v2791, 4
        %v2794 = vshll.u32 %v2628, 16
        %v2796 = vrot.slane %v2794, 5
        %v2797 = vsel %vm420, %v2792, %v2796
        %v2799 = vshrl.u32 %v2620, 16
        %v2801 = vrot.slane %v2799, 4
        %v2802 = vshll.u32 %v2620, 16
        %v2804 = vrot.slane %v2802, 5
        %v2805 = vor.u32 %v2801, %v2804
        %v2806 = vrot.slane %v2805, 4
        %v2808 = vshll.u32 %v2621, 16
        %v2810 = vrot.slane %v2808, 5
        %v2811 = vsel %vm420, %v2806, %v2810
        %v2812 = vshrl.u32 %v2621, 16
        %v2814 = vrot.slane %v2812, 4
        %v2815 = vor.u32 %v2814, %v2810
        %v2816 = vrot.slane %v2815, 4
        %v2818 = vshll.u32 %v2629, 16
        %v2820 = vrot.slane %v2818, 5
        %v2821 = vsel %vm420, %v2816, %v2820
        %v2822 = vld [vmem:[%s2605] sm:$0xe]
        %v2823 = vld [vmem:[%s2605 + $0xc] sm:$0xe]
        %v2824 = vld [vmem:[%s2605 + $0x18] sm:$0xe]
        %v2825 = vld [vmem:[%s2605 + $0x24] sm:$0xe]
        %v2826 = vld [vmem:[%s2605 + $0x30] sm:$0xe]
        %v2827 = vld [vmem:[%s2605 + $0x3c] sm:$0xe]
        %v2828 = vld [vmem:[%s2605 + $0x48] sm:$0xe]
        %v2829 = vld [vmem:[%s2605 + $0x54] sm:$0xe]
        %v2854 = vrot.slane %v2822, 5
        %v2855 = vrot.slane %v2854, 4
        %v2856 = vrot.slane %v2607, 5
        %v2857 = vsel %vm693, %v2855, %v2856
        %v2858 = vrot.slane %v2856, 4
        %v2859 = vrot.slane %v2622, 5
        %v2860 = vsel %vm693, %v2858, %v2859
        %v2861 = vrot.slane %v2823, 5
        %v2862 = vrot.slane %v2861, 4
        %v2863 = vrot.slane %v2609, 5
        %v2864 = vsel %vm693, %v2862, %v2863
        %v2865 = vrot.slane %v2863, 4
        %v2866 = vrot.slane %v2623, 5
        %v2867 = vsel %vm693, %v2865, %v2866
        %v2868 = vrot.slane %v2824, 5
        %v2869 = vrot.slane %v2868, 4
        %v2870 = vrot.slane %v2611, 5
        %v2871 = vsel %vm693, %v2869, %v2870
        %v2872 = vrot.slane %v2870, 4
        %v2873 = vrot.slane %v2624, 5
        %v2874 = vsel %vm693, %v2872, %v2873
        %v2875 = vrot.slane %v2825, 5
        %v2876 = vrot.slane %v2875, 4
        %v2877 = vrot.slane %v2613, 5
        %v2878 = vsel %vm693, %v2876, %v2877
        %v2879 = vrot.slane %v2877, 4
        %v2880 = vrot.slane %v2625, 5
        %v2881 = vsel %vm693, %v2879, %v2880
        %v2882 = vrot.slane %v2826, 5
        %v2883 = vrot.slane %v2882, 4
        %v2884 = vrot.slane %v2615, 5
        %v2885 = vsel %vm693, %v2883, %v2884
        %v2886 = vrot.slane %v2884, 4
        %v2887 = vrot.slane %v2626, 5
        %v2888 = vsel %vm693, %v2886, %v2887
        %v2889 = vrot.slane %v2827, 5
        %v2890 = vrot.slane %v2889, 4
        %v2891 = vrot.slane %v2617, 5
        %v2892 = vsel %vm693, %v2890, %v2891
        %v2893 = vrot.slane %v2891, 4
        %v2894 = vrot.slane %v2627, 5
        %v2895 = vsel %vm693, %v2893, %v2894
        %v2896 = vrot.slane %v2828, 5
        %v2897 = vrot.slane %v2896, 4
        %v2898 = vrot.slane %v2619, 5
        %v2899 = vsel %vm693, %v2897, %v2898
        %v2900 = vrot.slane %v2898, 4
        %v2901 = vrot.slane %v2628, 5
        %v2902 = vsel %vm693, %v2900, %v2901
        %v2903 = vrot.slane %v2829, 5
        %v2904 = vrot.slane %v2903, 4
        %v2905 = vrot.slane %v2621, 5
        %v2906 = vsel %vm693, %v2904, %v2905
        %v2907 = vrot.slane %v2905, 4
        %v2908 = vrot.slane %v2629, 5
        %v2909 = vsel %vm693, %v2907, %v2908
        %v2918 = vunpack.c.l.b16 %v1996
        %v2919 = vunpack.c.l.b16 %v1997
        %v2920 = vunpack.c.l.b16 %v1998
        %v2921 = vunpack.c.l.b16 %v1999
        %v2922 = vunpack.c.l.b16 %v2000
        %v2923 = vunpack.c.l.b16 %v2001
        %v2924 = vunpack.c.l.b16 %v2002
        %v2925 = vunpack.c.l.b16 %v2003
        %v2926 = vunpack.c.l.b16 %v2004
        %v2927 = vunpack.c.l.b16 %v2005
        %v2928 = vunpack.c.l.b16 %v2006
        %v2929 = vunpack.c.l.b16 %v2007
        %v2930 = vunpack.c.l.b16 %v2008
        %v2931 = vunpack.c.l.b16 %v2009
        %v2932 = vunpack.c.l.b16 %v2010
        %v2933 = vunpack.c.l.b16 %v2011
        %v2934 = vpack.c.b16 %v2919, %v2918
        %v2935 = vpack.c.b16 %v2921, %v2920
        %v2936 = vpack.c.b16 %v2923, %v2922
        %v2937 = vpack.c.b16 %v2925, %v2924
        %v2938 = vpack.c.b16 %v2927, %v2926
        %v2939 = vpack.c.b16 %v2929, %v2928
        %v2940 = vpack.c.b16 %v2931, %v2930
        %v2941 = vpack.c.b16 %v2933, %v2932
        %v2942 = vunpack.c.l.b16 %v2033
        %v2943 = vunpack.c.l.b16 %v2043
        %v2944 = vunpack.c.l.b16 %v2057
        %v2945 = vunpack.c.l.b16 %v2067
        %v2946 = vunpack.c.l.b16 %v2081
        %v2947 = vunpack.c.l.b16 %v2091
        %v2948 = vunpack.c.l.b16 %v2105
        %v2949 = vunpack.c.l.b16 %v2115
        %v2950 = vunpack.c.l.b16 %v2129
        %v2951 = vunpack.c.l.b16 %v2139
        %v2952 = vunpack.c.l.b16 %v2153
        %v2953 = vunpack.c.l.b16 %v2163
        %v2954 = vunpack.c.l.b16 %v2177
        %v2955 = vunpack.c.l.b16 %v2187
        %v2956 = vunpack.c.l.b16 %v2201
        %v2957 = vunpack.c.l.b16 %v2211
        %v2958 = vpack.c.b16 %v2943, %v2942
        %v2959 = vpack.c.b16 %v2945, %v2944
        %v2960 = vpack.c.b16 %v2947, %v2946
        %v2961 = vpack.c.b16 %v2949, %v2948
        %v2962 = vpack.c.b16 %v2951, %v2950
        %v2963 = vpack.c.b16 %v2953, %v2952
        %v2964 = vpack.c.b16 %v2955, %v2954
        %v2965 = vpack.c.b16 %v2957, %v2956
        %2966 = vrot.lane.b32.xlu0 %v2958, 64
        %v2967 = vpop.permute.xlu0 %2966
        %2968 = vrot.lane.b32.xlu0 %v2959, 64
        %v2969 = vpop.permute.xlu0 %2968
        %2970 = vrot.lane.b32.xlu0 %v2960, 64
        %v2971 = vpop.permute.xlu0 %2970
        %2972 = vrot.lane.b32.xlu0 %v2961, 64
        %v2973 = vpop.permute.xlu0 %2972
        %2974 = vrot.lane.b32.xlu0 %v2962, 64
        %v2975 = vpop.permute.xlu0 %2974
        %2976 = vrot.lane.b32.xlu0 %v2963, 64
        %v2977 = vpop.permute.xlu0 %2976
        %2978 = vrot.lane.b32.xlu0 %v2964, 64
        %v2979 = vpop.permute.xlu0 %2978
        %2980 = vrot.lane.b32.xlu0 %v2965, 64
        %v2981 = vpop.permute.xlu0 %2980
        %v2982 = vunpack.c.l.b16 %v2247
        %v2983 = vunpack.c.l.b16 %v2250
        %v2984 = vunpack.c.l.b16 %v2254
        %v2985 = vunpack.c.l.b16 %v2257
        %v2986 = vunpack.c.l.b16 %v2261
        %v2987 = vunpack.c.l.b16 %v2264
        %v2988 = vunpack.c.l.b16 %v2268
        %v2989 = vunpack.c.l.b16 %v2271
        %v2990 = vunpack.c.l.b16 %v2275
        %v2991 = vunpack.c.l.b16 %v2278
        %v2992 = vunpack.c.l.b16 %v2282
        %v2993 = vunpack.c.l.b16 %v2285
        %v2994 = vunpack.c.l.b16 %v2289
        %v2995 = vunpack.c.l.b16 %v2292
        %v2996 = vunpack.c.l.b16 %v2296
        %v2997 = vunpack.c.l.b16 %v2299
        %v2998 = vpack.c.b16 %v2983, %v2982
        %v2999 = vpack.c.b16 %v2985, %v2984
        %v3000 = vpack.c.b16 %v2987, %v2986
        %v3001 = vpack.c.b16 %v2989, %v2988
        %v3002 = vpack.c.b16 %v2991, %v2990
        %v3003 = vpack.c.b16 %v2993, %v2992
        %v3004 = vpack.c.b16 %v2995, %v2994
        %v3005 = vpack.c.b16 %v2997, %v2996
        %v3014 = vunpack.c.l.b16 %v2301
        %v3015 = vunpack.c.l.b16 %v2302
        %v3016 = vunpack.c.l.b16 %v2303
        %v3017 = vunpack.c.l.b16 %v2304
        %v3018 = vunpack.c.l.b16 %v2305
        %v3019 = vunpack.c.l.b16 %v2306
        %v3020 = vunpack.c.l.b16 %v2307
        %v3021 = vunpack.c.l.b16 %v2308
        %v3022 = vunpack.c.l.b16 %v2309
        %v3023 = vunpack.c.l.b16 %v2310
        %v3024 = vunpack.c.l.b16 %v2311
        %v3025 = vunpack.c.l.b16 %v2312
        %v3026 = vunpack.c.l.b16 %v2313
        %v3027 = vunpack.c.l.b16 %v2314
        %v3028 = vunpack.c.l.b16 %v2315
        %v3029 = vunpack.c.l.b16 %v2316
        %v3030 = vpack.c.b16 %v3015, %v3014
        %v3031 = vpack.c.b16 %v3017, %v3016
        %v3032 = vpack.c.b16 %v3019, %v3018
        %v3033 = vpack.c.b16 %v3021, %v3020
        %v3034 = vpack.c.b16 %v3023, %v3022
        %v3035 = vpack.c.b16 %v3025, %v3024
        %v3036 = vpack.c.b16 %v3027, %v3026
        %v3037 = vpack.c.b16 %v3029, %v3028
        %3038 = vrot.lane.b32.xlu0 %v3030, 64
        %v3039 = vpop.permute.xlu0 %3038
        %3040 = vrot.lane.b32.xlu0 %v3031, 64
        %v3041 = vpop.permute.xlu0 %3040
        %3042 = vrot.lane.b32.xlu0 %v3032, 64
        %v3043 = vpop.permute.xlu0 %3042
        %3044 = vrot.lane.b32.xlu0 %v3033, 64
        %v3045 = vpop.permute.xlu0 %3044
        %3046 = vrot.lane.b32.xlu0 %v3034, 64
        %v3047 = vpop.permute.xlu0 %3046
        %3048 = vrot.lane.b32.xlu0 %v3035, 64
        %v3049 = vpop.permute.xlu0 %3048
        %3050 = vrot.lane.b32.xlu0 %v3036, 64
        %v3051 = vpop.permute.xlu0 %3050
        %3052 = vrot.lane.b32.xlu0 %v3037, 64
        %v3053 = vpop.permute.xlu0 %3052
        %v3054 = vunpack.c.l.b16 %v2338
        %v3055 = vunpack.c.l.b16 %v2348
        %v3056 = vunpack.c.l.b16 %v2362
        %v3057 = vunpack.c.l.b16 %v2372
        %v3058 = vunpack.c.l.b16 %v2386
        %v3059 = vunpack.c.l.b16 %v2396
        %v3060 = vunpack.c.l.b16 %v2410
        %v3061 = vunpack.c.l.b16 %v2420
        %v3062 = vunpack.c.l.b16 %v2434
        %v3063 = vunpack.c.l.b16 %v2444
        %v3064 = vunpack.c.l.b16 %v2458
        %v3065 = vunpack.c.l.b16 %v2468
        %v3066 = vunpack.c.l.b16 %v2482
        %v3067 = vunpack.c.l.b16 %v2492
        %v3068 = vunpack.c.l.b16 %v2506
        %v3069 = vunpack.c.l.b16 %v2516
        %v3070 = vpack.c.b16 %v3055, %v3054
        %v3071 = vpack.c.b16 %v3057, %v3056
        %v3072 = vpack.c.b16 %v3059, %v3058
        %v3073 = vpack.c.b16 %v3061, %v3060
        %v3074 = vpack.c.b16 %v3063, %v3062
        %v3075 = vpack.c.b16 %v3065, %v3064
        %v3076 = vpack.c.b16 %v3067, %v3066
        %v3077 = vpack.c.b16 %v3069, %v3068
        %v3078 = vunpack.c.l.b16 %v2552
        %v3079 = vunpack.c.l.b16 %v2555
        %v3080 = vunpack.c.l.b16 %v2559
        %v3081 = vunpack.c.l.b16 %v2562
        %v3082 = vunpack.c.l.b16 %v2566
        %v3083 = vunpack.c.l.b16 %v2569
        %v3084 = vunpack.c.l.b16 %v2573
        %v3085 = vunpack.c.l.b16 %v2576
        %v3086 = vunpack.c.l.b16 %v2580
        %v3087 = vunpack.c.l.b16 %v2583
        %v3088 = vunpack.c.l.b16 %v2587
        %v3089 = vunpack.c.l.b16 %v2590
        %v3090 = vunpack.c.l.b16 %v2594
        %v3091 = vunpack.c.l.b16 %v2597
        %v3092 = vunpack.c.l.b16 %v2601
        %v3093 = vunpack.c.l.b16 %v2604
        %v3094 = vpack.c.b16 %v3079, %v3078
        %v3095 = vpack.c.b16 %v3081, %v3080
        %v3096 = vpack.c.b16 %v3083, %v3082
        %v3097 = vpack.c.b16 %v3085, %v3084
        %v3098 = vpack.c.b16 %v3087, %v3086
        %v3099 = vpack.c.b16 %v3089, %v3088
        %v3100 = vpack.c.b16 %v3091, %v3090
        %v3101 = vpack.c.b16 %v3093, %v3092
        %3102 = vrot.lane.b32.xlu0 %v3094, 64
        %v3103 = vpop.permute.xlu0 %3102
        %3104 = vrot.lane.b32.xlu0 %v3095, 64
        %v3105 = vpop.permute.xlu0 %3104
        %3106 = vrot.lane.b32.xlu0 %v3096, 64
        %v3107 = vpop.permute.xlu0 %3106
        %3108 = vrot.lane.b32.xlu0 %v3097, 64
        %v3109 = vpop.permute.xlu0 %3108
        %3110 = vrot.lane.b32.xlu0 %v3098, 64
        %v3111 = vpop.permute.xlu0 %3110
        %3112 = vrot.lane.b32.xlu0 %v3099, 64
        %v3113 = vpop.permute.xlu0 %3112
        %3114 = vrot.lane.b32.xlu0 %v3100, 64
        %v3115 = vpop.permute.xlu0 %3114
        %3116 = vrot.lane.b32.xlu0 %v3101, 64
        %v3117 = vpop.permute.xlu0 %3116
        %v3126 = vunpack.c.l.b16 %v2606
        %v3127 = vunpack.c.l.b16 %v2607
        %v3128 = vunpack.c.l.b16 %v2608
        %v3129 = vunpack.c.l.b16 %v2609
        %v3130 = vunpack.c.l.b16 %v2610
        %v3131 = vunpack.c.l.b16 %v2611
        %v3132 = vunpack.c.l.b16 %v2612
        %v3133 = vunpack.c.l.b16 %v2613
        %v3134 = vunpack.c.l.b16 %v2614
        %v3135 = vunpack.c.l.b16 %v2615
        %v3136 = vunpack.c.l.b16 %v2616
        %v3137 = vunpack.c.l.b16 %v2617
        %v3138 = vunpack.c.l.b16 %v2618
        %v3139 = vunpack.c.l.b16 %v2619
        %v3140 = vunpack.c.l.b16 %v2620
        %v3141 = vunpack.c.l.b16 %v2621
        %v3142 = vpack.c.b16 %v3127, %v3126
        %v3143 = vpack.c.b16 %v3129, %v3128
        %v3144 = vpack.c.b16 %v3131, %v3130
        %v3145 = vpack.c.b16 %v3133, %v3132
        %v3146 = vpack.c.b16 %v3135, %v3134
        %v3147 = vpack.c.b16 %v3137, %v3136
        %v3148 = vpack.c.b16 %v3139, %v3138
        %v3149 = vpack.c.b16 %v3141, %v3140
        %v3150 = vunpack.c.l.b16 %v2643
        %v3151 = vunpack.c.l.b16 %v2653
        %v3152 = vunpack.c.l.b16 %v2667
        %v3153 = vunpack.c.l.b16 %v2677
        %v3154 = vunpack.c.l.b16 %v2691
        %v3155 = vunpack.c.l.b16 %v2701
        %v3156 = vunpack.c.l.b16 %v2715
        %v3157 = vunpack.c.l.b16 %v2725
        %v3158 = vunpack.c.l.b16 %v2739
        %v3159 = vunpack.c.l.b16 %v2749
        %v3160 = vunpack.c.l.b16 %v2763
        %v3161 = vunpack.c.l.b16 %v2773
        %v3162 = vunpack.c.l.b16 %v2787
        %v3163 = vunpack.c.l.b16 %v2797
        %v3164 = vunpack.c.l.b16 %v2811
        %v3165 = vunpack.c.l.b16 %v2821
        %v3166 = vpack.c.b16 %v3151, %v3150
        %v3167 = vpack.c.b16 %v3153, %v3152
        %v3168 = vpack.c.b16 %v3155, %v3154
        %v3169 = vpack.c.b16 %v3157, %v3156
        %v3170 = vpack.c.b16 %v3159, %v3158
        %v3171 = vpack.c.b16 %v3161, %v3160
        %v3172 = vpack.c.b16 %v3163, %v3162
        %v3173 = vpack.c.b16 %v3165, %v3164
        %3174 = vrot.lane.b32.xlu0 %v3166, 64
        %v3175 = vpop.permute.xlu0 %3174
        %3176 = vrot.lane.b32.xlu0 %v3167, 64
        %v3177 = vpop.permute.xlu0 %3176
        %3178 = vrot.lane.b32.xlu0 %v3168, 64
        %v3179 = vpop.permute.xlu0 %3178
        %3180 = vrot.lane.b32.xlu0 %v3169, 64
        %v3181 = vpop.permute.xlu0 %3180
        %3182 = vrot.lane.b32.xlu0 %v3170, 64
        %v3183 = vpop.permute.xlu0 %3182
        %3184 = vrot.lane.b32.xlu0 %v3171, 64
        %v3185 = vpop.permute.xlu0 %3184
        %3186 = vrot.lane.b32.xlu0 %v3172, 64
        %v3187 = vpop.permute.xlu0 %3186
        %3188 = vrot.lane.b32.xlu0 %v3173, 64
        %v3189 = vpop.permute.xlu0 %3188
        %v3190 = vunpack.c.l.b16 %v2857
        %v3191 = vunpack.c.l.b16 %v2860
        %v3192 = vunpack.c.l.b16 %v2864
        %v3193 = vunpack.c.l.b16 %v2867
        %v3194 = vunpack.c.l.b16 %v2871
        %v3195 = vunpack.c.l.b16 %v2874
        %v3196 = vunpack.c.l.b16 %v2878
        %v3197 = vunpack.c.l.b16 %v2881
        %v3198 = vunpack.c.l.b16 %v2885
        %v3199 = vunpack.c.l.b16 %v2888
        %v3200 = vunpack.c.l.b16 %v2892
        %v3201 = vunpack.c.l.b16 %v2895
        %v3202 = vunpack.c.l.b16 %v2899
        %v3203 = vunpack.c.l.b16 %v2902
        %v3204 = vunpack.c.l.b16 %v2906
        %v3205 = vunpack.c.l.b16 %v2909
        %v3206 = vpack.c.b16 %v3191, %v3190
        %v3207 = vpack.c.b16 %v3193, %v3192
        %v3208 = vpack.c.b16 %v3195, %v3194
        %v3209 = vpack.c.b16 %v3197, %v3196
        %v3210 = vpack.c.b16 %v3199, %v3198
        %v3211 = vpack.c.b16 %v3201, %v3200
        %v3212 = vpack.c.b16 %v3203, %v3202
        %v3213 = vpack.c.b16 %v3205, %v3204
        %vm3214 = vcmask 523264
        %v3217 = vsel %vm3214, %v2934, %v2967
        %v3221 = vsel %vm3214, %v2935, %v2969
        %v3225 = vsel %vm3214, %v2936, %v2971
        %v3229 = vsel %vm3214, %v2937, %v2973
        %v3233 = vsel %vm3214, %v2938, %v2975
        %v3237 = vsel %vm3214, %v2939, %v2977
        %v3241 = vsel %vm3214, %v2940, %v2979
        %v3245 = vsel %vm3214, %v2941, %v2981
        %v3249 = vsel %vm3214, %v2998, %v3039
        %v3253 = vsel %vm3214, %v2999, %v3041
        %v3257 = vsel %vm3214, %v3000, %v3043
        %v3261 = vsel %vm3214, %v3001, %v3045
        %v3265 = vsel %vm3214, %v3002, %v3047
        %v3269 = vsel %vm3214, %v3003, %v3049
        %v3273 = vsel %vm3214, %v3004, %v3051
        %v3277 = vsel %vm3214, %v3005, %v3053
        %v3281 = vsel %vm3214, %v3070, %v3103
        %v3285 = vsel %vm3214, %v3071, %v3105
        %v3289 = vsel %vm3214, %v3072, %v3107
        %v3293 = vsel %vm3214, %v3073, %v3109
        %v3297 = vsel %vm3214, %v3074, %v3111
        %v3301 = vsel %vm3214, %v3075, %v3113
        %v3305 = vsel %vm3214, %v3076, %v3115
        %v3309 = vsel %vm3214, %v3077, %v3117
        %v3313 = vsel %vm3214, %v3142, %v3175
        %v3317 = vsel %vm3214, %v3143, %v3177
        %v3321 = vsel %vm3214, %v3144, %v3179
        %v3325 = vsel %vm3214, %v3145, %v3181
        %v3329 = vsel %vm3214, %v3146, %v3183
        %v3333 = vsel %vm3214, %v3147, %v3185
        %v3337 = vsel %vm3214, %v3148, %v3187
        %v3341 = vsel %vm3214, %v3149, %v3189
        %v3343 = vld [vmem:[%s4] sm:$0xf]
        %v3344 = vld [vmem:[%s4 + $0x4] sm:$0xf]
        %v3345 = vld [vmem:[%s4 + $0x8] sm:$0xf]
        %v3346 = vld [vmem:[%s4 + $0xc] sm:$0xf]
        %v3347 = vld [vmem:[%s4 + $0x10] sm:$0xf]
        %v3348 = vld [vmem:[%s4 + $0x14] sm:$0xf]
        %v3349 = vld [vmem:[%s4 + $0x18] sm:$0xf]
        %v3350 = vld [vmem:[%s4 + $0x1c] sm:$0xf]
        %v3351 = vld [vmem:[%s4 + $0x20] sm:$0xf]
        %v3352 = vld [vmem:[%s4 + $0x24] sm:$0xf]
        %v3353 = vld [vmem:[%s4 + $0x28] sm:$0xf]
        %v3354 = vld [vmem:[%s4 + $0x2c] sm:$0xf]
        %v3355 = vld [vmem:[%s4 + $0x30] sm:$0xf]
        %v3356 = vld [vmem:[%s4 + $0x34] sm:$0xf]
        %v3357 = vld [vmem:[%s4 + $0x38] sm:$0xf]
        %v3358 = vld [vmem:[%s4 + $0x3c] sm:$0xf]
        %v3359 = vld [vmem:[%s4 + $0x40] sm:$0xf]
        %v3360 = vld [vmem:[%s4 + $0x44] sm:$0xf]
        %v3361 = vld [vmem:[%s4 + $0x48] sm:$0xf]
        %v3362 = vld [vmem:[%s4 + $0x4c] sm:$0xf]
        %v3363 = vld [vmem:[%s4 + $0x50] sm:$0xf]
        %v3364 = vld [vmem:[%s4 + $0x54] sm:$0xf]
        %v3365 = vld [vmem:[%s4 + $0x58] sm:$0xf]
        %v3366 = vld [vmem:[%s4 + $0x5c] sm:$0xf]
        %v3367 = vld [vmem:[%s4 + $0x60] sm:$0xf]
        %v3368 = vld [vmem:[%s4 + $0x64] sm:$0xf]
        %v3369 = vld [vmem:[%s4 + $0x68] sm:$0xf]
        %v3370 = vld [vmem:[%s4 + $0x6c] sm:$0xf]
        %v3371 = vld [vmem:[%s4 + $0x70] sm:$0xf]
        %v3372 = vld [vmem:[%s4 + $0x74] sm:$0xf]
        %v3373 = vld [vmem:[%s4 + $0x78] sm:$0xf]
        %v3374 = vld [vmem:[%s4 + $0x7c] sm:$0xf]
        %v3375 = vld [vmem:[%s4 + $0x80] sm:$0xf]
        %v3376 = vld [vmem:[%s4 + $0x84] sm:$0xf]
        %v3377 = vld [vmem:[%s4 + $0x88] sm:$0xf]
        %v3378 = vld [vmem:[%s4 + $0x8c] sm:$0xf]
        %v3379 = vld [vmem:[%s4 + $0x90] sm:$0xf]
        %v3380 = vld [vmem:[%s4 + $0x94] sm:$0xf]
        %v3381 = vld [vmem:[%s4 + $0x98] sm:$0xf]
        %v3382 = vld [vmem:[%s4 + $0x9c] sm:$0xf]
        %v3383 = vld [vmem:[%s4 + $0xa0] sm:$0xf]
        %v3384 = vld [vmem:[%s4 + $0xa4] sm:$0xf]
        %v3385 = vld [vmem:[%s4 + $0xa8] sm:$0xf]
        %v3386 = vld [vmem:[%s4 + $0xac] sm:$0xf]
        %v3387 = vld [vmem:[%s4 + $0xb0] sm:$0xf]
        %v3388 = vld [vmem:[%s4 + $0xb4] sm:$0xf]
        %v3389 = vld [vmem:[%s4 + $0xb8] sm:$0xf]
        %v3390 = vld [vmem:[%s4 + $0xbc] sm:$0xf]
        %v3391 = vld [vmem:[%s4 + $0xc0] sm:$0xf]
        %v3392 = vld [vmem:[%s4 + $0xc4] sm:$0xf]
        %v3393 = vld [vmem:[%s4 + $0xc8] sm:$0xf]
        %v3394 = vld [vmem:[%s4 + $0xcc] sm:$0xf]
        %v3395 = vld [vmem:[%s4 + $0xd0] sm:$0xf]
        %v3396 = vld [vmem:[%s4 + $0xd4] sm:$0xf]
        %v3397 = vld [vmem:[%s4 + $0xd8] sm:$0xf]
        %v3398 = vld [vmem:[%s4 + $0xdc] sm:$0xf]
        %v3399 = vld [vmem:[%s4 + $0xe0] sm:$0xf]
        %v3400 = vld [vmem:[%s4 + $0xe4] sm:$0xf]
        %v3401 = vld [vmem:[%s4 + $0xe8] sm:$0xf]
        %v3402 = vld [vmem:[%s4 + $0xec] sm:$0xf]
        %v3403 = vld [vmem:[%s4 + $0xf0] sm:$0xf]
        %v3404 = vld [vmem:[%s4 + $0xf4] sm:$0xf]
        %v3405 = vld [vmem:[%s4 + $0xf8] sm:$0xf]
        %v3406 = vld [vmem:[%s4 + $0xfc] sm:$0xf]
        %v3407 = vld [vmem:[%s4 + $0x100] sm:$0xf]
        %v3408 = vld [vmem:[%s4 + $0x104] sm:$0xf]
        %v3409 = vld [vmem:[%s4 + $0x108] sm:$0xf]
        %v3410 = vld [vmem:[%s4 + $0x10c] sm:$0xf]
        %v3411 = vld [vmem:[%s4 + $0x110] sm:$0xf]
        %v3412 = vld [vmem:[%s4 + $0x114] sm:$0xf]
        %v3413 = vld [vmem:[%s4 + $0x118] sm:$0xf]
        %v3414 = vld [vmem:[%s4 + $0x11c] sm:$0xf]
        %v3415 = vld [vmem:[%s5] sm:$0x1]
        %v3417 = vlaneseq
        %v3418 = vshrl.u32 %v3417, 7
        %v3419 = vsub.s32 0, %v3418
        %v3420 = vrot.slane %v3415, %v3419
        %v3494 = vunpack.c.l.b16 %v3343
        %v3495 = vunpack.c.l.b16 %v3344
        %v3496 = vunpack.c.l.b16 %v3345
        %v3497 = vunpack.c.l.b16 %v3346
        %v3498 = vunpack.c.l.b16 %v3347
        %v3499 = vunpack.c.l.b16 %v3348
        %v3500 = vunpack.c.l.b16 %v3349
        %v3501 = vunpack.c.l.b16 %v3350
        %v3502 = vunpack.c.l.b16 %v3351
        %v3503 = vunpack.c.l.b16 %v3352
        %v3504 = vunpack.c.l.b16 %v3353
        %v3505 = vunpack.c.l.b16 %v3354
        %v3506 = vunpack.c.l.b16 %v3355
        %v3507 = vunpack.c.l.b16 %v3356
        %v3508 = vunpack.c.l.b16 %v3357
        %v3509 = vunpack.c.l.b16 %v3358
        %v3510 = vunpack.c.l.b16 %v3359
        %v3511 = vunpack.c.l.b16 %v3360
        %v3512 = vunpack.c.l.b16 %v3361
        %v3513 = vunpack.c.l.b16 %v3362
        %v3514 = vunpack.c.l.b16 %v3363
        %v3515 = vunpack.c.l.b16 %v3364
        %v3516 = vunpack.c.l.b16 %v3365
        %v3517 = vunpack.c.l.b16 %v3366
        %v3518 = vunpack.c.l.b16 %v3367
        %v3519 = vunpack.c.l.b16 %v3368
        %v3520 = vunpack.c.l.b16 %v3369
        %v3521 = vunpack.c.l.b16 %v3370
        %v3522 = vunpack.c.l.b16 %v3371
        %v3523 = vunpack.c.l.b16 %v3372
        %v3524 = vunpack.c.l.b16 %v3373
        %v3525 = vunpack.c.l.b16 %v3374
        %v3526 = vunpack.c.l.b16 %v3375
        %v3527 = vunpack.c.l.b16 %v3376
        %v3528 = vunpack.c.l.b16 %v3377
        %v3529 = vunpack.c.l.b16 %v3378
        %v3530 = vunpack.c.l.b16 %v3379
        %v3531 = vunpack.c.l.b16 %v3380
        %v3532 = vunpack.c.l.b16 %v3381
        %v3533 = vunpack.c.l.b16 %v3382
        %v3534 = vunpack.c.l.b16 %v3383
        %v3535 = vunpack.c.l.b16 %v3384
        %v3536 = vunpack.c.l.b16 %v3385
        %v3537 = vunpack.c.l.b16 %v3386
        %v3538 = vunpack.c.l.b16 %v3387
        %v3539 = vunpack.c.l.b16 %v3388
        %v3540 = vunpack.c.l.b16 %v3389
        %v3541 = vunpack.c.l.b16 %v3390
        %v3542 = vunpack.c.l.b16 %v3391
        %v3543 = vunpack.c.l.b16 %v3392
        %v3544 = vunpack.c.l.b16 %v3393
        %v3545 = vunpack.c.l.b16 %v3394
        %v3546 = vunpack.c.l.b16 %v3395
        %v3547 = vunpack.c.l.b16 %v3396
        %v3548 = vunpack.c.l.b16 %v3397
        %v3549 = vunpack.c.l.b16 %v3398
        %v3550 = vunpack.c.l.b16 %v3399
        %v3551 = vunpack.c.l.b16 %v3400
        %v3552 = vunpack.c.l.b16 %v3401
        %v3553 = vunpack.c.l.b16 %v3402
        %v3554 = vunpack.c.l.b16 %v3403
        %v3555 = vunpack.c.l.b16 %v3404
        %v3556 = vunpack.c.l.b16 %v3405
        %v3557 = vunpack.c.l.b16 %v3406
        %v3558 = vunpack.c.l.b16 %v3407
        %v3559 = vunpack.c.l.b16 %v3408
        %v3560 = vunpack.c.l.b16 %v3409
        %v3561 = vunpack.c.l.b16 %v3410
        %v3562 = vunpack.c.l.b16 %v3411
        %v3563 = vunpack.c.l.b16 %v3412
        %v3564 = vunpack.c.l.b16 %v3413
        %v3565 = vunpack.c.l.b16 %v3414
        %v3566 = vpack.c.b16 %v3495, %v3494
        %v3567 = vpack.c.b16 %v3497, %v3496
        %v3568 = vpack.c.b16 %v3499, %v3498
        %v3569 = vpack.c.b16 %v3501, %v3500
        %v3570 = vpack.c.b16 %v3503, %v3502
        %v3571 = vpack.c.b16 %v3505, %v3504
        %v3572 = vpack.c.b16 %v3507, %v3506
        %v3573 = vpack.c.b16 %v3509, %v3508
        %v3574 = vpack.c.b16 %v3511, %v3510
        %v3575 = vpack.c.b16 %v3513, %v3512
        %v3576 = vpack.c.b16 %v3515, %v3514
        %v3577 = vpack.c.b16 %v3517, %v3516
        %v3578 = vpack.c.b16 %v3519, %v3518
        %v3579 = vpack.c.b16 %v3521, %v3520
        %v3580 = vpack.c.b16 %v3523, %v3522
        %v3581 = vpack.c.b16 %v3525, %v3524
        %v3582 = vpack.c.b16 %v3527, %v3526
        %v3583 = vpack.c.b16 %v3529, %v3528
        %v3584 = vpack.c.b16 %v3531, %v3530
        %v3585 = vpack.c.b16 %v3533, %v3532
        %v3586 = vpack.c.b16 %v3535, %v3534
        %v3587 = vpack.c.b16 %v3537, %v3536
        %v3588 = vpack.c.b16 %v3539, %v3538
        %v3589 = vpack.c.b16 %v3541, %v3540
        %v3590 = vpack.c.b16 %v3543, %v3542
        %v3591 = vpack.c.b16 %v3545, %v3544
        %v3592 = vpack.c.b16 %v3547, %v3546
        %v3593 = vpack.c.b16 %v3549, %v3548
        %v3594 = vpack.c.b16 %v3551, %v3550
        %v3595 = vpack.c.b16 %v3553, %v3552
        %v3596 = vpack.c.b16 %v3555, %v3554
        %v3597 = vpack.c.b16 %v3557, %v3556
        %v3598 = vpack.c.b16 %v3559, %v3558
        %v3599 = vpack.c.b16 %v3561, %v3560
        %v3600 = vpack.c.b16 %v3563, %v3562
        %v3601 = vpack.c.b16 %v3565, %v3564
        %v3639 = vsel %vm3214, %v3206, 0
        %v3642 = vsel %vm3214, %v3207, 0
        %v3645 = vsel %vm3214, %v3208, 0
        %v3648 = vsel %vm3214, %v3209, 0
        %v3651 = vsel %vm3214, %v3210, 0
        %v3654 = vsel %vm3214, %v3211, 0
        %v3657 = vsel %vm3214, %v3212, 0
        %v3660 = vsel %vm3214, %v3213, 0
        %3662 = vmatprep.subr.bf16.mxu0 0
        %3663 = vmatpush1.bf16.msra.mxu0 %v3573
        %3664 = vmatprep.subr.bf16.mxu0 0
        %3665 = vmatpush1.bf16.msra.mxu0 %v3572
        %3666 = vmatprep.subr.bf16.mxu0 0
        %3667 = vmatpush1.bf16.msra.mxu0 %v3571
        %3668 = vmatprep.subr.bf16.mxu0 0
        %3669 = vmatpush1.bf16.msra.mxu0 %v3570
        %3670 = vmatprep.subr.bf16.mxu0 0
        %3671 = vmatpush1.bf16.msra.mxu0 %v3569
        %3672 = vmatprep.subr.bf16.mxu0 0
        %3673 = vmatpush1.bf16.msra.mxu0 %v3568
        %3674 = vmatprep.subr.bf16.mxu0 0
        %3675 = vmatpush1.bf16.msra.mxu0 %v3567
        %3676 = vmatprep.subr.bf16.mxu0 0
        %3677 = vmatpush1.bf16.msra.mxu0 %v3566
        %3678 = vmatprep.subr.bf16.mxu0 0
        %3679 = vmatpush2.bf16.msra.mxu0 %v3581
        %3680 = vmatprep.subr.bf16.mxu0 0
        %3681 = vmatpush2.bf16.msra.mxu0 %v3580
        %3682 = vmatprep.subr.bf16.mxu0 0
        %3683 = vmatpush2.bf16.msra.mxu0 %v3579
        %3684 = vmatprep.subr.bf16.mxu0 0
        %3685 = vmatpush2.bf16.msra.mxu0 %v3578
        %3686 = vmatprep.subr.bf16.mxu0 0
        %3687 = vmatpush2.bf16.msra.mxu0 %v3577
        %3688 = vmatprep.subr.bf16.mxu0 0
        %3689 = vmatpush2.bf16.msra.mxu0 %v3576
        %3690 = vmatprep.subr.bf16.mxu0 0
        %3691 = vmatpush2.bf16.msra.mxu0 %v3575
        %3692 = vmatprep.subr.bf16.mxu0 0
        %3693 = vmatpush2.bf16.msra.mxu0 %v3574
        %3694 = vmatprep.mubr.bf16.mxu0 %v3249
        %3695 = vmatmul.mubr.bf16.gmra.mxu0 %v3217
        %v3696 = vpop.f32.mrf.mxu0
        %v3697 = vadd.f32 %v3420, %v3696
        %v3698 = vpop.f32.mrf.mxu0
        %v3699 = vpop.f32.mrf.mxu0
        %v3700 = vadd.f32 %v3420, %v3699
        %v3701 = vpop.f32.mrf.mxu0
        %3702 = vmatprep.mubr.bf16.mxu0 %v3253
        %3703 = vmatmul.mubr.bf16.gmra.mxu0 %v3221
        %v3704 = vpop.f32.mrf.mxu0
        %v3705 = vadd.f32 %v3420, %v3704
        %v3706 = vpop.f32.mrf.mxu0
        %v3707 = vpop.f32.mrf.mxu0
        %v3708 = vadd.f32 %v3420, %v3707
        %v3709 = vpop.f32.mrf.mxu0
        %3710 = vmatprep.mubr.bf16.mxu0 %v3257
        %3711 = vmatmul.mubr.bf16.gmra.mxu0 %v3225
        %v3712 = vpop.f32.mrf.mxu0
        %v3713 = vadd.f32 %v3420, %v3712
        %v3714 = vpop.f32.mrf.mxu0
        %v3715 = vpop.f32.mrf.mxu0
        %v3716 = vadd.f32 %v3420, %v3715
        %v3717 = vpop.f32.mrf.mxu0
        %3718 = vmatprep.mubr.bf16.mxu0 %v3261
        %3719 = vmatmul.mubr.bf16.gmra.mxu0 %v3229
        %v3720 = vpop.f32.mrf.mxu0
        %v3721 = vadd.f32 %v3420, %v3720
        %v3722 = vpop.f32.mrf.mxu0
        %v3723 = vpop.f32.mrf.mxu0
        %v3724 = vadd.f32 %v3420, %v3723
        %v3725 = vpop.f32.mrf.mxu0
        %3726 = vmatprep.mubr.bf16.mxu0 %v3265
        %3727 = vmatmul.mubr.bf16.gmra.mxu0 %v3233
        %v3728 = vpop.f32.mrf.mxu0
        %v3729 = vadd.f32 %v3420, %v3728
        %v3730 = vpop.f32.mrf.mxu0
        %v3731 = vpop.f32.mrf.mxu0
        %v3732 = vadd.f32 %v3420, %v3731
        %v3733 = vpop.f32.mrf.mxu0
        %3734 = vmatprep.mubr.bf16.mxu0 %v3269
        %3735 = vmatmul.mubr.bf16.gmra.mxu0 %v3237
        %v3736 = vpop.f32.mrf.mxu0
        %v3737 = vadd.f32 %v3420, %v3736
        %v3738 = vpop.f32.mrf.mxu0
        %v3739 = vpop.f32.mrf.mxu0
        %v3740 = vadd.f32 %v3420, %v3739
        %v3741 = vpop.f32.mrf.mxu0
        %3742 = vmatprep.mubr.bf16.mxu0 %v3273
        %3743 = vmatmul.mubr.bf16.gmra.mxu0 %v3241
        %v3744 = vpop.f32.mrf.mxu0
        %v3745 = vadd.f32 %v3420, %v3744
        %v3746 = vpop.f32.mrf.mxu0
        %v3747 = vpop.f32.mrf.mxu0
        %v3748 = vadd.f32 %v3420, %v3747
        %v3749 = vpop.f32.mrf.mxu0
        %3750 = vmatprep.mubr.bf16.mxu0 %v3277
        %3751 = vmatmul.mubr.bf16.gmra.mxu0 %v3245
        %v3752 = vpop.f32.mrf.mxu0
        %v3753 = vadd.f32 %v3420, %v3752
        %v3754 = vpop.f32.mrf.mxu0
        %v3755 = vpop.f32.mrf.mxu0
        %v3756 = vadd.f32 %v3420, %v3755
        %v3757 = vpop.f32.mrf.mxu0
        %3758 = vdwg.mxu0
        %3759 = vmatprep.subr.bf16.mxu0 0
        %3760 = vmatpush1.bf16.msra.mxu0 %v3589
        %3761 = vmatprep.subr.bf16.mxu0 0
        %3762 = vmatpush1.bf16.msra.mxu0 %v3588
        %3763 = vmatprep.subr.bf16.mxu0 0
        %3764 = vmatpush1.bf16.msra.mxu0 %v3587
        %3765 = vmatprep.subr.bf16.mxu0 0
        %3766 = vmatpush1.bf16.msra.mxu0 %v3586
        %3767 = vmatprep.subr.bf16.mxu0 0
        %3768 = vmatpush1.bf16.msra.mxu0 %v3585
        %3769 = vmatprep.subr.bf16.mxu0 0
        %3770 = vmatpush1.bf16.msra.mxu0 %v3584
        %3771 = vmatprep.subr.bf16.mxu0 0
        %3772 = vmatpush1.bf16.msra.mxu0 %v3583
        %3773 = vmatprep.subr.bf16.mxu0 0
        %3774 = vmatpush1.bf16.msra.mxu0 %v3582
        %3775 = vmatprep.subr.bf16.mxu0 0
        %3776 = vmatpush2.bf16.msra.mxu0 %v3597
        %3777 = vmatprep.subr.bf16.mxu0 0
        %3778 = vmatpush2.bf16.msra.mxu0 %v3596
        %3779 = vmatprep.subr.bf16.mxu0 0
        %3780 = vmatpush2.bf16.msra.mxu0 %v3595
        %3781 = vmatprep.subr.bf16.mxu0 0
        %3782 = vmatpush2.bf16.msra.mxu0 %v3594
        %3783 = vmatprep.subr.bf16.mxu0 0
        %3784 = vmatpush2.bf16.msra.mxu0 %v3593
        %3785 = vmatprep.subr.bf16.mxu0 0
        %3786 = vmatpush2.bf16.msra.mxu0 %v3592
        %3787 = vmatprep.subr.bf16.mxu0 0
        %3788 = vmatpush2.bf16.msra.mxu0 %v3591
        %3789 = vmatprep.subr.bf16.mxu0 0
        %3790 = vmatpush2.bf16.msra.mxu0 %v3590
        %3791 = vmatprep.mubr.bf16.mxu0 %v3313
        %3792 = vmatmul.mubr.bf16.gmra.mxu0 %v3281
        %v3793 = vpop.f32.mrf.mxu0
        %v3794 = vadd.f32 %v3697, %v3793
        %v3795 = vpop.f32.mrf.mxu0
        %v3796 = vpop.f32.mrf.mxu0
        %v3797 = vadd.f32 %v3700, %v3796
        %v3798 = vpop.f32.mrf.mxu0
        %3799 = vmatprep.mubr.bf16.mxu0 %v3317
        %3800 = vmatmul.mubr.bf16.gmra.mxu0 %v3285
        %v3801 = vpop.f32.mrf.mxu0
        %v3802 = vadd.f32 %v3705, %v3801
        %v3803 = vpop.f32.mrf.mxu0
        %v3804 = vpop.f32.mrf.mxu0
        %v3805 = vadd.f32 %v3708, %v3804
        %v3806 = vpop.f32.mrf.mxu0
        %3807 = vmatprep.mubr.bf16.mxu0 %v3321
        %3808 = vmatmul.mubr.bf16.gmra.mxu0 %v3289
        %v3809 = vpop.f32.mrf.mxu0
        %v3810 = vadd.f32 %v3713, %v3809
        %v3811 = vpop.f32.mrf.mxu0
        %v3812 = vpop.f32.mrf.mxu0
        %v3813 = vadd.f32 %v3716, %v3812
        %v3814 = vpop.f32.mrf.mxu0
        %3815 = vmatprep.mubr.bf16.mxu0 %v3325
        %3816 = vmatmul.mubr.bf16.gmra.mxu0 %v3293
        %v3817 = vpop.f32.mrf.mxu0
        %v3818 = vadd.f32 %v3721, %v3817
        %v3819 = vpop.f32.mrf.mxu0
        %v3820 = vpop.f32.mrf.mxu0
        %v3821 = vadd.f32 %v3724, %v3820
        %v3822 = vpop.f32.mrf.mxu0
        %3823 = vmatprep.mubr.bf16.mxu0 %v3329
        %3824 = vmatmul.mubr.bf16.gmra.mxu0 %v3297
        %v3825 = vpop.f32.mrf.mxu0
        %v3826 = vadd.f32 %v3729, %v3825
        %v3827 = vpop.f32.mrf.mxu0
        %v3828 = vpop.f32.mrf.mxu0
        %v3829 = vadd.f32 %v3732, %v3828
        %v3830 = vpop.f32.mrf.mxu0
        %3831 = vmatprep.mubr.bf16.mxu0 %v3333
        %3832 = vmatmul.mubr.bf16.gmra.mxu0 %v3301
        %v3833 = vpop.f32.mrf.mxu0
        %v3834 = vadd.f32 %v3737, %v3833
        %v3835 = vpop.f32.mrf.mxu0
        %v3836 = vpop.f32.mrf.mxu0
        %v3837 = vadd.f32 %v3740, %v3836
        %v3838 = vpop.f32.mrf.mxu0
        %3839 = vmatprep.mubr.bf16.mxu0 %v3337
        %3840 = vmatmul.mubr.bf16.gmra.mxu0 %v3305
        %v3841 = vpop.f32.mrf.mxu0
        %v3842 = vadd.f32 %v3745, %v3841
        %v3843 = vpop.f32.mrf.mxu0
        %v3844 = vpop.f32.mrf.mxu0
        %v3845 = vadd.f32 %v3748, %v3844
        %v3846 = vpop.f32.mrf.mxu0
        %3847 = vmatprep.mubr.bf16.mxu0 %v3341
        %3848 = vmatmul.mubr.bf16.gmra.mxu0 %v3309
        %v3849 = vpop.f32.mrf.mxu0
        %v3850 = vadd.f32 %v3753, %v3849
        %v3851 = vpop.f32.mrf.mxu0
        %v3852 = vpop.f32.mrf.mxu0
        %v3853 = vadd.f32 %v3756, %v3852
        %v3854 = vpop.f32.mrf.mxu0
        %3855 = vdwg.mxu0
        %3856 = vmatprep.subr.bf16.mxu0 0
        %3857 = vmatpush1.bf16.msra.mxu0 0
        %3858 = vmatprep.subr.bf16.mxu0 0
        %3859 = vmatpush1.bf16.msra.mxu0 0
        %3860 = vmatprep.subr.bf16.mxu0 0
        %3861 = vmatpush1.bf16.msra.mxu0 0
        %3862 = vmatprep.subr.bf16.mxu0 0
        %3863 = vmatpush1.bf16.msra.mxu0 0
        %3864 = vmatprep.subr.bf16.mxu0 0
        %3865 = vmatpush1.bf16.msra.mxu0 %v3601
        %3866 = vmatprep.subr.bf16.mxu0 0
        %3867 = vmatpush1.bf16.msra.mxu0 %v3600
        %3868 = vmatprep.subr.bf16.mxu0 0
        %3869 = vmatpush1.bf16.msra.mxu0 %v3599
        %3870 = vmatprep.subr.bf16.mxu0 0
        %3871 = vmatpush1.bf16.msra.mxu0 %v3598
        %3872 = vmatprep.subr.bf16.mxu0 0
        %3873 = vmatpush2.bf16.msra.mxu0 0
        %3874 = vmatprep.subr.bf16.mxu0 0
        %3875 = vmatpush2.bf16.msra.mxu0 0
        %3876 = vmatprep.subr.bf16.mxu0 0
        %3877 = vmatpush2.bf16.msra.mxu0 0
        %3878 = vmatprep.subr.bf16.mxu0 0
        %3879 = vmatpush2.bf16.msra.mxu0 0
        %3880 = vmatprep.subr.bf16.mxu0 0
        %3881 = vmatpush2.bf16.msra.mxu0 0
        %3882 = vmatprep.subr.bf16.mxu0 0
        %3883 = vmatpush2.bf16.msra.mxu0 0
        %3884 = vmatprep.subr.bf16.mxu0 0
        %3885 = vmatpush2.bf16.msra.mxu0 0
        %3886 = vmatprep.subr.bf16.mxu0 0
        %3887 = vmatpush2.bf16.msra.mxu0 0
        %3888 = vmatprep.mubr.bf16.mxu0 0
        %3889 = vmatmul.mubr.bf16.gmra.mxu0 %v3639
        %v3890 = vpop.f32.mrf.mxu0
        %v3891 = vadd.f32 %v3794, %v3890
        %v3892 = vpop.f32.mrf.mxu0
        %v3893 = vpop.f32.mrf.mxu0
        %v3894 = vadd.f32 %v3797, %v3893
        %v3895 = vpop.f32.mrf.mxu0
        %3896 = vmatprep.mubr.bf16.mxu0 0
        %3897 = vmatmul.mubr.bf16.gmra.mxu0 %v3642
        %v3898 = vpop.f32.mrf.mxu0
        %v3899 = vadd.f32 %v3802, %v3898
        %v3900 = vpop.f32.mrf.mxu0
        %v3901 = vpop.f32.mrf.mxu0
        %v3902 = vadd.f32 %v3805, %v3901
        %v3903 = vpop.f32.mrf.mxu0
        %3904 = vmatprep.mubr.bf16.mxu0 0
        %3905 = vmatmul.mubr.bf16.gmra.mxu0 %v3645
        %v3906 = vpop.f32.mrf.mxu0
        %v3907 = vadd.f32 %v3810, %v3906
        %v3908 = vpop.f32.mrf.mxu0
        %v3909 = vpop.f32.mrf.mxu0
        %v3910 = vadd.f32 %v3813, %v3909
        %v3911 = vpop.f32.mrf.mxu0
        %3912 = vmatprep.mubr.bf16.mxu0 0
        %3913 = vmatmul.mubr.bf16.gmra.mxu0 %v3648
        %v3914 = vpop.f32.mrf.mxu0
        %v3915 = vadd.f32 %v3818, %v3914
        %v3916 = vpop.f32.mrf.mxu0
        %v3917 = vpop.f32.mrf.mxu0
        %v3918 = vadd.f32 %v3821, %v3917
        %v3919 = vpop.f32.mrf.mxu0
        %3920 = vmatprep.mubr.bf16.mxu0 0
        %3921 = vmatmul.mubr.bf16.gmra.mxu0 %v3651
        %v3922 = vpop.f32.mrf.mxu0
        %v3923 = vadd.f32 %v3826, %v3922
        %v3924 = vpop.f32.mrf.mxu0
        %v3925 = vpop.f32.mrf.mxu0
        %v3926 = vadd.f32 %v3829, %v3925
        %v3927 = vpop.f32.mrf.mxu0
        %3928 = vmatprep.mubr.bf16.mxu0 0
        %3929 = vmatmul.mubr.bf16.gmra.mxu0 %v3654
        %v3930 = vpop.f32.mrf.mxu0
        %v3931 = vadd.f32 %v3834, %v3930
        %v3932 = vpop.f32.mrf.mxu0
        %v3933 = vpop.f32.mrf.mxu0
        %v3934 = vadd.f32 %v3837, %v3933
        %v3935 = vpop.f32.mrf.mxu0
        %3936 = vmatprep.mubr.bf16.mxu0 0
        %3937 = vmatmul.mubr.bf16.gmra.mxu0 %v3657
        %v3938 = vpop.f32.mrf.mxu0
        %v3939 = vadd.f32 %v3842, %v3938
        %v3940 = vpop.f32.mrf.mxu0
        %v3941 = vpop.f32.mrf.mxu0
        %v3942 = vadd.f32 %v3845, %v3941
        %v3943 = vpop.f32.mrf.mxu0
        %3944 = vmatprep.mubr.bf16.mxu0 0
        %3945 = vmatmul.mubr.bf16.gmra.mxu0 %v3660
        %v3946 = vpop.f32.mrf.mxu0
        %v3947 = vadd.f32 %v3850, %v3946
        %v3948 = vpop.f32.mrf.mxu0
        %v3949 = vpop.f32.mrf.mxu0
        %v3950 = vadd.f32 %v3853, %v3949
        %v3951 = vpop.f32.mrf.mxu0
        %3952 = vdwg.mxu0
        %v3953 = vxor.u32 %v3891, 2147483648
        %v3954 = vxor.u32 %v3894, 2147483648
        %v3955 = vxor.u32 %v3899, 2147483648
        %v3956 = vxor.u32 %v3902, 2147483648
        %v3957 = vxor.u32 %v3907, 2147483648
        %v3958 = vxor.u32 %v3910, 2147483648
        %v3959 = vxor.u32 %v3915, 2147483648
        %v3960 = vxor.u32 %v3918, 2147483648
        %v3961 = vxor.u32 %v3923, 2147483648
        %v3962 = vxor.u32 %v3926, 2147483648
        %v3963 = vxor.u32 %v3931, 2147483648
        %v3964 = vxor.u32 %v3934, 2147483648
        %v3965 = vxor.u32 %v3939, 2147483648
        %v3966 = vxor.u32 %v3942, 2147483648
        %v3967 = vxor.u32 %v3947, 2147483648
        %v3968 = vxor.u32 %v3950, 2147483648
        %v3969 = vmul.f32 %v3953, 1.442695
        %v3970 = vpow.pop %v3969
        %v3971 = vmul.f32 %v3954, 1.442695
        %v3972 = vpow.pop %v3971
        %v3973 = vmul.f32 %v3955, 1.442695
        %v3974 = vpow.pop %v3973
        %v3975 = vmul.f32 %v3956, 1.442695
        %v3976 = vpow.pop %v3975
        %v3977 = vmul.f32 %v3957, 1.442695
        %v3978 = vpow.pop %v3977
        %v3979 = vmul.f32 %v3958, 1.442695
        %v3980 = vpow.pop %v3979
        %v3981 = vmul.f32 %v3959, 1.442695
        %v3982 = vpow.pop %v3981
        %v3983 = vmul.f32 %v3960, 1.442695
        %v3984 = vpow.pop %v3983
        %v3985 = vmul.f32 %v3961, 1.442695
        %v3986 = vpow.pop %v3985
        %v3987 = vmul.f32 %v3962, 1.442695
        %v3988 = vpow.pop %v3987
        %v3989 = vmul.f32 %v3963, 1.442695
        %v3990 = vpow.pop %v3989
        %v3991 = vmul.f32 %v3964, 1.442695
        %v3992 = vpow.pop %v3991
        %v3993 = vmul.f32 %v3965, 1.442695
        %v3994 = vpow.pop %v3993
        %v3995 = vmul.f32 %v3966, 1.442695
        %v3996 = vpow.pop %v3995
        %v3997 = vmul.f32 %v3967, 1.442695
        %v3998 = vpow.pop %v3997
        %v3999 = vmul.f32 %v3968, 1.442695
        %v4000 = vpow.pop %v3999
        %v4001 = vadd.f32 %v3970, 1.0
        %v4002 = vadd.f32 %v3972, 1.0
        %v4003 = vadd.f32 %v3974, 1.0
        %v4004 = vadd.f32 %v3976, 1.0
        %v4005 = vadd.f32 %v3978, 1.0
        %v4006 = vadd.f32 %v3980, 1.0
        %v4007 = vadd.f32 %v3982, 1.0
        %v4008 = vadd.f32 %v3984, 1.0
        %v4009 = vadd.f32 %v3986, 1.0
        %v4010 = vadd.f32 %v3988, 1.0
        %v4011 = vadd.f32 %v3990, 1.0
        %v4012 = vadd.f32 %v3992, 1.0
        %v4013 = vadd.f32 %v3994, 1.0
        %v4014 = vadd.f32 %v3996, 1.0
        %v4015 = vadd.f32 %v3998, 1.0
        %v4016 = vadd.f32 %v4000, 1.0
        %v4017 = vrcp.pop %v4001
        %v4018 = vmul.f32 1.0, %v4017
        %v4019 = vrcp.pop %v4002
        %v4020 = vmul.f32 1.0, %v4019
        %v4021 = vrcp.pop %v4003
        %v4022 = vmul.f32 1.0, %v4021
        %v4023 = vrcp.pop %v4004
        %v4024 = vmul.f32 1.0, %v4023
        %v4025 = vrcp.pop %v4005
        %v4026 = vmul.f32 1.0, %v4025
        %v4027 = vrcp.pop %v4006
        %v4028 = vmul.f32 1.0, %v4027
        %v4029 = vrcp.pop %v4007
        %v4030 = vmul.f32 1.0, %v4029
        %v4031 = vrcp.pop %v4008
        %v4032 = vmul.f32 1.0, %v4031
        %v4033 = vrcp.pop %v4009
        %v4034 = vmul.f32 1.0, %v4033
        %v4035 = vrcp.pop %v4010
        %v4036 = vmul.f32 1.0, %v4035
        %v4037 = vrcp.pop %v4011
        %v4038 = vmul.f32 1.0, %v4037
        %v4039 = vrcp.pop %v4012
        %v4040 = vmul.f32 1.0, %v4039
        %v4041 = vrcp.pop %v4013
        %v4042 = vmul.f32 1.0, %v4041
        %v4043 = vrcp.pop %v4014
        %v4044 = vmul.f32 1.0, %v4043
        %v4045 = vrcp.pop %v4015
        %v4046 = vmul.f32 1.0, %v4045
        %v4047 = vrcp.pop %v4016
        %v4048 = vmul.f32 1.0, %v4047
        %v4049 = vtanh.pop %v3891
        %v4050 = vtanh.pop %v3894
        %v4051 = vtanh.pop %v3899
        %v4052 = vtanh.pop %v3902
        %v4053 = vtanh.pop %v3907
        %v4054 = vtanh.pop %v3910
        %v4055 = vtanh.pop %v3915
        %v4056 = vtanh.pop %v3918
        %v4057 = vtanh.pop %v3923
        %v4058 = vtanh.pop %v3926
        %v4059 = vtanh.pop %v3931
        %v4060 = vtanh.pop %v3934
        %v4061 = vtanh.pop %v3939
        %v4062 = vtanh.pop %v3942
        %v4063 = vtanh.pop %v3947
        %v4064 = vtanh.pop %v3950
        %v4065 = vld [vmem:[%s363] sm:$0xff]
        %v4066 = vld [vmem:[%s363 + $0x8] sm:$0xff]
        %v4067 = vld [vmem:[%s363 + $0x10] sm:$0xff]
        %v4068 = vld [vmem:[%s363 + $0x18] sm:$0xff]
        %v4069 = vld [vmem:[%s363 + $0x20] sm:$0xff]
        %v4070 = vld [vmem:[%s363 + $0x28] sm:$0xff]
        %v4071 = vld [vmem:[%s363 + $0x30] sm:$0xff]
        %v4072 = vld [vmem:[%s363 + $0x38] sm:$0xff]
        %v4073 = vld [vmem:[%s363 + $0x40] sm:$0xff]
        %v4074 = vld [vmem:[%s363 + $0x48] sm:$0xff]
        %v4075 = vld [vmem:[%s363 + $0x50] sm:$0xff]
        %v4076 = vld [vmem:[%s363 + $0x58] sm:$0xff]
        %v4077 = vld [vmem:[%s363 + $0x60] sm:$0xff]
        %v4078 = vld [vmem:[%s363 + $0x68] sm:$0xff]
        %v4079 = vld [vmem:[%s363 + $0x70] sm:$0xff]
        %v4080 = vld [vmem:[%s363 + $0x78] sm:$0xff]
        %4097 = vrot.lane.b32.xlu0 %v4065, 32
        %v4098 = vpop.permute.xlu0 %4097
        %4099 = vrot.lane.b32.xlu0 %v4066, 32
        %v4100 = vpop.permute.xlu0 %4099
        %4101 = vrot.lane.b32.xlu0 %v4067, 32
        %v4102 = vpop.permute.xlu0 %4101
        %4103 = vrot.lane.b32.xlu0 %v4068, 32
        %v4104 = vpop.permute.xlu0 %4103
        %4105 = vrot.lane.b32.xlu0 %v4069, 32
        %v4106 = vpop.permute.xlu0 %4105
        %4107 = vrot.lane.b32.xlu0 %v4070, 32
        %v4108 = vpop.permute.xlu0 %4107
        %4109 = vrot.lane.b32.xlu0 %v4071, 32
        %v4110 = vpop.permute.xlu0 %4109
        %4111 = vrot.lane.b32.xlu0 %v4072, 32
        %v4112 = vpop.permute.xlu0 %4111
        %4113 = vrot.lane.b32.xlu0 %v4073, 32
        %v4114 = vpop.permute.xlu0 %4113
        %4115 = vrot.lane.b32.xlu0 %v4074, 32
        %v4116 = vpop.permute.xlu0 %4115
        %4117 = vrot.lane.b32.xlu0 %v4075, 32
        %v4118 = vpop.permute.xlu0 %4117
        %4119 = vrot.lane.b32.xlu0 %v4076, 32
        %v4120 = vpop.permute.xlu0 %4119
        %4121 = vrot.lane.b32.xlu0 %v4077, 32
        %v4122 = vpop.permute.xlu0 %4121
        %4123 = vrot.lane.b32.xlu0 %v4078, 32
        %v4124 = vpop.permute.xlu0 %4123
        %4125 = vrot.lane.b32.xlu0 %v4079, 32
        %v4126 = vpop.permute.xlu0 %4125
        %4127 = vrot.lane.b32.xlu0 %v4080, 32
        %v4128 = vpop.permute.xlu0 %4127
        %v4145 = vmul.f32 %v4018, %v4098
        %v4146 = vmul.f32 %v4020, %v4100
        %v4147 = vmul.f32 %v4022, %v4102
        %v4148 = vmul.f32 %v4024, %v4104
        %v4149 = vmul.f32 %v4026, %v4106
        %v4150 = vmul.f32 %v4028, %v4108
        %v4151 = vmul.f32 %v4030, %v4110
        %v4152 = vmul.f32 %v4032, %v4112
        %v4153 = vmul.f32 %v4034, %v4114
        %v4154 = vmul.f32 %v4036, %v4116
        %v4155 = vmul.f32 %v4038, %v4118
        %v4156 = vmul.f32 %v4040, %v4120
        %v4157 = vmul.f32 %v4042, %v4122
        %v4158 = vmul.f32 %v4044, %v4124
        %v4159 = vmul.f32 %v4046, %v4126
        %v4160 = vmul.f32 %v4048, %v4128
        %4177 = vrot.lane.b32.xlu0 %v4049, 32
        %v4178 = vpop.permute.xlu0 %4177
        %4179 = vrot.lane.b32.xlu0 %v4050, 32
        %v4180 = vpop.permute.xlu0 %4179
        %4181 = vrot.lane.b32.xlu0 %v4051, 32
        %v4182 = vpop.permute.xlu0 %4181
        %4183 = vrot.lane.b32.xlu0 %v4052, 32
        %v4184 = vpop.permute.xlu0 %4183
        %4185 = vrot.lane.b32.xlu0 %v4053, 32
        %v4186 = vpop.permute.xlu0 %4185
        %4187 = vrot.lane.b32.xlu0 %v4054, 32
        %v4188 = vpop.permute.xlu0 %4187
        %4189 = vrot.lane.b32.xlu0 %v4055, 32
        %v4190 = vpop.permute.xlu0 %4189
        %4191 = vrot.lane.b32.xlu0 %v4056, 32
        %v4192 = vpop.permute.xlu0 %4191
        %4193 = vrot.lane.b32.xlu0 %v4057, 32
        %v4194 = vpop.permute.xlu0 %4193
        %4195 = vrot.lane.b32.xlu0 %v4058, 32
        %v4196 = vpop.permute.xlu0 %4195
        %4197 = vrot.lane.b32.xlu0 %v4059, 32
        %v4198 = vpop.permute.xlu0 %4197
        %4199 = vrot.lane.b32.xlu0 %v4060, 32
        %v4200 = vpop.permute.xlu0 %4199
        %4201 = vrot.lane.b32.xlu0 %v4061, 32
        %v4202 = vpop.permute.xlu0 %4201
        %4203 = vrot.lane.b32.xlu0 %v4062, 32
        %v4204 = vpop.permute.xlu0 %4203
        %4205 = vrot.lane.b32.xlu0 %v4063, 32
        %v4206 = vpop.permute.xlu0 %4205
        %4207 = vrot.lane.b32.xlu0 %v4064, 32
        %v4208 = vpop.permute.xlu0 %4207
        %v4225 = vmul.f32 %v4018, %v4178
        %v4226 = vmul.f32 %v4020, %v4180
        %v4227 = vmul.f32 %v4022, %v4182
        %v4228 = vmul.f32 %v4024, %v4184
        %v4229 = vmul.f32 %v4026, %v4186
        %v4230 = vmul.f32 %v4028, %v4188
        %v4231 = vmul.f32 %v4030, %v4190
        %v4232 = vmul.f32 %v4032, %v4192
        %v4233 = vmul.f32 %v4034, %v4194
        %v4234 = vmul.f32 %v4036, %v4196
        %v4235 = vmul.f32 %v4038, %v4198
        %v4236 = vmul.f32 %v4040, %v4200
        %v4237 = vmul.f32 %v4042, %v4202
        %v4238 = vmul.f32 %v4044, %v4204
        %v4239 = vmul.f32 %v4046, %v4206
        %v4240 = vmul.f32 %v4048, %v4208
        %4257 = vrot.lane.b32.xlu0 %v4225, 32
        %v4258 = vpop.permute.xlu0 %4257
        %4259 = vrot.lane.b32.xlu0 %v4226, 32
        %v4260 = vpop.permute.xlu0 %4259
        %4261 = vrot.lane.b32.xlu0 %v4227, 32
        %v4262 = vpop.permute.xlu0 %4261
        %4263 = vrot.lane.b32.xlu0 %v4228, 32
        %v4264 = vpop.permute.xlu0 %4263
        %4265 = vrot.lane.b32.xlu0 %v4229, 32
        %v4266 = vpop.permute.xlu0 %4265
        %4267 = vrot.lane.b32.xlu0 %v4230, 32
        %v4268 = vpop.permute.xlu0 %4267
        %4269 = vrot.lane.b32.xlu0 %v4231, 32
        %v4270 = vpop.permute.xlu0 %4269
        %4271 = vrot.lane.b32.xlu0 %v4232, 32
        %v4272 = vpop.permute.xlu0 %4271
        %4273 = vrot.lane.b32.xlu0 %v4233, 32
        %v4274 = vpop.permute.xlu0 %4273
        %4275 = vrot.lane.b32.xlu0 %v4234, 32
        %v4276 = vpop.permute.xlu0 %4275
        %4277 = vrot.lane.b32.xlu0 %v4235, 32
        %v4278 = vpop.permute.xlu0 %4277
        %4279 = vrot.lane.b32.xlu0 %v4236, 32
        %v4280 = vpop.permute.xlu0 %4279
        %4281 = vrot.lane.b32.xlu0 %v4237, 32
        %v4282 = vpop.permute.xlu0 %4281
        %4283 = vrot.lane.b32.xlu0 %v4238, 32
        %v4284 = vpop.permute.xlu0 %4283
        %4285 = vrot.lane.b32.xlu0 %v4239, 32
        %v4286 = vpop.permute.xlu0 %4285
        %4287 = vrot.lane.b32.xlu0 %v4240, 32
        %v4288 = vpop.permute.xlu0 %4287
        %v4305 = vadd.f32 %v4145, %v4258
        %v4306 = vadd.f32 %v4146, %v4260
        %v4307 = vadd.f32 %v4147, %v4262
        %v4308 = vadd.f32 %v4148, %v4264
        %v4309 = vadd.f32 %v4149, %v4266
        %v4310 = vadd.f32 %v4150, %v4268
        %v4311 = vadd.f32 %v4151, %v4270
        %v4312 = vadd.f32 %v4152, %v4272
        %v4313 = vadd.f32 %v4153, %v4274
        %v4314 = vadd.f32 %v4154, %v4276
        %v4315 = vadd.f32 %v4155, %v4278
        %v4316 = vadd.f32 %v4156, %v4280
        %v4317 = vadd.f32 %v4157, %v4282
        %v4318 = vadd.f32 %v4158, %v4284
        %v4319 = vadd.f32 %v4159, %v4286
        %v4320 = vadd.f32 %v4160, %v4288
        %v4321 = vtanh.pop %v4305
        %v4322 = vtanh.pop %v4306
        %v4323 = vtanh.pop %v4307
        %v4324 = vtanh.pop %v4308
        %v4325 = vtanh.pop %v4309
        %v4326 = vtanh.pop %v4310
        %v4327 = vtanh.pop %v4311
        %v4328 = vtanh.pop %v4312
        %v4329 = vtanh.pop %v4313
        %v4330 = vtanh.pop %v4314
        %v4331 = vtanh.pop %v4315
        %v4332 = vtanh.pop %v4316
        %v4333 = vtanh.pop %v4317
        %v4334 = vtanh.pop %v4318
        %v4335 = vtanh.pop %v4319
        %v4336 = vtanh.pop %v4320
        %4353 = vrot.lane.b32.xlu0 %v4321, 32
        %v4354 = vpop.permute.xlu0 %4353
        %4355 = vrot.lane.b32.xlu0 %v4322, 32
        %v4356 = vpop.permute.xlu0 %4355
        %4357 = vrot.lane.b32.xlu0 %v4323, 32
        %v4358 = vpop.permute.xlu0 %4357
        %4359 = vrot.lane.b32.xlu0 %v4324, 32
        %v4360 = vpop.permute.xlu0 %4359
        %4361 = vrot.lane.b32.xlu0 %v4325, 32
        %v4362 = vpop.permute.xlu0 %4361
        %4363 = vrot.lane.b32.xlu0 %v4326, 32
        %v4364 = vpop.permute.xlu0 %4363
        %4365 = vrot.lane.b32.xlu0 %v4327, 32
        %v4366 = vpop.permute.xlu0 %4365
        %4367 = vrot.lane.b32.xlu0 %v4328, 32
        %v4368 = vpop.permute.xlu0 %4367
        %4369 = vrot.lane.b32.xlu0 %v4329, 32
        %v4370 = vpop.permute.xlu0 %4369
        %4371 = vrot.lane.b32.xlu0 %v4330, 32
        %v4372 = vpop.permute.xlu0 %4371
        %4373 = vrot.lane.b32.xlu0 %v4331, 32
        %v4374 = vpop.permute.xlu0 %4373
        %4375 = vrot.lane.b32.xlu0 %v4332, 32
        %v4376 = vpop.permute.xlu0 %4375
        %4377 = vrot.lane.b32.xlu0 %v4333, 32
        %v4378 = vpop.permute.xlu0 %4377
        %4379 = vrot.lane.b32.xlu0 %v4334, 32
        %v4380 = vpop.permute.xlu0 %4379
        %4381 = vrot.lane.b32.xlu0 %v4335, 32
        %v4382 = vpop.permute.xlu0 %4381
        %4383 = vrot.lane.b32.xlu0 %v4336, 32
        %v4384 = vpop.permute.xlu0 %4383
        %v4401 = vmul.f32 %v4018, %v4354
        %v4402 = vmul.f32 %v4020, %v4356
        %v4403 = vmul.f32 %v4022, %v4358
        %v4404 = vmul.f32 %v4024, %v4360
        %v4405 = vmul.f32 %v4026, %v4362
        %v4406 = vmul.f32 %v4028, %v4364
        %v4407 = vmul.f32 %v4030, %v4366
        %v4408 = vmul.f32 %v4032, %v4368
        %v4409 = vmul.f32 %v4034, %v4370
        %v4410 = vmul.f32 %v4036, %v4372
        %v4411 = vmul.f32 %v4038, %v4374
        %v4412 = vmul.f32 %v4040, %v4376
        %v4413 = vmul.f32 %v4042, %v4378
        %v4414 = vmul.f32 %v4044, %v4380
        %v4415 = vmul.f32 %v4046, %v4382
        %v4416 = vmul.f32 %v4048, %v4384
        %4433 = vrot.lane.b32.xlu0 %v4401, 64
        %v4434 = vpop.permute.xlu0 %4433
        %4435 = vrot.lane.b32.xlu0 %v4402, 64
        %v4436 = vpop.permute.xlu0 %4435
        %4437 = vrot.lane.b32.xlu0 %v4403, 64
        %v4438 = vpop.permute.xlu0 %4437
        %4439 = vrot.lane.b32.xlu0 %v4404, 64
        %v4440 = vpop.permute.xlu0 %4439
        %4441 = vrot.lane.b32.xlu0 %v4405, 64
        %v4442 = vpop.permute.xlu0 %4441
        %4443 = vrot.lane.b32.xlu0 %v4406, 64
        %v4444 = vpop.permute.xlu0 %4443
        %4445 = vrot.lane.b32.xlu0 %v4407, 64
        %v4446 = vpop.permute.xlu0 %4445
        %4447 = vrot.lane.b32.xlu0 %v4408, 64
        %v4448 = vpop.permute.xlu0 %4447
        %4449 = vrot.lane.b32.xlu0 %v4409, 64
        %v4450 = vpop.permute.xlu0 %4449
        %4451 = vrot.lane.b32.xlu0 %v4410, 64
        %v4452 = vpop.permute.xlu0 %4451
        %4453 = vrot.lane.b32.xlu0 %v4411, 64
        %v4454 = vpop.permute.xlu0 %4453
        %4455 = vrot.lane.b32.xlu0 %v4412, 64
        %v4456 = vpop.permute.xlu0 %4455
        %4457 = vrot.lane.b32.xlu0 %v4413, 64
        %v4458 = vpop.permute.xlu0 %4457
        %4459 = vrot.lane.b32.xlu0 %v4414, 64
        %v4460 = vpop.permute.xlu0 %4459
        %4461 = vrot.lane.b32.xlu0 %v4415, 64
        %v4462 = vpop.permute.xlu0 %4461
        %4463 = vrot.lane.b32.xlu0 %v4416, 64
        %v4464 = vpop.permute.xlu0 %4463
        %4481 = vst.msk [vmem:[%s374] sm:$0xff] %vm1257, %v4434
        %4482 = vst.msk [vmem:[%s374 + $0x8] sm:$0xff] %vm1257, %v4436
        %4483 = vst.msk [vmem:[%s374 + $0x10] sm:$0xff] %vm1257, %v4438
        %4484 = vst.msk [vmem:[%s374 + $0x18] sm:$0xff] %vm1257, %v4440
        %4485 = vst.msk [vmem:[%s374 + $0x20] sm:$0xff] %vm1257, %v4442
        %4486 = vst.msk [vmem:[%s374 + $0x28] sm:$0xff] %vm1257, %v4444
        %4487 = vst.msk [vmem:[%s374 + $0x30] sm:$0xff] %vm1257, %v4446
        %4488 = vst.msk [vmem:[%s374 + $0x38] sm:$0xff] %vm1257, %v4448
        %4489 = vst.msk [vmem:[%s374 + $0x40] sm:$0xff] %vm1257, %v4450
        %4490 = vst.msk [vmem:[%s374 + $0x48] sm:$0xff] %vm1257, %v4452
        %4491 = vst.msk [vmem:[%s374 + $0x50] sm:$0xff] %vm1257, %v4454
        %4492 = vst.msk [vmem:[%s374 + $0x58] sm:$0xff] %vm1257, %v4456
        %4493 = vst.msk [vmem:[%s374 + $0x60] sm:$0xff] %vm1257, %v4458
        %4494 = vst.msk [vmem:[%s374 + $0x68] sm:$0xff] %vm1257, %v4460
        %4495 = vst.msk [vmem:[%s374 + $0x70] sm:$0xff] %vm1257, %v4462
        %4496 = vst.msk [vmem:[%s374 + $0x78] sm:$0xff] %vm1257, %v4464
        %4513 = vrot.lane.b32.xlu0 %v4305, 96
        %v4514 = vpop.permute.xlu0 %4513
        %4515 = vrot.lane.b32.xlu0 %v4306, 96
        %v4516 = vpop.permute.xlu0 %4515
        %4517 = vrot.lane.b32.xlu0 %v4307, 96
        %v4518 = vpop.permute.xlu0 %4517
        %4519 = vrot.lane.b32.xlu0 %v4308, 96
        %v4520 = vpop.permute.xlu0 %4519
        %4521 = vrot.lane.b32.xlu0 %v4309, 96
        %v4522 = vpop.permute.xlu0 %4521
        %4523 = vrot.lane.b32.xlu0 %v4310, 96
        %v4524 = vpop.permute.xlu0 %4523
        %4525 = vrot.lane.b32.xlu0 %v4311, 96
        %v4526 = vpop.permute.xlu0 %4525
        %4527 = vrot.lane.b32.xlu0 %v4312, 96
        %v4528 = vpop.permute.xlu0 %4527
        %4529 = vrot.lane.b32.xlu0 %v4313, 96
        %v4530 = vpop.permute.xlu0 %4529
        %4531 = vrot.lane.b32.xlu0 %v4314, 96
        %v4532 = vpop.permute.xlu0 %4531
        %4533 = vrot.lane.b32.xlu0 %v4315, 96
        %v4534 = vpop.permute.xlu0 %4533
        %4535 = vrot.lane.b32.xlu0 %v4316, 96
        %v4536 = vpop.permute.xlu0 %4535
        %4537 = vrot.lane.b32.xlu0 %v4317, 96
        %v4538 = vpop.permute.xlu0 %4537
        %4539 = vrot.lane.b32.xlu0 %v4318, 96
        %v4540 = vpop.permute.xlu0 %4539
        %4541 = vrot.lane.b32.xlu0 %v4319, 96
        %v4542 = vpop.permute.xlu0 %4541
        %4543 = vrot.lane.b32.xlu0 %v4320, 96
        %v4544 = vpop.permute.xlu0 %4543
        %4561 = vst.msk [vmem:[%s343] sm:$0xff] %vm1257, %v4514
        %4562 = vst.msk [vmem:[%s343 + $0x8] sm:$0xff] %vm1257, %v4516
        %4563 = vst.msk [vmem:[%s343 + $0x10] sm:$0xff] %vm1257, %v4518
        %4564 = vst.msk [vmem:[%s343 + $0x18] sm:$0xff] %vm1257, %v4520
        %4565 = vst.msk [vmem:[%s343 + $0x20] sm:$0xff] %vm1257, %v4522
        %4566 = vst.msk [vmem:[%s343 + $0x28] sm:$0xff] %vm1257, %v4524
        %4567 = vst.msk [vmem:[%s343 + $0x30] sm:$0xff] %vm1257, %v4526
        %4568 = vst.msk [vmem:[%s343 + $0x38] sm:$0xff] %vm1257, %v4528
        %4569 = vst.msk [vmem:[%s343 + $0x40] sm:$0xff] %vm1257, %v4530
        %4570 = vst.msk [vmem:[%s343 + $0x48] sm:$0xff] %vm1257, %v4532
        %4571 = vst.msk [vmem:[%s343 + $0x50] sm:$0xff] %vm1257, %v4534
        %4572 = vst.msk [vmem:[%s343 + $0x58] sm:$0xff] %vm1257, %v4536
        %4573 = vst.msk [vmem:[%s343 + $0x60] sm:$0xff] %vm1257, %v4538
        %4574 = vst.msk [vmem:[%s343 + $0x68] sm:$0xff] %vm1257, %v4540
        %4575 = vst.msk [vmem:[%s343 + $0x70] sm:$0xff] %vm1257, %v4542
        %4576 = vst.msk [vmem:[%s343 + $0x78] sm:$0xff] %vm1257, %v4544
        %s4577 = smul.u32 8, %s27
        %p4578 = scmp.lt.s32.totalorder %s26, 1
        %s4579 = scalar_select %p4578, %s26, 1
        %p4580 = scmp.lt.s32.totalorder %s4577, 15
        %s4581 = scalar_select %p4580, %s4577, 15
        %s4582 = smul.addr %s4581, 2
        %s4583 = smul.addr %s4579, 32
        %s4584 = sadd.s32 %s4582, %s4583
        %s4585 = smul.addr %s4584, 8
        %s4586 = scalar_lea.vmem %s6, %s4585
        %s4587 = sand.u32 %s215, 1
        %s4588 = scalar_lea.sflag [#allocation4], %s4587
        %s4589 = sand.u32 %s215, 1
        %s4590 = smul.addr %s4589, 128
        %s4591 = scalar_lea.vmem [#allocation3], %s4590
        // Predicated region
        $region53: #{recurrent_conv_layer.1} parent=43 // pred_check
          %p4592 = pneg %p197
        $region54: #{recurrent_conv_layer.1} parent=43 // pred_check_branch
          %4594 = sbr.rel (%p4592) target = $region56
        $region55: #{recurrent_conv_layer.1} parent=43 // pred_region
          %s4595 = smul.u32 8, %s27
        $region56: #{recurrent_conv_layer.1} parent=43 // pred_fallthru
          _
        // Predicated region
        $region57: #{recurrent_conv_layer.1} parent=43 // pred_check
          %p4596 = pneg %p225
        $region58: #{recurrent_conv_layer.1} parent=43 // pred_check_branch
          %4598 = sbr.rel (%p4596) target = $region60
        $region59: #{recurrent_conv_layer.1} parent=43 // pred_region
          %s4599 = smul.u32 8, %s27
          %s4601 = ssub.s32 2048, 2048
          %4602 = vsyncadd %s4588, %s4601
          %s4603 = smul.addr %s4599, 2
          %s4604 = smul.addr %s26, 32
          %s4605 = sadd.s32 %s4603, %s4604
          %s4606 = smul.addr %s4605, 128
          %s4607 = scalar_lea.hbm %s7, %s4606
          %s4608 = sshll.u32 %s4591, 4
          %s4609 = int_to_ptr.vmem [resolvable:$true] %s4608
          %4614 = dma.vmem_to_hbm [thread:$0]  %s4609, 2048, %s4607, %s4588, 128, 128, 8
        $region60: #{recurrent_conv_layer.1} parent=43 // pred_fallthru
          _
      $region44: #{recurrent_conv_layer.1} parent=5 // pred_fallthru
        _
      %p4615 = scmp.le.s32.totalorder 2, %s17
      // Predicated region
      $region61: #{recurrent_conv_layer.1} parent=5 // pred_check
        %p4616 = pneg %p4615
      $region62: #{recurrent_conv_layer.1} parent=5 // pred_check_branch
        %4618 = sbr.rel (%p4616) target = $region64
      $region63: #{recurrent_conv_layer.1} parent=5 // pred_region
        %s4619 = ssub.s32 %s17, 2
        // Predicated region
        $region65: #{recurrent_conv_layer.1} parent=63 // pred_check
          %p4620 = pneg %p203
        $region66: #{recurrent_conv_layer.1} parent=63 // pred_check_branch
          %4622 = sbr.rel (%p4620) target = $region68
        $region67: #{recurrent_conv_layer.1} parent=63 // pred_region
          %s4623 = smul.u32 8, %s29
          %p4624 = scmp.lt.s32.totalorder %s28, 1
          %s4625 = scalar_select %p4624, %s28, 1
          %p4626 = scmp.lt.s32.totalorder %s4623, 15
          %s4627 = scalar_select %p4626, %s4623, 15
          %s4628 = smul.addr %s4627, 2
          %s4629 = smul.addr %s4625, 32
          %s4630 = sadd.s32 %s4628, %s4629
          %s4631 = smul.addr %s4630, 8
          %s4632 = scalar_lea.vmem %s6, %s4631
        $region68: #{recurrent_conv_layer.1} parent=63 // pred_fallthru
          _
        // Predicated region
        $region69: #{recurrent_conv_layer.1} parent=63 // pred_check
          %p4633 = pneg %p231
        $region70: #{recurrent_conv_layer.1} parent=63 // pred_check_branch
          %4635 = sbr.rel (%p4633) target = $region72
        $region71: #{recurrent_conv_layer.1} parent=63 // pred_region
          %s4636 = sand.u32 %s216, 1
          %s4637 = scalar_lea.sflag [#allocation4], %s4636
          %s4638 = sand.u32 %s216, 1
          %s4639 = smul.addr %s4638, 128
          %s4640 = scalar_lea.vmem [#allocation3], %s4639
          %4641 = dma.done %s4637, 2048
        $region72: #{recurrent_conv_layer.1} parent=63 // pred_fallthru
          _
      $region64: #{recurrent_conv_layer.1} parent=5 // pred_fallthru
        _
    $region6: #{recurrent_conv_layer.1} parent=1 // loop_footer
      %s21 = sadd.s32 1, %s17
    $region7: #{recurrent_conv_layer.1} parent=1 // loop_footer_branch
      %16 = sbr.rel target = $region3
    $region8: #{recurrent_conv_layer.1} parent=1 // loop_exit
      _
    %4642 = vsyncpa [#allocation4], 1
    %s4643 = scalar_lea.sflag [#allocation4], 1
    %4644 = vsyncpa %s4643, 1

</llo_original>
